<compile_context>
chip_gen: v6e
topology: v6e:2x2x1
jax: 0.10.0
libtpu: 0.0.40
codegen_flags: <defaults>
</compile_context>

<pallas_src>
import functools
import math

import jax
import jax.numpy as jnp
import numpy as np
from jax.experimental import pallas as pl
from jax.experimental.pallas import tpu as pltpu

CHANNELS = 64                    # channels_num
SE_CNN = 10                      # se_cnn_num
SE_POOL = 12                     # maxpool kernel over time
SE_HID = 8                       # hidden width of Linear(10, 8)
T_FIXED = SE_CNN * SE_POOL       # 120 — forced by Linear(10, 8) on the pooled time axis
LANE = 2 * CHANNELS              # 128 — two time steps packed per lane row
ROWS_PER_BATCH = T_FIXED // 2    # 60 packed rows per batch element
SEG_ROWS = SE_POOL // 2          # 6 packed rows per pooling segment

# ----- packed-parameter layout: a single (PACK_ROWS, 128) f32 buffer -----------------
_W1_R0, _W1_NR = 0, 2 * CHANNELS          # (128, 20)  block-diag conv1 weight
_W2_R0, _W2_NR = 128, 2 * SE_CNN          # (20, 20)   block-diag conv2 weight
_L1_R0, _L1_NR = 152, SE_CNN              # (10, 8)    Linear(10,8) weight^T
_L2_R0, _L2_NR = 168, SE_HID              # (8, 128)   Linear(8,64) weight^T, lanes doubled
_B1_R, _B2_R, _L1B_R, _L2B_R = 176, 177, 178, 179
PACK_ROWS = 184                           # padded to a multiple of 8 rows


def _make_kernel(compute_dtype):
    """Build the kernel; compute_dtype controls the 1x1-conv MXU operand dtype."""

    def kernel(x_ref, p_ref, y_ref):
        rows = x_ref.shape[0]                      # BB * 60 (static)
        bb = rows // ROWS_PER_BATCH                # batch rows in this tile

        xp = x_ref[...]                            # (rows, 128): [0:64]=t even, [64:128]=t odd

        # ---- packed parameters (one small VMEM buffer, constant index_map) ----
        w1 = p_ref[_W1_R0:_W1_R0 + _W1_NR, 0:2 * SE_CNN]        # (128, 20)
        w2 = p_ref[_W2_R0:_W2_R0 + _W2_NR, 0:2 * SE_CNN]        # (20, 20)
        l1w = p_ref[_L1_R0:_L1_R0 + _L1_NR, 0:SE_HID]           # (10, 8)
        l2w = p_ref[_L2_R0:_L2_R0 + _L2_NR, :]                  # (8, 128) = [l2w | l2w]
        b1 = p_ref[_B1_R:_B1_R + 1, 0:2 * SE_CNN]               # (1, 20)
        b2 = p_ref[_B2_R:_B2_R + 1, 0:2 * SE_CNN]               # (1, 20)
        l1b = p_ref[_L1B_R:_L1B_R + 1, 0:SE_HID]                # (1, 8)
        l2b = p_ref[_L2B_R:_L2B_R + 1, :]                       # (1, 128) = [l2b | l2b]

        # Conv2d(64->10, 1x1) + ReLU and Conv2d(10->10, 1x1); block-diagonal weights process
        # both lane-packed time steps with a single MXU matmul each.  Operands may be bf16
        # (fast mode); accumulation stays f32.
        x_mm = xp.astype(compute_dtype)
        h1 = jnp.maximum(
            jnp.dot(x_mm, w1.astype(compute_dtype),
                    preferred_element_type=jnp.float32) + b1, 0.0)           # (rows, 20)
        h2 = jnp.dot(h1.astype(compute_dtype), w2.astype(compute_dtype),
                     preferred_element_type=jnp.float32) + b2                # (rows, 20)

        # MaxPool2d(kernel=(1, 12)) over time: max over the two packed steps in a row, then
        # over the 6 rows of each segment (reshape-based reduction, no per-segment slices).
        hmax = jnp.maximum(h2[:, :SE_CNN], h2[:, SE_CNN:2 * SE_CNN])         # (rows, 10)
        p = jnp.max(hmax.reshape(bb * SE_CNN, SEG_ROWS, SE_CNN), axis=1)     # (bb*10, 10)

        # Dropout: identity (eval).  Linear(10, 8) contracts the pooled-time (segment) axis:
        # transpose the tiny per-batch (10, 10) so both dense matmuls contract the minor axis.
        pt = jnp.transpose(p.reshape(bb, SE_CNN, SE_CNN), (0, 2, 1))
        pt = pt.reshape(bb * SE_CNN, SE_CNN)                                 # rows = (b, j)
        g = jnp.maximum(jnp.dot(pt, l1w, preferred_element_type=jnp.float32) + l1b, 0.0)
        # Dropout: identity.  Linear(8, 64) with lane-doubled weights: w4 is already 128
        # lanes wide (both packed time steps), so no rows-sized lane-concat is needed.
        w4 = jnp.dot(g, l2w, preferred_element_type=jnp.float32) + l2b       # (bb*10, 128)

        # Final gating.
        # TODO(synk): the literal torch broadcast (B,1,64,10)*(B,1,T,64) is shape-invalid;
        # we apply the consistent interpretation y[b,t,c] = x[b,t,c] * w4[b, t//12, c].
        # Sublane replication of the 128-wide w4 (2-D in / 2-D out, no lane concat).
        gains = jnp.repeat(w4, SEG_ROWS, axis=0)                             # (rows, 128)
        y_ref[...] = (xp.astype(jnp.float32) * gains).astype(y_ref.dtype)

    return kernel


def _tpu_tuning():
    """Best-effort per-generation tuning: (batch-block cap, min grid steps, vmem limit)."""
    kind = ""
    try:
        kind = jax.devices()[0].device_kind.lower()
    except Exception:
        pass

    cap, min_steps = 64, 2                 # v5e-safe defaults (tightest scoped-VMEM budget)
    if "v6" in kind:
        cap, min_steps = 128, 2            # ~16 MiB of f32 I/O tiles fits v6e's 32 MiB default
    elif "v7" in kind or "7x" in kind:
        cap, min_steps = 64, 4             # 2 TCs/chip: want >= 2 steps per core for pipelining

    vmem_limit = 48 << 20                  # explicit limit; well above what the tiles need
    try:
        physical = int(pltpu.get_tpu_info().vmem_capacity_bytes)
        vmem_limit = max(32 << 20, min(vmem_limit, physical - (8 << 20)))
    except Exception:
        pass
    return cap, min_steps, vmem_limit


def _pick_batch_block(B, cap, min_steps):
    """Batch block: multiple of 4 (rows_blk = bb*60 is then a multiple of 16, valid for both
    f32 and bf16 sublane tiling), <= cap, aiming for >= min_steps grid steps."""
    target = pl.cdiv(B, min_steps)
    bb = 4 * pl.cdiv(target, 4)
    return max(4, min(cap, bb))


def _pack_params(params):
    """Pack all parameters (block-diag conv weights, lane-doubled Linear(8,64)) into one
    (184, 128) f32 buffer (single DMA, fetched once across the whole grid)."""
    w1t, b1, w2t, b2, l1wt, l1b, l2wt, l2b = params
    f32 = jnp.float32
    w1bd = jnp.zeros((2 * CHANNELS, 2 * SE_CNN), f32)
    w1bd = w1bd.at[:CHANNELS, :SE_CNN].set(w1t).at[CHANNELS:, SE_CNN:].set(w1t)
    w2bd = jnp.zeros((2 * SE_CNN, 2 * SE_CNN), f32)
    w2bd = w2bd.at[:SE_CNN, :SE_CNN].set(w2t).at[SE_CNN:, SE_CNN:].set(w2t)

    packed = jnp.zeros((PACK_ROWS, 128), f32)
    packed = packed.at[_W1_R0:_W1_R0 + _W1_NR, 0:2 * SE_CNN].set(w1bd)
    packed = packed.at[_W2_R0:_W2_R0 + _W2_NR, 0:2 * SE_CNN].set(w2bd)
    packed = packed.at[_L1_R0:_L1_R0 + _L1_NR, 0:SE_HID].set(l1wt)
    # Linear(8,64) weight/bias duplicated across both 64-lane halves -> w4 is born 128 wide.
    packed = packed.at[_L2_R0:_L2_R0 + _L2_NR, 0:CHANNELS].set(l2wt)
    packed = packed.at[_L2_R0:_L2_R0 + _L2_NR, CHANNELS:2 * CHANNELS].set(l2wt)
    packed = packed.at[_B1_R, 0:2 * SE_CNN].set(jnp.concatenate([b1[0], b1[0]]))
    packed = packed.at[_B2_R, 0:2 * SE_CNN].set(jnp.concatenate([b2[0], b2[0]]))
    packed = packed.at[_L1B_R, 0:SE_HID].set(l1b[0])
    packed = packed.at[_L2B_R, 0:CHANNELS].set(l2b[0])
    packed = packed.at[_L2B_R, CHANNELS:2 * CHANNELS].set(l2b[0])
    return packed


@functools.partial(jax.jit, static_argnames=("io_dtype",))
def my_space_attention(x, params, io_dtype=jnp.bfloat16):
    """io_dtype=bf16 (default): halved HBM traffic + bf16 MXU operands (f32 accumulation).
    io_dtype=f32: exact parity with the all-f32 reference (previous revision's behaviour)."""
    B, T, C = x.shape
    assert C == CHANNELS, "Conv2d(channels_num, ...) forces C == 64"
    assert T == T_FIXED, "nn.Linear(10, 8) on the pooled time axis forces T == 120"

    cap, min_steps, vmem_limit = _tpu_tuning()
    bb = _pick_batch_block(B, cap, min_steps)
    steps = pl.cdiv(B, bb)
    Bp = steps * bb                                   # pad batch: tile size independent of B

    packed = _pack_params(params)

    # Lane-dense view: two adjacent time steps share one 128-lane row (free reshape).
    x2 = x.reshape(B * ROWS_PER_BATCH, LANE).astype(io_dtype)
    if Bp != B:
        x2 = jnp.pad(x2, ((0, (Bp - B) * ROWS_PER_BATCH), (0, 0)))
    rows_blk = bb * ROWS_PER_BATCH

    compute_dtype = jnp.bfloat16 if io_dtype == jnp.bfloat16 else jnp.float32
    item = jnp.dtype(io_dtype).itemsize
    cost = pl.CostEstimate(
        flops=(2 * Bp * T_FIXED * CHANNELS * SE_CNN          # conv 64->10
               + 2 * Bp * T_FIXED * SE_CNN * SE_CNN          # conv 10->10
               + 2 * Bp * SE_CNN * SE_CNN * SE_HID           # Linear(10,8)
               + 2 * Bp * SE_CNN * SE_HID * LANE             # Linear(8,64), lane-doubled
               + Bp * T_FIXED * CHANNELS),                   # gating multiply
        transcendentals=0,
        bytes_accessed=Bp * T_FIXED * CHANNELS * 2 * item + PACK_ROWS * 128 * 4,
    )

    y2 = pl.pallas_call(
        _make_kernel(compute_dtype),
        out_shape=jax.ShapeDtypeStruct((Bp * ROWS_PER_BATCH, LANE), io_dtype),
        grid_spec=pltpu.PrefetchScalarGridSpec(
            num_scalar_prefetch=0,
            grid=(steps,),
            in_specs=[
                pl.BlockSpec((rows_blk, LANE), lambda i: (i, 0)),      # x (lane-dense rows)
                pl.BlockSpec((PACK_ROWS, 128), lambda i: (0, 0)),      # packed params
            ],
            out_specs=pl.BlockSpec((rows_blk, LANE), lambda i: (i, 0)),
        ),
        compiler_params=pltpu.CompilerParams(
            dimension_semantics=("parallel",),
            vmem_limit_bytes=int(vmem_limit),
        ),
        cost_estimate=cost,
    )(x2, packed)

    y2 = y2[:B * ROWS_PER_BATCH]
    return y2.reshape(B, T, C)


def init_params(key):
    """Deterministic PyTorch-style uniform(-1/sqrt(fan_in), 1/sqrt(fan_in)) init."""
    ks = jax.random.split(key, 8)

    def unif(k, shape, fan_in):
        bound = 1.0 / math.sqrt(fan_in)
        return jax.random.uniform(k, shape, jnp.float32, -bound, bound)

    w1t = unif(ks[0], (CHANNELS, SE_CNN), CHANNELS)   # Conv2d(64,10,1x1) weight^T
    b1 = unif(ks[1], (1, SE_CNN), CHANNELS)
    w2t = unif(ks[2], (SE_CNN, SE_CNN), SE_CNN)       # Conv2d(10,10,1x1) weight^T
    b2 = unif(ks[3], (1, SE_CNN), SE_CNN)
    l1wt = unif(ks[4], (SE_CNN, SE_HID), SE_CNN)      # Linear(10,8) weight^T
    l1b = unif(ks[5], (1, SE_HID), SE_CNN)
    l2wt = unif(ks[6], (SE_HID, CHANNELS), SE_HID)    # Linear(8,64) weight^T
    l2b = unif(ks[7], (1, CHANNELS), SE_HID)
    return (w1t, b1, w2t, b2, l1wt, l1b, l2wt, l2b)


def reference(x, params):
    """Plain-JAX reference of the same semantics (for correctness check)."""
    w1t, b1, w2t, b2, l1wt, l1b, l2wt, l2b = params
    B, T, C = x.shape
    h1 = jnp.maximum(jnp.einsum('btc,cj->btj', x, w1t) + b1, 0.0)
    h2 = jnp.einsum('btj,jk->btk', h1, w2t) + b2
    p = h2.reshape(B, T // SE_POOL, SE_POOL, SE_CNN).max(axis=2)      # (B, s, j)
    g = jnp.maximum(jnp.einsum('bsj,sm->bjm', p, l1wt) + l1b, 0.0)    # (B, j, 8)
    w4 = jnp.einsum('bjm,mc->bjc', g, l2wt) + l2b                     # (B, j, 64)
    gains = jnp.repeat(w4, SE_POOL, axis=1)                           # (B, T, 64)
    return x * gains


if __name__ == "__main__":
    key = jax.random.PRNGKey(0)
    pkey, xkey = jax.random.split(key)
    params = init_params(pkey)

    B = 8                   # small batch
    T = T_FIXED             # 120 — forced by Linear(10, 8) + MaxPool(1, 12)
    C = CHANNELS            # 64  — forced by Conv2d(channels_num, ...)
    x = jax.random.normal(xkey, (B, T, C), jnp.float32)

    # Fast path (default): bf16 HBM I/O + bf16 MXU operands (f32 accumulation).  Compare
    # against the f32 reference evaluated on the bf16-quantized input; remaining error is
    # bf16 weight/operand/output rounding (~1e-2 relative worst case).
    y_fast = jax.block_until_ready(my_space_attention(x, params))
    x_q = x.astype(jnp.bfloat16).astype(jnp.float32)
    np.testing.assert_allclose(np.asarray(jnp.asarray(y_fast, jnp.float32)),
                               np.asarray(reference(x_q, params)),
                               rtol=5e-2, atol=5e-2)

    # Exact-parity path: all-f32 I/O and matmul operands.  Tolerance 2e-3 is dominated by
    # the *reference*'s default-precision f32 einsums (XLA truncates f32 matmul operands to
    # bf16 on TPU by default), not by the kernel; structural regressions show up as O(1)
    # errors and are still caught.
    y_f32 = jax.block_until_ready(my_space_attention(x, params, io_dtype=jnp.float32))
    np.testing.assert_allclose(np.asarray(y_f32), np.asarray(reference(x, params)),
                               rtol=2e-3, atol=2e-3)

    assert y_fast.shape == (B, T, C) and y_f32.shape == (B, T, C)
    print("KERNEL_OK")
</pallas_src>

<mosaic_0001>
module attributes {stable_mosaic.version = 11 : i64} {
  func.func @kernel(%arg0: i32, %arg1: memref<240x128xbf16, #tpu.memory_space<vmem>>, %arg2: memref<184x128xf32, #tpu.memory_space<vmem>>, %arg3: memref<240x128xbf16, #tpu.memory_space<vmem>>) attributes {dimension_semantics = [#tpu.dimension_semantics<parallel>], iteration_bounds = array<i64: 2>, scalar_prefetch = 0 : i64, scratch_operands = 0 : i64, tpu.core_type = #tpu.core_type<tc>, window_params = [{transform_indices = @transform_0, window_bounds = array<i64: 240, 128>}, {pipeline_mode = #tpu.pipeline_mode<synchronous>, transform_indices = @transform_1, window_bounds = array<i64: 184, 128>}, {transform_indices = @transform_2, window_bounds = array<i64: 240, 128>}]} {
    %c0 = arith.constant 0 : index
    %c0_0 = arith.constant 0 : index
    %0 = vector.load %arg1[%c0, %c0_0] : memref<240x128xbf16, #tpu.memory_space<vmem>>, vector<240x128xbf16>
    %c0_1 = arith.constant 0 : index
    %c0_2 = arith.constant 0 : index
    %1 = vector.load %arg2[%c0_1, %c0_2] : memref<184x128xf32, #tpu.memory_space<vmem>>, vector<128x20xf32>
    %c128 = arith.constant 128 : index
    %c0_3 = arith.constant 0 : index
    %2 = vector.load %arg2[%c128, %c0_3] : memref<184x128xf32, #tpu.memory_space<vmem>>, vector<20x20xf32>
    %c152 = arith.constant 152 : index
    %c0_4 = arith.constant 0 : index
    %3 = vector.load %arg2[%c152, %c0_4] : memref<184x128xf32, #tpu.memory_space<vmem>>, vector<10x8xf32>
    %c168 = arith.constant 168 : index
    %c0_5 = arith.constant 0 : index
    %4 = vector.load %arg2[%c168, %c0_5] : memref<184x128xf32, #tpu.memory_space<vmem>>, vector<8x128xf32>
    %c176 = arith.constant 176 : index
    %c0_6 = arith.constant 0 : index
    %5 = vector.load %arg2[%c176, %c0_6] : memref<184x128xf32, #tpu.memory_space<vmem>>, vector<1x20xf32>
    %c177 = arith.constant 177 : index
    %c0_7 = arith.constant 0 : index
    %6 = vector.load %arg2[%c177, %c0_7] : memref<184x128xf32, #tpu.memory_space<vmem>>, vector<1x20xf32>
    %c178 = arith.constant 178 : index
    %c0_8 = arith.constant 0 : index
    %7 = vector.load %arg2[%c178, %c0_8] : memref<184x128xf32, #tpu.memory_space<vmem>>, vector<1x8xf32>
    %c179 = arith.constant 179 : index
    %c0_9 = arith.constant 0 : index
    %8 = vector.load %arg2[%c179, %c0_9] : memref<184x128xf32, #tpu.memory_space<vmem>>, vector<1x128xf32>
    %9 = arith.truncf %1 : vector<128x20xf32> to vector<128x20xbf16>
    %cst = arith.constant dense<0.000000e+00> : vector<240x20xf32>
    %10 = tpu.matmul %0, %9, %cst {dimension_numbers = #tpu.dot_dimension_numbers<[1], [0], [0], [1], [0, 0, 1, 1], [], []>} : vector<240x128xbf16>, vector<128x20xbf16>, vector<240x20xf32> -> vector<240x20xf32>
    %11 = vector.broadcast %5 : vector<1x20xf32> to vector<240x20xf32>
    %12 = arith.addf %10, %11 : vector<240x20xf32>
    %cst_10 = arith.constant 0.000000e+00 : f32
    %13 = vector.broadcast %cst_10 : f32 to vector<240x20xf32>
    %14 = arith.maximumf %12, %13 : vector<240x20xf32>
    %15 = arith.truncf %14 : vector<240x20xf32> to vector<240x20xbf16>
    %16 = arith.truncf %2 : vector<20x20xf32> to vector<20x20xbf16>
    %cst_11 = arith.constant dense<0.000000e+00> : vector<240x20xf32>
    %17 = tpu.matmul %15, %16, %cst_11 {dimension_numbers = #tpu.dot_dimension_numbers<[1], [0], [0], [1], [0, 0, 1, 1], [], []>} : vector<240x20xbf16>, vector<20x20xbf16>, vector<240x20xf32> -> vector<240x20xf32>
    %18 = vector.broadcast %6 : vector<1x20xf32> to vector<240x20xf32>
    %19 = arith.addf %17, %18 : vector<240x20xf32>
    %20 = vector.extract_strided_slice %19 {offsets = [0, 0], sizes = [240, 10], strides = [1, 1]} : vector<240x20xf32> to vector<240x10xf32>
    %21 = vector.extract_strided_slice %19 {offsets = [0, 10], sizes = [240, 10], strides = [1, 1]} : vector<240x20xf32> to vector<240x10xf32>
    %22 = arith.maximumf %20, %21 : vector<240x10xf32>
    %23 = vector.shape_cast %22 : vector<240x10xf32> to vector<40x6x10xf32>
    %cst_12 = arith.constant dense<0xFF800000> : vector<40x10xf32>
    %24 = vector.multi_reduction <maximumf>, %23, %cst_12 [1] : vector<40x6x10xf32> to vector<40x10xf32>
    %25 = vector.shape_cast %24 : vector<40x10xf32> to vector<4x10x10xf32>
    %26 = tpu.transpose %25, [0, 2, 1] : vector<4x10x10xf32> -> vector<4x10x10xf32>
    %27 = vector.shape_cast %26 : vector<4x10x10xf32> to vector<40x10xf32>
    %cst_13 = arith.constant dense<0.000000e+00> : vector<40x8xf32>
    %28 = tpu.matmul %27, %3, %cst_13 {dimension_numbers = #tpu.dot_dimension_numbers<[1], [0], [0], [1], [0, 0, 1, 1], [], []>} : vector<40x10xf32>, vector<10x8xf32>, vector<40x8xf32> -> vector<40x8xf32>
    %29 = vector.broadcast %7 : vector<1x8xf32> to vector<40x8xf32>
    %30 = arith.addf %28, %29 : vector<40x8xf32>
    %cst_14 = arith.constant 0.000000e+00 : f32
    %31 = vector.broadcast %cst_14 : f32 to vector<40x8xf32>
    %32 = arith.maximumf %30, %31 : vector<40x8xf32>
    %cst_15 = arith.constant dense<0.000000e+00> : vector<40x128xf32>
    %33 = tpu.matmul %32, %4, %cst_15 {dimension_numbers = #tpu.dot_dimension_numbers<[1], [0], [0], [1], [0, 0, 1, 1], [], []>} : vector<40x8xf32>, vector<8x128xf32>, vector<40x128xf32> -> vector<40x128xf32>
    %34 = vector.broadcast %8 : vector<1x128xf32> to vector<40x128xf32>
    %35 = arith.addf %33, %34 : vector<40x128xf32>
    %36 = vector.shape_cast %35 : vector<40x128xf32> to vector<40x1x128xf32>
    %37 = vector.broadcast %36 : vector<40x1x128xf32> to vector<40x6x128xf32>
    %38 = vector.shape_cast %37 : vector<40x6x128xf32> to vector<240x128xf32>
    %39 = arith.extf %0 : vector<240x128xbf16> to vector<240x128xf32>
    %40 = arith.mulf %39, %38 : vector<240x128xf32>
    %41 = arith.truncf %40 : vector<240x128xf32> to vector<240x128xbf16>
    %c0_16 = arith.constant 0 : index
    %c0_17 = arith.constant 0 : index
    %42 = vector.load %arg3[%c0_16, %c0_17] : memref<240x128xbf16, #tpu.memory_space<vmem>>, vector<240x128xbf16>
    tpu.vector_store %arg3[%c0_16, %c0_17], %41 {strides = array<i32>} : memref<240x128xbf16, #tpu.memory_space<vmem>>, vector<240x128xbf16>,
    return
  }
  func.func @transform_0(%arg0: i32) -> (i32, i32) {
    %c0_i32 = arith.constant 0 : i32
    %c0_i32_0 = arith.constant 0 : i32
    return %arg0, %c0_i32 : i32, i32
  }
  func.func @transform_1(%arg0: i32) -> (i32, i32) {
    %c0_i32 = arith.constant 0 : i32
    %c0_i32_0 = arith.constant 0 : i32
    %c0_i32_1 = arith.constant 0 : i32
    return %c0_i32, %c0_i32_0 : i32, i32
  }
  func.func @transform_2(%arg0: i32) -> (i32, i32) {
    %c0_i32 = arith.constant 0 : i32
    %c0_i32_0 = arith.constant 0 : i32
    return %arg0, %c0_i32 : i32, i32
  }
}

</mosaic_0001>

<llo_original>
// kernel: my_space_attention.1
$region0: #{my_space_attention.1}
  #allocation0 [shape = 'u32[]', space=smem, size = 0x4, offset = 0x4, fixed_abs, tag = 'smem constant byte address 0x4 - core index']
  #allocation1 [shape = 'u32[144,128]{1,0:T(1,128)}', space=vmem, size = 0x12000, scoped, tag = 'internal scratch']
  %s0 = inlined_call_operand.vmem [shape: bf16[480,128], index: 0, kind: input, shape index: {}]
  %s1 = inlined_call_operand.vmem [shape: f32[184,128], index: 1, kind: input, shape index: {}]
  %s2 = inlined_call_operand.vmem [shape: bf16[480,128], index: 2, kind: output, shape index: {}]
  %s3 = sld [smem:[#allocation0]]
  $region41: #{my_space_attention.1} parent=0
    _
  %s5 = ssub.s32 1, %s3
  %s6 = scalar_select 0, %s5, %s3
  loop: start=0, step=1, limit=4
  $region2: #{my_space_attention.1} parent=0 // loop_pre_header
    _
  $region3: #{my_space_attention.1} parent=0 // loop_header
    %s8 = sphi 0, %s12
    %p9 = scmp.ge.s32.totalorder %s8, 4
    %s18 = sphi 0, %s20
    %s21 = sphi 0, %s18
    %s22 = sphi 0, %s21
    %s38 = sphi 0, %s22
    %s42 = sphi 0, %s42
    %s44 = sphi 0, %s42
    %s45 = sphi 0, %s44
    %s59 = sphi 0, %s45
    %s65 = sphi 0, %s67
    %s68 = sphi 0, %s65
    %s69 = sphi 0, %s68
    %s85 = sphi 0, %s69
  $region4: #{my_space_attention.1} parent=0 // loop_header_branch
    %11 = sbr.rel (%p9) target = $region8
  $region5: #{my_space_attention.1} parent=0 // loop_body
    %s13 = ssub.s32 %s8, 1
    %s14 = ssub.s32 %s8, 2
    %s15 = sadd.s32 %s8, 1
    %s16 = ssub.s32 %s8, %s15
    %p17 = scmp.eq.s32.totalorder %s16, 0
    %s19 = sadd.s32 %s18, 1
    %s20 = scalar_select %p17, %s18, %s19
    %p23 = pneg %p17
    %p24 = scmp.eq.s32.totalorder %s8, 1
    %p25 = por %p23, %p24
    %p26 = scmp.ne.s32.totalorder %s18, %s21
    %p27 = scmp.eq.s32.totalorder %s8, 0
    %p28 = por %p26, %p27
    %p29 = scmp.ne.s32.totalorder %s18, %s21
    %p30 = scmp.eq.s32.totalorder %s13, 1
    %p31 = por %p29, %p30
    %p32 = scmp.ne.s32.totalorder %s21, %s22
    %p33 = scmp.eq.s32.totalorder %s13, 0
    %p34 = por %p32, %p33
    %p35 = scmp.ne.s32.totalorder %s21, %s22
    %p36 = scmp.eq.s32.totalorder %s14, 1
    %p37 = por %p35, %p36
    %p39 = scmp.ne.s32.totalorder %s22, %s38
    %p40 = scmp.eq.s32.totalorder %s14, 0
    %p41 = por %p39, %p40
    %s43 = sadd.s32 %s42, 1
    %p46 = scmp.eq.s32.totalorder %s8, 1
    %p47 = scmp.ne.s32.totalorder %s42, %s44
    %p48 = scmp.eq.s32.totalorder %s8, 0
    %p49 = por %p47, %p48
    %p50 = scmp.ne.s32.totalorder %s42, %s44
    %p51 = scmp.eq.s32.totalorder %s13, 1
    %p52 = por %p50, %p51
    %p53 = scmp.ne.s32.totalorder %s44, %s45
    %p54 = scmp.eq.s32.totalorder %s13, 0
    %p55 = por %p53, %p54
    %p56 = scmp.ne.s32.totalorder %s44, %s45
    %p57 = scmp.eq.s32.totalorder %s14, 1
    %p58 = por %p56, %p57
    %p60 = scmp.ne.s32.totalorder %s45, %s59
    %p61 = scmp.eq.s32.totalorder %s14, 0
    %p62 = por %p60, %p61
    %s63 = ssub.s32 %s8, %s15
    %p64 = scmp.eq.s32.totalorder %s63, 0
    %s66 = sadd.s32 %s65, 1
    %s67 = scalar_select %p64, %s65, %s66
    %p70 = pneg %p64
    %p71 = scmp.eq.s32.totalorder %s8, 1
    %p72 = por %p70, %p71
    %p73 = scmp.ne.s32.totalorder %s65, %s68
    %p74 = scmp.eq.s32.totalorder %s8, 0
    %p75 = por %p73, %p74
    %p76 = scmp.ne.s32.totalorder %s65, %s68
    %p77 = scmp.eq.s32.totalorder %s13, 1
    %p78 = por %p76, %p77
    %p79 = scmp.ne.s32.totalorder %s68, %s69
    %p80 = scmp.eq.s32.totalorder %s13, 0
    %p81 = por %p79, %p80
    %p82 = scmp.ne.s32.totalorder %s68, %s69
    %p83 = scmp.eq.s32.totalorder %s14, 1
    %p84 = por %p82, %p83
    %p86 = scmp.ne.s32.totalorder %s69, %s85
    %p87 = scmp.eq.s32.totalorder %s14, 0
    %p88 = por %p86, %p87
    %p89 = scmp.le.s32.totalorder 1, %s8
    %p90 = scmp.lt.s32.totalorder %s8, 3
    %p91 = pnand %p89, %p90
    %p92 = pneg %p91
    // Predicated region
    $region9: #{my_space_attention.1} parent=5 // pred_check
      _
    $region10: #{my_space_attention.1} parent=5 // pred_check_branch
      %94 = sbr.rel (%p91) target = $region12
    $region11: #{my_space_attention.1} parent=5 // pred_region
      %s95 = ssub.s32 %s8, 1
      // Predicated region
      $region13: #{my_space_attention.1} parent=11 // pred_check
        %p96 = pneg %p55
      $region14: #{my_space_attention.1} parent=11 // pred_check_branch
        %98 = sbr.rel (%p96) target = $region16
      $region15: #{my_space_attention.1} parent=11 // pred_region
        _
      $region16: #{my_space_attention.1} parent=11 // pred_fallthru
        _
    $region12: #{my_space_attention.1} parent=5 // pred_fallthru
      _
    %p99 = scmp.lt.s32.totalorder %s8, 2
    // Predicated region
    $region17: #{my_space_attention.1} parent=5 // pred_check
      %p100 = pneg %p99
    $region18: #{my_space_attention.1} parent=5 // pred_check_branch
      %102 = sbr.rel (%p100) target = $region20
    $region19: #{my_space_attention.1} parent=5 // pred_region
      // Predicated region
      $region21: #{my_space_attention.1} parent=19 // pred_check
        %p103 = pneg %p28
      $region22: #{my_space_attention.1} parent=19 // pred_check_branch
        %105 = sbr.rel (%p103) target = $region24
      $region23: #{my_space_attention.1} parent=19 // pred_region
        %s106 = smul.u32 30, %s8
        %p107 = scmp.lt.s32.totalorder %s106, 59
        %s108 = scalar_select %p107, %s106, 59
        %s109 = smul.addr %s108, 4
        %s110 = scalar_lea.vmem %s0, %s109
        %s111 = smul.u32 30, %s8
      $region24: #{my_space_attention.1} parent=19 // pred_fallthru
        _
    $region20: #{my_space_attention.1} parent=5 // pred_fallthru
      _
    %p112 = scmp.le.s32.totalorder 1, %s8
    %p113 = scmp.lt.s32.totalorder %s8, 3
    %p114 = pnand %p112, %p113
    %p115 = pneg %p114
    // Predicated region
    $region25: #{my_space_attention.1} parent=5 // pred_check
      _
    $region26: #{my_space_attention.1} parent=5 // pred_check_branch
      %117 = sbr.rel (%p114) target = $region28
    $region27: #{my_space_attention.1} parent=5 // pred_region
      %s118 = ssub.s32 %s8, 1
      %s119 = smul.u32 30, %s13
      %p120 = scmp.lt.s32.totalorder %s119, 59
      %s121 = scalar_select %p120, %s119, 59
      %s122 = smul.addr %s121, 4
      %s123 = scalar_lea.vmem %s0, %s122
      %p124 = pneg %p34
      %p125 = pneg %p31
      %p126 = pneg %p55
      %p127 = pneg %p52
      %p128 = pneg %p81
      %p129 = pneg %p78
      %s130 = smul.u32 30, %s13
      %p131 = scmp.lt.s32.totalorder %s130, 59
      %s132 = scalar_select %p131, %s130, 59
      %s133 = smul.addr %s132, 4
      %s134 = scalar_lea.vmem %s2, %s133
      %s135 = smul.u32 30, %s13
      %p136 = scmp.lt.s32.totalorder %s135, 59
      %s137 = scalar_select %p136, %s135, 59
      %s138 = smul.addr %s137, 4
      %s139 = scalar_lea.vmem %s0, %s138
      %s140 = smul.u32 30, %s13
      %s141 = smul.u32 30, %s13
      %p142 = scmp.lt.s32.totalorder %s141, 59
      %s143 = scalar_select %p142, %s141, 59
      %s144 = smul.addr %s143, 4
      %s145 = scalar_lea.vmem %s2, %s144
      %s146 = smul.u32 30, %s13
      %v148 = vld [vmem:[%s139] sm:$0xf]
      %v149 = vld [vmem:[%s139 + $0x4] sm:$0xf]
      %v150 = vld [vmem:[%s139 + $0x8] sm:$0xf]
      %v151 = vld [vmem:[%s139 + $0xc] sm:$0xf]
      %v152 = vld [vmem:[%s139 + $0x10] sm:$0xf]
      %v153 = vld [vmem:[%s139 + $0x14] sm:$0xf]
      %v154 = vld [vmem:[%s139 + $0x18] sm:$0xf]
      %v155 = vld [vmem:[%s139 + $0x1c] sm:$0xf]
      %v156 = vld [vmem:[%s139 + $0x20] sm:$0xf]
      %v157 = vld [vmem:[%s139 + $0x24] sm:$0xf]
      %v158 = vld [vmem:[%s139 + $0x28] sm:$0xf]
      %v159 = vld [vmem:[%s139 + $0x2c] sm:$0xf]
      %v160 = vld [vmem:[%s139 + $0x30] sm:$0xf]
      %v161 = vld [vmem:[%s139 + $0x34] sm:$0xf]
      %v162 = vld [vmem:[%s139 + $0x38] sm:$0xf]
      %v163 = vld [vmem:[%s139 + $0x3c] sm:$0xf]
      %v164 = vld [vmem:[%s139 + $0x40] sm:$0xf]
      %v165 = vld [vmem:[%s139 + $0x44] sm:$0xf]
      %v166 = vld [vmem:[%s139 + $0x48] sm:$0xf]
      %v167 = vld [vmem:[%s139 + $0x4c] sm:$0xf]
      %v168 = vld [vmem:[%s139 + $0x50] sm:$0xf]
      %v169 = vld [vmem:[%s139 + $0x54] sm:$0xf]
      %v170 = vld [vmem:[%s139 + $0x58] sm:$0xf]
      %v171 = vld [vmem:[%s139 + $0x5c] sm:$0xf]
      %v172 = vld [vmem:[%s139 + $0x60] sm:$0xf]
      %v173 = vld [vmem:[%s139 + $0x64] sm:$0xf]
      %v174 = vld [vmem:[%s139 + $0x68] sm:$0xf]
      %v175 = vld [vmem:[%s139 + $0x6c] sm:$0xf]
      %v176 = vld [vmem:[%s139 + $0x70] sm:$0xf]
      %v177 = vld [vmem:[%s139 + $0x74] sm:$0xf]
      %v178 = vld [vmem:[%s1] sm:$0xff]
      %v179 = vld [vmem:[%s1 + $0x8] sm:$0xff]
      %v180 = vld [vmem:[%s1 + $0x10] sm:$0xff]
      %v181 = vld [vmem:[%s1 + $0x18] sm:$0xff]
      %v182 = vld [vmem:[%s1 + $0x20] sm:$0xff]
      %v183 = vld [vmem:[%s1 + $0x28] sm:$0xff]
      %v184 = vld [vmem:[%s1 + $0x30] sm:$0xff]
      %v185 = vld [vmem:[%s1 + $0x38] sm:$0xff]
      %v186 = vld [vmem:[%s1 + $0x40] sm:$0xff]
      %v187 = vld [vmem:[%s1 + $0x48] sm:$0xff]
      %v188 = vld [vmem:[%s1 + $0x50] sm:$0xff]
      %v189 = vld [vmem:[%s1 + $0x58] sm:$0xff]
      %v190 = vld [vmem:[%s1 + $0x60] sm:$0xff]
      %v191 = vld [vmem:[%s1 + $0x68] sm:$0xff]
      %v192 = vld [vmem:[%s1 + $0x70] sm:$0xff]
      %v193 = vld [vmem:[%s1 + $0x78] sm:$0xff]
      %v194 = vld [vmem:[%s1 + $0x80] sm:$0xff]
      %v195 = vld [vmem:[%s1 + $0x88] sm:$0xff]
      %v196 = vld [vmem:[%s1 + $0x90] sm:$0xf]
      %v197 = vld [vmem:[%s1 + $0x98] sm:$0xff]
      %v198 = vld [vmem:[%s1 + $0xa0] sm:$0x3]
      %v199 = vld [vmem:[%s1 + $0xa8] sm:$0xff]
      %v200 = vld [vmem:[%s1 + $0xb0] sm:$0x1]
      %v201 = vld [vmem:[%s1 + $0xb1] sm:$0x1]
      %v202 = vld [vmem:[%s1 + $0xb2] sm:$0x1]
      %v203 = vld [vmem:[%s1 + $0xb3] sm:$0x1]
      %v204 = vpack.c.bf16 %v179, %v178
      %v205 = vpack.c.bf16 %v181, %v180
      %v206 = vpack.c.bf16 %v183, %v182
      %v207 = vpack.c.bf16 %v185, %v184
      %v208 = vpack.c.bf16 %v187, %v186
      %v209 = vpack.c.bf16 %v189, %v188
      %v210 = vpack.c.bf16 %v191, %v190
      %v211 = vpack.c.bf16 %v193, %v192
      %v212 = vlaneseq
      %v213 = vshrl.u32 %v212, 7
      %v214 = vsub.s32 0, %v213
      %v215 = vrot.slane %v200, %v214
      %v246 = vunpack.c.l.b16 %v148
      %v247 = vunpack.c.l.b16 %v149
      %v248 = vunpack.c.l.b16 %v150
      %v249 = vunpack.c.l.b16 %v151
      %v250 = vunpack.c.l.b16 %v152
      %v251 = vunpack.c.l.b16 %v153
      %v252 = vunpack.c.l.b16 %v154
      %v253 = vunpack.c.l.b16 %v155
      %v254 = vunpack.c.l.b16 %v156
      %v255 = vunpack.c.l.b16 %v157
      %v256 = vunpack.c.l.b16 %v158
      %v257 = vunpack.c.l.b16 %v159
      %v258 = vunpack.c.l.b16 %v160
      %v259 = vunpack.c.l.b16 %v161
      %v260 = vunpack.c.l.b16 %v162
      %v261 = vunpack.c.l.b16 %v163
      %v262 = vunpack.c.l.b16 %v164
      %v263 = vunpack.c.l.b16 %v165
      %v264 = vunpack.c.l.b16 %v166
      %v265 = vunpack.c.l.b16 %v167
      %v266 = vunpack.c.l.b16 %v168
      %v267 = vunpack.c.l.b16 %v169
      %v268 = vunpack.c.l.b16 %v170
      %v269 = vunpack.c.l.b16 %v171
      %v270 = vunpack.c.l.b16 %v172
      %v271 = vunpack.c.l.b16 %v173
      %v272 = vunpack.c.l.b16 %v174
      %v273 = vunpack.c.l.b16 %v175
      %v274 = vunpack.c.l.b16 %v176
      %v275 = vunpack.c.l.b16 %v177
      %v276 = vpack.c.b16 %v247, %v246
      %v277 = vpack.c.b16 %v249, %v248
      %v278 = vpack.c.b16 %v251, %v250
      %v279 = vpack.c.b16 %v253, %v252
      %v280 = vpack.c.b16 %v255, %v254
      %v281 = vpack.c.b16 %v257, %v256
      %v282 = vpack.c.b16 %v259, %v258
      %v283 = vpack.c.b16 %v261, %v260
      %v284 = vpack.c.b16 %v263, %v262
      %v285 = vpack.c.b16 %v265, %v264
      %v286 = vpack.c.b16 %v267, %v266
      %v287 = vpack.c.b16 %v269, %v268
      %v288 = vpack.c.b16 %v271, %v270
      %v289 = vpack.c.b16 %v273, %v272
      %v290 = vpack.c.b16 %v275, %v274
      %306 = vmatprep.subr.bf16.mxu0 0
      %307 = vmatpush1.bf16.msra.mxu0 %v211
      %308 = vmatprep.subr.bf16.mxu0 0
      %309 = vmatpush1.bf16.msra.mxu0 %v210
      %310 = vmatprep.subr.bf16.mxu0 0
      %311 = vmatpush1.bf16.msra.mxu0 %v209
      %312 = vmatprep.subr.bf16.mxu0 0
      %313 = vmatpush1.bf16.msra.mxu0 %v208
      %314 = vmatprep.subr.bf16.mxu0 0
      %315 = vmatpush1.bf16.msra.mxu0 %v207
      %316 = vmatprep.subr.bf16.mxu0 0
      %317 = vmatpush1.bf16.msra.mxu0 %v206
      %318 = vmatprep.subr.bf16.mxu0 0
      %319 = vmatpush1.bf16.msra.mxu0 %v205
      %320 = vmatprep.subr.bf16.mxu0 0
      %321 = vmatpush1.bf16.msra.mxu0 %v204
      %322 = vmatprep.subr.bf16.mxu0 0
      %323 = vmatpush2.bf16.msra.mxu0 0
      %324 = vmatprep.subr.bf16.mxu0 0
      %325 = vmatpush2.bf16.msra.mxu0 0
      %326 = vmatprep.subr.bf16.mxu0 0
      %327 = vmatpush2.bf16.msra.mxu0 0
      %328 = vmatprep.subr.bf16.mxu0 0
      %329 = vmatpush2.bf16.msra.mxu0 0
      %330 = vmatprep.subr.bf16.mxu0 0
      %331 = vmatpush2.bf16.msra.mxu0 0
      %332 = vmatprep.subr.bf16.mxu0 0
      %333 = vmatpush2.bf16.msra.mxu0 0
      %334 = vmatprep.subr.bf16.mxu0 0
      %335 = vmatpush2.bf16.msra.mxu0 0
      %336 = vmatprep.subr.bf16.mxu0 0
      %337 = vmatpush2.bf16.msra.mxu0 0
      %338 = vmatprep.mubr.bf16.mxu0 0
      %339 = vmatmul.mubr.bf16.gmra.mxu0 %v276
      %v340 = vpop.f32.mrf.mxu0
      %v341 = vadd.f32 %v215, %v340
      %v342 = vpop.f32.mrf.mxu0
      %v343 = vpop.f32.mrf.mxu0
      %v344 = vadd.f32 %v215, %v343
      %v345 = vpop.f32.mrf.mxu0
      %346 = vmatprep.mubr.bf16.mxu0 0
      %347 = vmatmul.mubr.bf16.gmra.mxu0 %v277
      %v348 = vpop.f32.mrf.mxu0
      %v349 = vadd.f32 %v215, %v348
      %v350 = vpop.f32.mrf.mxu0
      %v351 = vpop.f32.mrf.mxu0
      %v352 = vadd.f32 %v215, %v351
      %v353 = vpop.f32.mrf.mxu0
      %354 = vmatprep.mubr.bf16.mxu0 0
      %355 = vmatmul.mubr.bf16.gmra.mxu0 %v278
      %v356 = vpop.f32.mrf.mxu0
      %v357 = vadd.f32 %v215, %v356
      %v358 = vpop.f32.mrf.mxu0
      %v359 = vpop.f32.mrf.mxu0
      %v360 = vadd.f32 %v215, %v359
      %v361 = vpop.f32.mrf.mxu0
      %362 = vmatprep.mubr.bf16.mxu0 0
      %363 = vmatmul.mubr.bf16.gmra.mxu0 %v279
      %v364 = vpop.f32.mrf.mxu0
      %v365 = vadd.f32 %v215, %v364
      %v366 = vpop.f32.mrf.mxu0
      %v367 = vpop.f32.mrf.mxu0
      %v368 = vadd.f32 %v215, %v367
      %v369 = vpop.f32.mrf.mxu0
      %370 = vmatprep.mubr.bf16.mxu0 0
      %371 = vmatmul.mubr.bf16.gmra.mxu0 %v280
      %v372 = vpop.f32.mrf.mxu0
      %v373 = vadd.f32 %v215, %v372
      %v374 = vpop.f32.mrf.mxu0
      %v375 = vpop.f32.mrf.mxu0
      %v376 = vadd.f32 %v215, %v375
      %v377 = vpop.f32.mrf.mxu0
      %378 = vmatprep.mubr.bf16.mxu0 0
      %379 = vmatmul.mubr.bf16.gmra.mxu0 %v281
      %v380 = vpop.f32.mrf.mxu0
      %v381 = vadd.f32 %v215, %v380
      %v382 = vpop.f32.mrf.mxu0
      %v383 = vpop.f32.mrf.mxu0
      %v384 = vadd.f32 %v215, %v383
      %v385 = vpop.f32.mrf.mxu0
      %386 = vmatprep.mubr.bf16.mxu0 0
      %387 = vmatmul.mubr.bf16.gmra.mxu0 %v282
      %v388 = vpop.f32.mrf.mxu0
      %v389 = vadd.f32 %v215, %v388
      %v390 = vpop.f32.mrf.mxu0
      %v391 = vpop.f32.mrf.mxu0
      %v392 = vadd.f32 %v215, %v391
      %v393 = vpop.f32.mrf.mxu0
      %394 = vmatprep.mubr.bf16.mxu0 0
      %395 = vmatmul.mubr.bf16.gmra.mxu0 %v283
      %v396 = vpop.f32.mrf.mxu0
      %v397 = vadd.f32 %v215, %v396
      %v398 = vpop.f32.mrf.mxu0
      %v399 = vpop.f32.mrf.mxu0
      %v400 = vadd.f32 %v215, %v399
      %v401 = vpop.f32.mrf.mxu0
      %402 = vmatprep.mubr.bf16.mxu0 0
      %403 = vmatmul.mubr.bf16.gmra.mxu0 %v284
      %v404 = vpop.f32.mrf.mxu0
      %v405 = vadd.f32 %v215, %v404
      %v406 = vpop.f32.mrf.mxu0
      %v407 = vpop.f32.mrf.mxu0
      %v408 = vadd.f32 %v215, %v407
      %v409 = vpop.f32.mrf.mxu0
      %410 = vmatprep.mubr.bf16.mxu0 0
      %411 = vmatmul.mubr.bf16.gmra.mxu0 %v285
      %v412 = vpop.f32.mrf.mxu0
      %v413 = vadd.f32 %v215, %v412
      %v414 = vpop.f32.mrf.mxu0
      %v415 = vpop.f32.mrf.mxu0
      %v416 = vadd.f32 %v215, %v415
      %v417 = vpop.f32.mrf.mxu0
      %418 = vmatprep.mubr.bf16.mxu0 0
      %419 = vmatmul.mubr.bf16.gmra.mxu0 %v286
      %v420 = vpop.f32.mrf.mxu0
      %v421 = vadd.f32 %v215, %v420
      %v422 = vpop.f32.mrf.mxu0
      %v423 = vpop.f32.mrf.mxu0
      %v424 = vadd.f32 %v215, %v423
      %v425 = vpop.f32.mrf.mxu0
      %426 = vmatprep.mubr.bf16.mxu0 0
      %427 = vmatmul.mubr.bf16.gmra.mxu0 %v287
      %v428 = vpop.f32.mrf.mxu0
      %v429 = vadd.f32 %v215, %v428
      %v430 = vpop.f32.mrf.mxu0
      %v431 = vpop.f32.mrf.mxu0
      %v432 = vadd.f32 %v215, %v431
      %v433 = vpop.f32.mrf.mxu0
      %434 = vmatprep.mubr.bf16.mxu0 0
      %435 = vmatmul.mubr.bf16.gmra.mxu0 %v288
      %v436 = vpop.f32.mrf.mxu0
      %v437 = vadd.f32 %v215, %v436
      %v438 = vpop.f32.mrf.mxu0
      %v439 = vpop.f32.mrf.mxu0
      %v440 = vadd.f32 %v215, %v439
      %v441 = vpop.f32.mrf.mxu0
      %442 = vmatprep.mubr.bf16.mxu0 0
      %443 = vmatmul.mubr.bf16.gmra.mxu0 %v289
      %v444 = vpop.f32.mrf.mxu0
      %v445 = vadd.f32 %v215, %v444
      %v446 = vpop.f32.mrf.mxu0
      %v447 = vpop.f32.mrf.mxu0
      %v448 = vadd.f32 %v215, %v447
      %v449 = vpop.f32.mrf.mxu0
      %450 = vmatprep.mubr.bf16.mxu0 0
      %451 = vmatmul.mubr.bf16.gmra.mxu0 %v290
      %v452 = vpop.f32.mrf.mxu0
      %v453 = vadd.f32 %v215, %v452
      %v454 = vpop.f32.mrf.mxu0
      %v455 = vpop.f32.mrf.mxu0
      %v456 = vadd.f32 %v215, %v455
      %v457 = vpop.f32.mrf.mxu0
      %458 = vdwg.mxu0
      %v459 = vmax.f32 %v341, 0.0
      %v460 = vmax.f32 %v344, 0.0
      %v461 = vmax.f32 %v349, 0.0
      %v462 = vmax.f32 %v352, 0.0
      %v463 = vmax.f32 %v357, 0.0
      %v464 = vmax.f32 %v360, 0.0
      %v465 = vmax.f32 %v365, 0.0
      %v466 = vmax.f32 %v368, 0.0
      %v467 = vmax.f32 %v373, 0.0
      %v468 = vmax.f32 %v376, 0.0
      %v469 = vmax.f32 %v381, 0.0
      %v470 = vmax.f32 %v384, 0.0
      %v471 = vmax.f32 %v389, 0.0
      %v472 = vmax.f32 %v392, 0.0
      %v473 = vmax.f32 %v397, 0.0
      %v474 = vmax.f32 %v400, 0.0
      %v475 = vmax.f32 %v405, 0.0
      %v476 = vmax.f32 %v408, 0.0
      %v477 = vmax.f32 %v413, 0.0
      %v478 = vmax.f32 %v416, 0.0
      %v479 = vmax.f32 %v421, 0.0
      %v480 = vmax.f32 %v424, 0.0
      %v481 = vmax.f32 %v429, 0.0
      %v482 = vmax.f32 %v432, 0.0
      %v483 = vmax.f32 %v437, 0.0
      %v484 = vmax.f32 %v440, 0.0
      %v485 = vmax.f32 %v445, 0.0
      %v486 = vmax.f32 %v448, 0.0
      %v487 = vmax.f32 %v453, 0.0
      %v488 = vmax.f32 %v456, 0.0
      %v489 = vpack.c.bf16 %v460, %v459
      %v490 = vpack.c.bf16 %v462, %v461
      %v491 = vpack.c.bf16 %v464, %v463
      %v492 = vpack.c.bf16 %v466, %v465
      %v493 = vpack.c.bf16 %v468, %v467
      %v494 = vpack.c.bf16 %v470, %v469
      %v495 = vpack.c.bf16 %v472, %v471
      %v496 = vpack.c.bf16 %v474, %v473
      %v497 = vpack.c.bf16 %v476, %v475
      %v498 = vpack.c.bf16 %v478, %v477
      %v499 = vpack.c.bf16 %v480, %v479
      %v500 = vpack.c.bf16 %v482, %v481
      %v501 = vpack.c.bf16 %v484, %v483
      %v502 = vpack.c.bf16 %v486, %v485
      %v503 = vpack.c.bf16 %v488, %v487
      %v504 = vpack.c.bf16 %v195, %v194
      %v505 = vpack.c.bf16 %v196, %v196
      %v506 = vlaneseq
      %v507 = vshrl.u32 %v506, 7
      %v508 = vsub.s32 0, %v507
      %v509 = vrot.slane %v201, %v508
      %vm510 = vcmask 162816
      %v512 = vsel %vm510, %v489, 0
      %v515 = vsel %vm510, %v490, 0
      %v518 = vsel %vm510, %v491, 0
      %v521 = vsel %vm510, %v492, 0
      %v524 = vsel %vm510, %v493, 0
      %v527 = vsel %vm510, %v494, 0
      %v530 = vsel %vm510, %v495, 0
      %v533 = vsel %vm510, %v496, 0
      %v536 = vsel %vm510, %v497, 0
      %v539 = vsel %vm510, %v498, 0
      %v542 = vsel %vm510, %v499, 0
      %v545 = vsel %vm510, %v500, 0
      %v548 = vsel %vm510, %v501, 0
      %v551 = vsel %vm510, %v502, 0
      %v554 = vsel %vm510, %v503, 0
      %vm556 = vcmask 1041408
      %v558 = vsel %vm556, %v505, 0
      %560 = vmatprep.subr.bf16.mxu0 0
      %561 = vmatpush1.bf16.msra.mxu0 0
      %562 = vmatprep.subr.bf16.mxu0 0
      %563 = vmatpush1.bf16.msra.mxu0 0
      %564 = vmatprep.subr.bf16.mxu0 0
      %565 = vmatpush1.bf16.msra.mxu0 0
      %566 = vmatprep.subr.bf16.mxu0 0
      %567 = vmatpush1.bf16.msra.mxu0 0
      %568 = vmatprep.subr.bf16.mxu0 0
      %569 = vmatpush1.bf16.msra.mxu0 0
      %570 = vmatprep.subr.bf16.mxu0 0
      %571 = vmatpush1.bf16.msra.mxu0 0
      %572 = vmatprep.subr.bf16.mxu0 0
      %573 = vmatpush1.bf16.msra.mxu0 %v558
      %574 = vmatprep.subr.bf16.mxu0 0
      %575 = vmatpush1.bf16.msra.mxu0 %v504
      %576 = vmatprep.subr.bf16.mxu0 0
      %577 = vmatpush2.bf16.msra.mxu0 0
      %578 = vmatprep.subr.bf16.mxu0 0
      %579 = vmatpush2.bf16.msra.mxu0 0
      %580 = vmatprep.subr.bf16.mxu0 0
      %581 = vmatpush2.bf16.msra.mxu0 0
      %582 = vmatprep.subr.bf16.mxu0 0
      %583 = vmatpush2.bf16.msra.mxu0 0
      %584 = vmatprep.subr.bf16.mxu0 0
      %585 = vmatpush2.bf16.msra.mxu0 0
      %586 = vmatprep.subr.bf16.mxu0 0
      %587 = vmatpush2.bf16.msra.mxu0 0
      %588 = vmatprep.subr.bf16.mxu0 0
      %589 = vmatpush2.bf16.msra.mxu0 0
      %590 = vmatprep.subr.bf16.mxu0 0
      %591 = vmatpush2.bf16.msra.mxu0 0
      %592 = vmatprep.mubr.bf16.mxu0 0
      %593 = vmatmul.mubr.bf16.gmra.mxu0 %v512
      %v594 = vpop.f32.mrf.mxu0
      %v595 = vadd.f32 %v509, %v594
      %v596 = vpop.f32.mrf.mxu0
      %v597 = vpop.f32.mrf.mxu0
      %v598 = vadd.f32 %v509, %v597
      %v599 = vpop.f32.mrf.mxu0
      %600 = vmatprep.mubr.bf16.mxu0 0
      %601 = vmatmul.mubr.bf16.gmra.mxu0 %v515
      %v602 = vpop.f32.mrf.mxu0
      %v603 = vadd.f32 %v509, %v602
      %v604 = vpop.f32.mrf.mxu0
      %v605 = vpop.f32.mrf.mxu0
      %v606 = vadd.f32 %v509, %v605
      %v607 = vpop.f32.mrf.mxu0
      %608 = vmatprep.mubr.bf16.mxu0 0
      %609 = vmatmul.mubr.bf16.gmra.mxu0 %v518
      %v610 = vpop.f32.mrf.mxu0
      %v611 = vadd.f32 %v509, %v610
      %v612 = vpop.f32.mrf.mxu0
      %v613 = vpop.f32.mrf.mxu0
      %v614 = vadd.f32 %v509, %v613
      %v615 = vpop.f32.mrf.mxu0
      %616 = vmatprep.mubr.bf16.mxu0 0
      %617 = vmatmul.mubr.bf16.gmra.mxu0 %v521
      %v618 = vpop.f32.mrf.mxu0
      %v619 = vadd.f32 %v509, %v618
      %v620 = vpop.f32.mrf.mxu0
      %v621 = vpop.f32.mrf.mxu0
      %v622 = vadd.f32 %v509, %v621
      %v623 = vpop.f32.mrf.mxu0
      %624 = vmatprep.mubr.bf16.mxu0 0
      %625 = vmatmul.mubr.bf16.gmra.mxu0 %v524
      %v626 = vpop.f32.mrf.mxu0
      %v627 = vadd.f32 %v509, %v626
      %v628 = vpop.f32.mrf.mxu0
      %v629 = vpop.f32.mrf.mxu0
      %v630 = vadd.f32 %v509, %v629
      %v631 = vpop.f32.mrf.mxu0
      %632 = vmatprep.mubr.bf16.mxu0 0
      %633 = vmatmul.mubr.bf16.gmra.mxu0 %v527
      %v634 = vpop.f32.mrf.mxu0
      %v635 = vadd.f32 %v509, %v634
      %v636 = vpop.f32.mrf.mxu0
      %v637 = vpop.f32.mrf.mxu0
      %v638 = vadd.f32 %v509, %v637
      %v639 = vpop.f32.mrf.mxu0
      %640 = vmatprep.mubr.bf16.mxu0 0
      %641 = vmatmul.mubr.bf16.gmra.mxu0 %v530
      %v642 = vpop.f32.mrf.mxu0
      %v643 = vadd.f32 %v509, %v642
      %v644 = vpop.f32.mrf.mxu0
      %v645 = vpop.f32.mrf.mxu0
      %v646 = vadd.f32 %v509, %v645
      %v647 = vpop.f32.mrf.mxu0
      %648 = vmatprep.mubr.bf16.mxu0 0
      %649 = vmatmul.mubr.bf16.gmra.mxu0 %v533
      %v650 = vpop.f32.mrf.mxu0
      %v651 = vadd.f32 %v509, %v650
      %v652 = vpop.f32.mrf.mxu0
      %v653 = vpop.f32.mrf.mxu0
      %v654 = vadd.f32 %v509, %v653
      %v655 = vpop.f32.mrf.mxu0
      %656 = vmatprep.mubr.bf16.mxu0 0
      %657 = vmatmul.mubr.bf16.gmra.mxu0 %v536
      %v658 = vpop.f32.mrf.mxu0
      %v659 = vadd.f32 %v509, %v658
      %v660 = vpop.f32.mrf.mxu0
      %v661 = vpop.f32.mrf.mxu0
      %v662 = vadd.f32 %v509, %v661
      %v663 = vpop.f32.mrf.mxu0
      %664 = vmatprep.mubr.bf16.mxu0 0
      %665 = vmatmul.mubr.bf16.gmra.mxu0 %v539
      %v666 = vpop.f32.mrf.mxu0
      %v667 = vadd.f32 %v509, %v666
      %v668 = vpop.f32.mrf.mxu0
      %v669 = vpop.f32.mrf.mxu0
      %v670 = vadd.f32 %v509, %v669
      %v671 = vpop.f32.mrf.mxu0
      %672 = vmatprep.mubr.bf16.mxu0 0
      %673 = vmatmul.mubr.bf16.gmra.mxu0 %v542
      %v674 = vpop.f32.mrf.mxu0
      %v675 = vadd.f32 %v509, %v674
      %v676 = vpop.f32.mrf.mxu0
      %v677 = vpop.f32.mrf.mxu0
      %v678 = vadd.f32 %v509, %v677
      %v679 = vpop.f32.mrf.mxu0
      %680 = vmatprep.mubr.bf16.mxu0 0
      %681 = vmatmul.mubr.bf16.gmra.mxu0 %v545
      %v682 = vpop.f32.mrf.mxu0
      %v683 = vadd.f32 %v509, %v682
      %v684 = vpop.f32.mrf.mxu0
      %v685 = vpop.f32.mrf.mxu0
      %v686 = vadd.f32 %v509, %v685
      %v687 = vpop.f32.mrf.mxu0
      %688 = vmatprep.mubr.bf16.mxu0 0
      %689 = vmatmul.mubr.bf16.gmra.mxu0 %v548
      %v690 = vpop.f32.mrf.mxu0
      %v691 = vadd.f32 %v509, %v690
      %v692 = vpop.f32.mrf.mxu0
      %v693 = vpop.f32.mrf.mxu0
      %v694 = vadd.f32 %v509, %v693
      %v695 = vpop.f32.mrf.mxu0
      %696 = vmatprep.mubr.bf16.mxu0 0
      %697 = vmatmul.mubr.bf16.gmra.mxu0 %v551
      %v698 = vpop.f32.mrf.mxu0
      %v699 = vadd.f32 %v509, %v698
      %v700 = vpop.f32.mrf.mxu0
      %v701 = vpop.f32.mrf.mxu0
      %v702 = vadd.f32 %v509, %v701
      %v703 = vpop.f32.mrf.mxu0
      %704 = vmatprep.mubr.bf16.mxu0 0
      %705 = vmatmul.mubr.bf16.gmra.mxu0 %v554
      %v706 = vpop.f32.mrf.mxu0
      %v707 = vadd.f32 %v509, %v706
      %v708 = vpop.f32.mrf.mxu0
      %v709 = vpop.f32.mrf.mxu0
      %v710 = vadd.f32 %v509, %v709
      %v711 = vpop.f32.mrf.mxu0
      %712 = vdwg.mxu0
      %743 = vrot.lane.b32.xlu0 %v595, 118
      %v744 = vpop.permute.xlu0 %743
      %745 = vrot.lane.b32.xlu0 %v598, 118
      %v746 = vpop.permute.xlu0 %745
      %747 = vrot.lane.b32.xlu0 %v603, 118
      %v748 = vpop.permute.xlu0 %747
      %749 = vrot.lane.b32.xlu0 %v606, 118
      %v750 = vpop.permute.xlu0 %749
      %751 = vrot.lane.b32.xlu0 %v611, 118
      %v752 = vpop.permute.xlu0 %751
      %753 = vrot.lane.b32.xlu0 %v614, 118
      %v754 = vpop.permute.xlu0 %753
      %755 = vrot.lane.b32.xlu0 %v619, 118
      %v756 = vpop.permute.xlu0 %755
      %757 = vrot.lane.b32.xlu0 %v622, 118
      %v758 = vpop.permute.xlu0 %757
      %759 = vrot.lane.b32.xlu0 %v627, 118
      %v760 = vpop.permute.xlu0 %759
      %761 = vrot.lane.b32.xlu0 %v630, 118
      %v762 = vpop.permute.xlu0 %761
      %763 = vrot.lane.b32.xlu0 %v635, 118
      %v764 = vpop.permute.xlu0 %763
      %765 = vrot.lane.b32.xlu0 %v638, 118
      %v766 = vpop.permute.xlu0 %765
      %767 = vrot.lane.b32.xlu0 %v643, 118
      %v768 = vpop.permute.xlu0 %767
      %769 = vrot.lane.b32.xlu0 %v646, 118
      %v770 = vpop.permute.xlu0 %769
      %771 = vrot.lane.b32.xlu0 %v651, 118
      %v772 = vpop.permute.xlu0 %771
      %773 = vrot.lane.b32.xlu0 %v654, 118
      %v774 = vpop.permute.xlu0 %773
      %775 = vrot.lane.b32.xlu0 %v659, 118
      %v776 = vpop.permute.xlu0 %775
      %777 = vrot.lane.b32.xlu0 %v662, 118
      %v778 = vpop.permute.xlu0 %777
      %779 = vrot.lane.b32.xlu0 %v667, 118
      %v780 = vpop.permute.xlu0 %779
      %781 = vrot.lane.b32.xlu0 %v670, 118
      %v782 = vpop.permute.xlu0 %781
      %783 = vrot.lane.b32.xlu0 %v675, 118
      %v784 = vpop.permute.xlu0 %783
      %785 = vrot.lane.b32.xlu0 %v678, 118
      %v786 = vpop.permute.xlu0 %785
      %787 = vrot.lane.b32.xlu0 %v683, 118
      %v788 = vpop.permute.xlu0 %787
      %789 = vrot.lane.b32.xlu0 %v686, 118
      %v790 = vpop.permute.xlu0 %789
      %791 = vrot.lane.b32.xlu0 %v691, 118
      %v792 = vpop.permute.xlu0 %791
      %793 = vrot.lane.b32.xlu0 %v694, 118
      %v794 = vpop.permute.xlu0 %793
      %795 = vrot.lane.b32.xlu0 %v699, 118
      %v796 = vpop.permute.xlu0 %795
      %797 = vrot.lane.b32.xlu0 %v702, 118
      %v798 = vpop.permute.xlu0 %797
      %799 = vrot.lane.b32.xlu0 %v707, 118
      %v800 = vpop.permute.xlu0 %799
      %801 = vrot.lane.b32.xlu0 %v710, 118
      %v802 = vpop.permute.xlu0 %801
      %v833 = vmax.f32 %v595, %v744
      %v834 = vmax.f32 %v598, %v746
      %v835 = vmax.f32 %v603, %v748
      %v836 = vmax.f32 %v606, %v750
      %v837 = vmax.f32 %v611, %v752
      %v838 = vmax.f32 %v614, %v754
      %v839 = vmax.f32 %v619, %v756
      %v840 = vmax.f32 %v622, %v758
      %v841 = vmax.f32 %v627, %v760
      %v842 = vmax.f32 %v630, %v762
      %v843 = vmax.f32 %v635, %v764
      %v844 = vmax.f32 %v638, %v766
      %v845 = vmax.f32 %v643, %v768
      %v846 = vmax.f32 %v646, %v770
      %v847 = vmax.f32 %v651, %v772
      %v848 = vmax.f32 %v654, %v774
      %v849 = vmax.f32 %v659, %v776
      %v850 = vmax.f32 %v662, %v778
      %v851 = vmax.f32 %v667, %v780
      %v852 = vmax.f32 %v670, %v782
      %v853 = vmax.f32 %v675, %v784
      %v854 = vmax.f32 %v678, %v786
      %v855 = vmax.f32 %v683, %v788
      %v856 = vmax.f32 %v686, %v790
      %v857 = vmax.f32 %v691, %v792
      %v858 = vmax.f32 %v694, %v794
      %v859 = vmax.f32 %v699, %v796
      %v860 = vmax.f32 %v702, %v798
      %v861 = vmax.f32 %v707, %v800
      %v862 = vmax.f32 %v710, %v802
      %v893 = vcombine.high %v833, %v833
      %v895 = vunpack.c.l.s4 1983009808
      %v896 = vunpack.c.0.s8 %v895
      %v897 = vlaneseq
      %v898 = vshrl.u32 %v897, 7
      %v899 = vsub.s32 %v896, %v898
      %v900 = vrot.slane %v833, %v899
      %v902 = vunpack.c.l.s4 1983009808
      %v903 = vunpack.c.0.s8 %v902
      %v904 = vlaneseq
      %v905 = vshrl.u32 %v904, 7
      %v906 = vsub.s32 %v903, %v905
      %v907 = vrot.slane %v893, %v906
      %v908 = vcombine.high %v900, %v900
      %v909 = vcombine.high %v907, %v907
      %v910 = vcombine.high %v834, %v834
      %v912 = vunpack.c.l.s4 1983009808
      %v913 = vunpack.c.0.s8 %v912
      %v914 = vlaneseq
      %v915 = vshrl.u32 %v914, 7
      %v916 = vsub.s32 %v913, %v915
      %v917 = vrot.slane %v834, %v916
      %v919 = vunpack.c.l.s4 1983009808
      %v920 = vunpack.c.0.s8 %v919
      %v921 = vlaneseq
      %v922 = vshrl.u32 %v921, 7
      %v923 = vsub.s32 %v920, %v922
      %v924 = vrot.slane %v910, %v923
      %v925 = vcombine.high %v917, %v917
      %v926 = vcombine.high %v924, %v924
      %v927 = vcombine.high %v835, %v835
      %v929 = vunpack.c.l.s4 1983009808
      %v930 = vunpack.c.0.s8 %v929
      %v931 = vlaneseq
      %v932 = vshrl.u32 %v931, 7
      %v933 = vsub.s32 %v930, %v932
      %v934 = vrot.slane %v835, %v933
      %v936 = vunpack.c.l.s4 1983009808
      %v937 = vunpack.c.0.s8 %v936
      %v938 = vlaneseq
      %v939 = vshrl.u32 %v938, 7
      %v940 = vsub.s32 %v937, %v939
      %v941 = vrot.slane %v927, %v940
      %v942 = vcombine.high %v934, %v934
      %v943 = vcombine.high %v941, %v941
      %v944 = vcombine.high %v836, %v836
      %v946 = vunpack.c.l.s4 1983009808
      %v947 = vunpack.c.0.s8 %v946
      %v948 = vlaneseq
      %v949 = vshrl.u32 %v948, 7
      %v950 = vsub.s32 %v947, %v949
      %v951 = vrot.slane %v836, %v950
      %v953 = vunpack.c.l.s4 1983009808
      %v954 = vunpack.c.0.s8 %v953
      %v955 = vlaneseq
      %v956 = vshrl.u32 %v955, 7
      %v957 = vsub.s32 %v954, %v956
      %v958 = vrot.slane %v944, %v957
      %v959 = vcombine.high %v951, %v951
      %v960 = vcombine.high %v958, %v958
      %v961 = vcombine.high %v837, %v837
      %v963 = vunpack.c.l.s4 1983009808
      %v964 = vunpack.c.0.s8 %v963
      %v965 = vlaneseq
      %v966 = vshrl.u32 %v965, 7
      %v967 = vsub.s32 %v964, %v966
      %v968 = vrot.slane %v837, %v967
      %v970 = vunpack.c.l.s4 1983009808
      %v971 = vunpack.c.0.s8 %v970
      %v972 = vlaneseq
      %v973 = vshrl.u32 %v972, 7
      %v974 = vsub.s32 %v971, %v973
      %v975 = vrot.slane %v961, %v974
      %v976 = vcombine.high %v968, %v968
      %v977 = vcombine.high %v975, %v975
      %v978 = vcombine.high %v838, %v838
      %v980 = vunpack.c.l.s4 1983009808
      %v981 = vunpack.c.0.s8 %v980
      %v982 = vlaneseq
      %v983 = vshrl.u32 %v982, 7
      %v984 = vsub.s32 %v981, %v983
      %v985 = vrot.slane %v838, %v984
      %v987 = vunpack.c.l.s4 1983009808
      %v988 = vunpack.c.0.s8 %v987
      %v989 = vlaneseq
      %v990 = vshrl.u32 %v989, 7
      %v991 = vsub.s32 %v988, %v990
      %v992 = vrot.slane %v978, %v991
      %v993 = vcombine.high %v985, %v985
      %v994 = vcombine.high %v992, %v992
      %v995 = vcombine.high %v839, %v839
      %v997 = vunpack.c.l.s4 1983009808
      %v998 = vunpack.c.0.s8 %v997
      %v999 = vlaneseq
      %v1000 = vshrl.u32 %v999, 7
      %v1001 = vsub.s32 %v998, %v1000
      %v1002 = vrot.slane %v839, %v1001
      %v1004 = vunpack.c.l.s4 1983009808
      %v1005 = vunpack.c.0.s8 %v1004
      %v1006 = vlaneseq
      %v1007 = vshrl.u32 %v1006, 7
      %v1008 = vsub.s32 %v1005, %v1007
      %v1009 = vrot.slane %v995, %v1008
      %v1010 = vcombine.high %v1002, %v1002
      %v1011 = vcombine.high %v1009, %v1009
      %v1012 = vcombine.high %v840, %v840
      %v1014 = vunpack.c.l.s4 1983009808
      %v1015 = vunpack.c.0.s8 %v1014
      %v1016 = vlaneseq
      %v1017 = vshrl.u32 %v1016, 7
      %v1018 = vsub.s32 %v1015, %v1017
      %v1019 = vrot.slane %v840, %v1018
      %v1021 = vunpack.c.l.s4 1983009808
      %v1022 = vunpack.c.0.s8 %v1021
      %v1023 = vlaneseq
      %v1024 = vshrl.u32 %v1023, 7
      %v1025 = vsub.s32 %v1022, %v1024
      %v1026 = vrot.slane %v1012, %v1025
      %v1027 = vcombine.high %v1019, %v1019
      %v1028 = vcombine.high %v1026, %v1026
      %v1029 = vcombine.high %v841, %v841
      %v1031 = vunpack.c.l.s4 1983009808
      %v1032 = vunpack.c.0.s8 %v1031
      %v1033 = vlaneseq
      %v1034 = vshrl.u32 %v1033, 7
      %v1035 = vsub.s32 %v1032, %v1034
      %v1036 = vrot.slane %v841, %v1035
      %v1038 = vunpack.c.l.s4 1983009808
      %v1039 = vunpack.c.0.s8 %v1038
      %v1040 = vlaneseq
      %v1041 = vshrl.u32 %v1040, 7
      %v1042 = vsub.s32 %v1039, %v1041
      %v1043 = vrot.slane %v1029, %v1042
      %v1044 = vcombine.high %v1036, %v1036
      %v1045 = vcombine.high %v1043, %v1043
      %v1046 = vcombine.high %v842, %v842
      %v1048 = vunpack.c.l.s4 1983009808
      %v1049 = vunpack.c.0.s8 %v1048
      %v1050 = vlaneseq
      %v1051 = vshrl.u32 %v1050, 7
      %v1052 = vsub.s32 %v1049, %v1051
      %v1053 = vrot.slane %v842, %v1052
      %v1055 = vunpack.c.l.s4 1983009808
      %v1056 = vunpack.c.0.s8 %v1055
      %v1057 = vlaneseq
      %v1058 = vshrl.u32 %v1057, 7
      %v1059 = vsub.s32 %v1056, %v1058
      %v1060 = vrot.slane %v1046, %v1059
      %v1061 = vcombine.high %v1053, %v1053
      %v1062 = vcombine.high %v1060, %v1060
      %v1063 = vcombine.high %v843, %v843
      %v1065 = vunpack.c.l.s4 1983009808
      %v1066 = vunpack.c.0.s8 %v1065
      %v1067 = vlaneseq
      %v1068 = vshrl.u32 %v1067, 7
      %v1069 = vsub.s32 %v1066, %v1068
      %v1070 = vrot.slane %v843, %v1069
      %v1072 = vunpack.c.l.s4 1983009808
      %v1073 = vunpack.c.0.s8 %v1072
      %v1074 = vlaneseq
      %v1075 = vshrl.u32 %v1074, 7
      %v1076 = vsub.s32 %v1073, %v1075
      %v1077 = vrot.slane %v1063, %v1076
      %v1078 = vcombine.high %v1070, %v1070
      %v1079 = vcombine.high %v1077, %v1077
      %v1080 = vcombine.high %v844, %v844
      %v1082 = vunpack.c.l.s4 1983009808
      %v1083 = vunpack.c.0.s8 %v1082
      %v1084 = vlaneseq
      %v1085 = vshrl.u32 %v1084, 7
      %v1086 = vsub.s32 %v1083, %v1085
      %v1087 = vrot.slane %v844, %v1086
      %v1089 = vunpack.c.l.s4 1983009808
      %v1090 = vunpack.c.0.s8 %v1089
      %v1091 = vlaneseq
      %v1092 = vshrl.u32 %v1091, 7
      %v1093 = vsub.s32 %v1090, %v1092
      %v1094 = vrot.slane %v1080, %v1093
      %v1095 = vcombine.high %v1087, %v1087
      %v1096 = vcombine.high %v1094, %v1094
      %v1097 = vcombine.high %v845, %v845
      %v1099 = vunpack.c.l.s4 1983009808
      %v1100 = vunpack.c.0.s8 %v1099
      %v1101 = vlaneseq
      %v1102 = vshrl.u32 %v1101, 7
      %v1103 = vsub.s32 %v1100, %v1102
      %v1104 = vrot.slane %v845, %v1103
      %v1106 = vunpack.c.l.s4 1983009808
      %v1107 = vunpack.c.0.s8 %v1106
      %v1108 = vlaneseq
      %v1109 = vshrl.u32 %v1108, 7
      %v1110 = vsub.s32 %v1107, %v1109
      %v1111 = vrot.slane %v1097, %v1110
      %v1112 = vcombine.high %v1104, %v1104
      %v1113 = vcombine.high %v1111, %v1111
      %v1114 = vcombine.high %v846, %v846
      %v1116 = vunpack.c.l.s4 1983009808
      %v1117 = vunpack.c.0.s8 %v1116
      %v1118 = vlaneseq
      %v1119 = vshrl.u32 %v1118, 7
      %v1120 = vsub.s32 %v1117, %v1119
      %v1121 = vrot.slane %v846, %v1120
      %v1123 = vunpack.c.l.s4 1983009808
      %v1124 = vunpack.c.0.s8 %v1123
      %v1125 = vlaneseq
      %v1126 = vshrl.u32 %v1125, 7
      %v1127 = vsub.s32 %v1124, %v1126
      %v1128 = vrot.slane %v1114, %v1127
      %v1129 = vcombine.high %v1121, %v1121
      %v1130 = vcombine.high %v1128, %v1128
      %v1131 = vcombine.high %v847, %v847
      %v1133 = vunpack.c.l.s4 1983009808
      %v1134 = vunpack.c.0.s8 %v1133
      %v1135 = vlaneseq
      %v1136 = vshrl.u32 %v1135, 7
      %v1137 = vsub.s32 %v1134, %v1136
      %v1138 = vrot.slane %v847, %v1137
      %v1140 = vunpack.c.l.s4 1983009808
      %v1141 = vunpack.c.0.s8 %v1140
      %v1142 = vlaneseq
      %v1143 = vshrl.u32 %v1142, 7
      %v1144 = vsub.s32 %v1141, %v1143
      %v1145 = vrot.slane %v1131, %v1144
      %v1146 = vcombine.high %v1138, %v1138
      %v1147 = vcombine.high %v1145, %v1145
      %v1148 = vcombine.high %v848, %v848
      %v1150 = vunpack.c.l.s4 1983009808
      %v1151 = vunpack.c.0.s8 %v1150
      %v1152 = vlaneseq
      %v1153 = vshrl.u32 %v1152, 7
      %v1154 = vsub.s32 %v1151, %v1153
      %v1155 = vrot.slane %v848, %v1154
      %v1157 = vunpack.c.l.s4 1983009808
      %v1158 = vunpack.c.0.s8 %v1157
      %v1159 = vlaneseq
      %v1160 = vshrl.u32 %v1159, 7
      %v1161 = vsub.s32 %v1158, %v1160
      %v1162 = vrot.slane %v1148, %v1161
      %v1163 = vcombine.high %v1155, %v1155
      %v1164 = vcombine.high %v1162, %v1162
      %v1165 = vcombine.high %v849, %v849
      %v1167 = vunpack.c.l.s4 1983009808
      %v1168 = vunpack.c.0.s8 %v1167
      %v1169 = vlaneseq
      %v1170 = vshrl.u32 %v1169, 7
      %v1171 = vsub.s32 %v1168, %v1170
      %v1172 = vrot.slane %v849, %v1171
      %v1174 = vunpack.c.l.s4 1983009808
      %v1175 = vunpack.c.0.s8 %v1174
      %v1176 = vlaneseq
      %v1177 = vshrl.u32 %v1176, 7
      %v1178 = vsub.s32 %v1175, %v1177
      %v1179 = vrot.slane %v1165, %v1178
      %v1180 = vcombine.high %v1172, %v1172
      %v1181 = vcombine.high %v1179, %v1179
      %v1182 = vcombine.high %v850, %v850
      %v1184 = vunpack.c.l.s4 1983009808
      %v1185 = vunpack.c.0.s8 %v1184
      %v1186 = vlaneseq
      %v1187 = vshrl.u32 %v1186, 7
      %v1188 = vsub.s32 %v1185, %v1187
      %v1189 = vrot.slane %v850, %v1188
      %v1191 = vunpack.c.l.s4 1983009808
      %v1192 = vunpack.c.0.s8 %v1191
      %v1193 = vlaneseq
      %v1194 = vshrl.u32 %v1193, 7
      %v1195 = vsub.s32 %v1192, %v1194
      %v1196 = vrot.slane %v1182, %v1195
      %v1197 = vcombine.high %v1189, %v1189
      %v1198 = vcombine.high %v1196, %v1196
      %v1199 = vcombine.high %v851, %v851
      %v1201 = vunpack.c.l.s4 1983009808
      %v1202 = vunpack.c.0.s8 %v1201
      %v1203 = vlaneseq
      %v1204 = vshrl.u32 %v1203, 7
      %v1205 = vsub.s32 %v1202, %v1204
      %v1206 = vrot.slane %v851, %v1205
      %v1208 = vunpack.c.l.s4 1983009808
      %v1209 = vunpack.c.0.s8 %v1208
      %v1210 = vlaneseq
      %v1211 = vshrl.u32 %v1210, 7
      %v1212 = vsub.s32 %v1209, %v1211
      %v1213 = vrot.slane %v1199, %v1212
      %v1214 = vcombine.high %v1206, %v1206
      %v1215 = vcombine.high %v1213, %v1213
      %v1216 = vcombine.high %v852, %v852
      %v1218 = vunpack.c.l.s4 1983009808
      %v1219 = vunpack.c.0.s8 %v1218
      %v1220 = vlaneseq
      %v1221 = vshrl.u32 %v1220, 7
      %v1222 = vsub.s32 %v1219, %v1221
      %v1223 = vrot.slane %v852, %v1222
      %v1225 = vunpack.c.l.s4 1983009808
      %v1226 = vunpack.c.0.s8 %v1225
      %v1227 = vlaneseq
      %v1228 = vshrl.u32 %v1227, 7
      %v1229 = vsub.s32 %v1226, %v1228
      %v1230 = vrot.slane %v1216, %v1229
      %v1231 = vcombine.high %v1223, %v1223
      %v1232 = vcombine.high %v1230, %v1230
      %v1233 = vcombine.high %v853, %v853
      %v1235 = vunpack.c.l.s4 1983009808
      %v1236 = vunpack.c.0.s8 %v1235
      %v1237 = vlaneseq
      %v1238 = vshrl.u32 %v1237, 7
      %v1239 = vsub.s32 %v1236, %v1238
      %v1240 = vrot.slane %v853, %v1239
      %v1242 = vunpack.c.l.s4 1983009808
      %v1243 = vunpack.c.0.s8 %v1242
      %v1244 = vlaneseq
      %v1245 = vshrl.u32 %v1244, 7
      %v1246 = vsub.s32 %v1243, %v1245
      %v1247 = vrot.slane %v1233, %v1246
      %v1248 = vcombine.high %v1240, %v1240
      %v1249 = vcombine.high %v1247, %v1247
      %v1250 = vcombine.high %v854, %v854
      %v1252 = vunpack.c.l.s4 1983009808
      %v1253 = vunpack.c.0.s8 %v1252
      %v1254 = vlaneseq
      %v1255 = vshrl.u32 %v1254, 7
      %v1256 = vsub.s32 %v1253, %v1255
      %v1257 = vrot.slane %v854, %v1256
      %v1259 = vunpack.c.l.s4 1983009808
      %v1260 = vunpack.c.0.s8 %v1259
      %v1261 = vlaneseq
      %v1262 = vshrl.u32 %v1261, 7
      %v1263 = vsub.s32 %v1260, %v1262
      %v1264 = vrot.slane %v1250, %v1263
      %v1265 = vcombine.high %v1257, %v1257
      %v1266 = vcombine.high %v1264, %v1264
      %v1267 = vcombine.high %v855, %v855
      %v1269 = vunpack.c.l.s4 1983009808
      %v1270 = vunpack.c.0.s8 %v1269
      %v1271 = vlaneseq
      %v1272 = vshrl.u32 %v1271, 7
      %v1273 = vsub.s32 %v1270, %v1272
      %v1274 = vrot.slane %v855, %v1273
      %v1276 = vunpack.c.l.s4 1983009808
      %v1277 = vunpack.c.0.s8 %v1276
      %v1278 = vlaneseq
      %v1279 = vshrl.u32 %v1278, 7
      %v1280 = vsub.s32 %v1277, %v1279
      %v1281 = vrot.slane %v1267, %v1280
      %v1282 = vcombine.high %v1274, %v1274
      %v1283 = vcombine.high %v1281, %v1281
      %v1284 = vcombine.high %v856, %v856
      %v1286 = vunpack.c.l.s4 1983009808
      %v1287 = vunpack.c.0.s8 %v1286
      %v1288 = vlaneseq
      %v1289 = vshrl.u32 %v1288, 7
      %v1290 = vsub.s32 %v1287, %v1289
      %v1291 = vrot.slane %v856, %v1290
      %v1293 = vunpack.c.l.s4 1983009808
      %v1294 = vunpack.c.0.s8 %v1293
      %v1295 = vlaneseq
      %v1296 = vshrl.u32 %v1295, 7
      %v1297 = vsub.s32 %v1294, %v1296
      %v1298 = vrot.slane %v1284, %v1297
      %v1299 = vcombine.high %v1291, %v1291
      %v1300 = vcombine.high %v1298, %v1298
      %v1301 = vcombine.high %v857, %v857
      %v1303 = vunpack.c.l.s4 1983009808
      %v1304 = vunpack.c.0.s8 %v1303
      %v1305 = vlaneseq
      %v1306 = vshrl.u32 %v1305, 7
      %v1307 = vsub.s32 %v1304, %v1306
      %v1308 = vrot.slane %v857, %v1307
      %v1310 = vunpack.c.l.s4 1983009808
      %v1311 = vunpack.c.0.s8 %v1310
      %v1312 = vlaneseq
      %v1313 = vshrl.u32 %v1312, 7
      %v1314 = vsub.s32 %v1311, %v1313
      %v1315 = vrot.slane %v1301, %v1314
      %v1316 = vcombine.high %v1308, %v1308
      %v1317 = vcombine.high %v1315, %v1315
      %v1318 = vcombine.high %v858, %v858
      %v1320 = vunpack.c.l.s4 1983009808
      %v1321 = vunpack.c.0.s8 %v1320
      %v1322 = vlaneseq
      %v1323 = vshrl.u32 %v1322, 7
      %v1324 = vsub.s32 %v1321, %v1323
      %v1325 = vrot.slane %v858, %v1324
      %v1327 = vunpack.c.l.s4 1983009808
      %v1328 = vunpack.c.0.s8 %v1327
      %v1329 = vlaneseq
      %v1330 = vshrl.u32 %v1329, 7
      %v1331 = vsub.s32 %v1328, %v1330
      %v1332 = vrot.slane %v1318, %v1331
      %v1333 = vcombine.high %v1325, %v1325
      %v1334 = vcombine.high %v1332, %v1332
      %v1335 = vcombine.high %v859, %v859
      %v1337 = vunpack.c.l.s4 1983009808
      %v1338 = vunpack.c.0.s8 %v1337
      %v1339 = vlaneseq
      %v1340 = vshrl.u32 %v1339, 7
      %v1341 = vsub.s32 %v1338, %v1340
      %v1342 = vrot.slane %v859, %v1341
      %v1344 = vunpack.c.l.s4 1983009808
      %v1345 = vunpack.c.0.s8 %v1344
      %v1346 = vlaneseq
      %v1347 = vshrl.u32 %v1346, 7
      %v1348 = vsub.s32 %v1345, %v1347
      %v1349 = vrot.slane %v1335, %v1348
      %v1350 = vcombine.high %v1342, %v1342
      %v1351 = vcombine.high %v1349, %v1349
      %v1352 = vcombine.high %v860, %v860
      %v1354 = vunpack.c.l.s4 1983009808
      %v1355 = vunpack.c.0.s8 %v1354
      %v1356 = vlaneseq
      %v1357 = vshrl.u32 %v1356, 7
      %v1358 = vsub.s32 %v1355, %v1357
      %v1359 = vrot.slane %v860, %v1358
      %v1361 = vunpack.c.l.s4 1983009808
      %v1362 = vunpack.c.0.s8 %v1361
      %v1363 = vlaneseq
      %v1364 = vshrl.u32 %v1363, 7
      %v1365 = vsub.s32 %v1362, %v1364
      %v1366 = vrot.slane %v1352, %v1365
      %v1367 = vcombine.high %v1359, %v1359
      %v1368 = vcombine.high %v1366, %v1366
      %v1369 = vcombine.high %v861, %v861
      %v1371 = vunpack.c.l.s4 1983009808
      %v1372 = vunpack.c.0.s8 %v1371
      %v1373 = vlaneseq
      %v1374 = vshrl.u32 %v1373, 7
      %v1375 = vsub.s32 %v1372, %v1374
      %v1376 = vrot.slane %v861, %v1375
      %v1378 = vunpack.c.l.s4 1983009808
      %v1379 = vunpack.c.0.s8 %v1378
      %v1380 = vlaneseq
      %v1381 = vshrl.u32 %v1380, 7
      %v1382 = vsub.s32 %v1379, %v1381
      %v1383 = vrot.slane %v1369, %v1382
      %v1384 = vcombine.high %v1376, %v1376
      %v1385 = vcombine.high %v1383, %v1383
      %v1386 = vcombine.high %v862, %v862
      %v1388 = vunpack.c.l.s4 1983009808
      %v1389 = vunpack.c.0.s8 %v1388
      %v1390 = vlaneseq
      %v1391 = vshrl.u32 %v1390, 7
      %v1392 = vsub.s32 %v1389, %v1391
      %v1393 = vrot.slane %v862, %v1392
      %v1395 = vunpack.c.l.s4 1983009808
      %v1396 = vunpack.c.0.s8 %v1395
      %v1397 = vlaneseq
      %v1398 = vshrl.u32 %v1397, 7
      %v1399 = vsub.s32 %v1396, %v1398
      %v1400 = vrot.slane %v1386, %v1399
      %v1401 = vcombine.high %v1393, %v1393
      %v1402 = vcombine.high %v1400, %v1400
      %v1403 = vcombine.low %v900, %v908
      %v1405 = vunpack.c.l.s4 1983009808
      %v1406 = vunpack.c.0.s8 %v1405
      %v1407 = vlaneseq
      %v1408 = vshrl.u32 %v1407, 7
      %v1409 = vsub.s32 %v1406, %v1408
      %v1410 = vrot.slane %v1403, %v1409
      %v1412 = vunpack.c.l.s4 1983009808
      %v1413 = vunpack.c.0.s8 %v1412
      %v1414 = vlaneseq
      %v1415 = vshrl.u32 %v1414, 7
      %v1416 = vsub.s32 %v1413, %v1415
      %v1417 = vrot.slane %v907, %v1416
      %v1418 = vcombine.low %v1410, %v1417
      %v1419 = vcombine.low %v909, %v917
      %v1421 = vunpack.c.l.s4 1983009808
      %v1422 = vunpack.c.0.s8 %v1421
      %v1423 = vlaneseq
      %v1424 = vshrl.u32 %v1423, 7
      %v1425 = vsub.s32 %v1422, %v1424
      %v1426 = vrot.slane %v1419, %v1425
      %v1428 = vunpack.c.l.s4 1983009808
      %v1429 = vunpack.c.0.s8 %v1428
      %v1430 = vlaneseq
      %v1431 = vshrl.u32 %v1430, 7
      %v1432 = vsub.s32 %v1429, %v1431
      %v1433 = vrot.slane %v925, %v1432
      %v1434 = vcombine.low %v1426, %v1433
      %v1435 = vcombine.low %v924, %v926
      %v1437 = vunpack.c.l.s4 1983009808
      %v1438 = vunpack.c.0.s8 %v1437
      %v1439 = vlaneseq
      %v1440 = vshrl.u32 %v1439, 7
      %v1441 = vsub.s32 %v1438, %v1440
      %v1442 = vrot.slane %v1435, %v1441
      %v1444 = vunpack.c.l.s4 1983009808
      %v1445 = vunpack.c.0.s8 %v1444
      %v1446 = vlaneseq
      %v1447 = vshrl.u32 %v1446, 7
      %v1448 = vsub.s32 %v1445, %v1447
      %v1449 = vrot.slane %v934, %v1448
      %v1450 = vcombine.low %v1442, %v1449
      %v1451 = vcombine.low %v942, %v941
      %v1453 = vunpack.c.l.s4 1983009808
      %v1454 = vunpack.c.0.s8 %v1453
      %v1455 = vlaneseq
      %v1456 = vshrl.u32 %v1455, 7
      %v1457 = vsub.s32 %v1454, %v1456
      %v1458 = vrot.slane %v1451, %v1457
      %v1460 = vunpack.c.l.s4 1983009808
      %v1461 = vunpack.c.0.s8 %v1460
      %v1462 = vlaneseq
      %v1463 = vshrl.u32 %v1462, 7
      %v1464 = vsub.s32 %v1461, %v1463
      %v1465 = vrot.slane %v943, %v1464
      %v1466 = vcombine.low %v1458, %v1465
      %v1467 = vcombine.low %v951, %v959
      %v1469 = vunpack.c.l.s4 1983009808
      %v1470 = vunpack.c.0.s8 %v1469
      %v1471 = vlaneseq
      %v1472 = vshrl.u32 %v1471, 7
      %v1473 = vsub.s32 %v1470, %v1472
      %v1474 = vrot.slane %v1467, %v1473
      %v1476 = vunpack.c.l.s4 1983009808
      %v1477 = vunpack.c.0.s8 %v1476
      %v1478 = vlaneseq
      %v1479 = vshrl.u32 %v1478, 7
      %v1480 = vsub.s32 %v1477, %v1479
      %v1481 = vrot.slane %v958, %v1480
      %v1482 = vcombine.low %v1474, %v1481
      %v1483 = vcombine.low %v960, %v968
      %v1485 = vunpack.c.l.s4 1983009808
      %v1486 = vunpack.c.0.s8 %v1485
      %v1487 = vlaneseq
      %v1488 = vshrl.u32 %v1487, 7
      %v1489 = vsub.s32 %v1486, %v1488
      %v1490 = vrot.slane %v1483, %v1489
      %v1492 = vunpack.c.l.s4 1983009808
      %v1493 = vunpack.c.0.s8 %v1492
      %v1494 = vlaneseq
      %v1495 = vshrl.u32 %v1494, 7
      %v1496 = vsub.s32 %v1493, %v1495
      %v1497 = vrot.slane %v976, %v1496
      %v1498 = vcombine.low %v1490, %v1497
      %v1499 = vcombine.low %v975, %v977
      %v1501 = vunpack.c.l.s4 1983009808
      %v1502 = vunpack.c.0.s8 %v1501
      %v1503 = vlaneseq
      %v1504 = vshrl.u32 %v1503, 7
      %v1505 = vsub.s32 %v1502, %v1504
      %v1506 = vrot.slane %v1499, %v1505
      %v1508 = vunpack.c.l.s4 1983009808
      %v1509 = vunpack.c.0.s8 %v1508
      %v1510 = vlaneseq
      %v1511 = vshrl.u32 %v1510, 7
      %v1512 = vsub.s32 %v1509, %v1511
      %v1513 = vrot.slane %v985, %v1512
      %v1514 = vcombine.low %v1506, %v1513
      %v1515 = vcombine.low %v993, %v992
      %v1517 = vunpack.c.l.s4 1983009808
      %v1518 = vunpack.c.0.s8 %v1517
      %v1519 = vlaneseq
      %v1520 = vshrl.u32 %v1519, 7
      %v1521 = vsub.s32 %v1518, %v1520
      %v1522 = vrot.slane %v1515, %v1521
      %v1524 = vunpack.c.l.s4 1983009808
      %v1525 = vunpack.c.0.s8 %v1524
      %v1526 = vlaneseq
      %v1527 = vshrl.u32 %v1526, 7
      %v1528 = vsub.s32 %v1525, %v1527
      %v1529 = vrot.slane %v994, %v1528
      %v1530 = vcombine.low %v1522, %v1529
      %v1531 = vcombine.low %v1002, %v1010
      %v1533 = vunpack.c.l.s4 1983009808
      %v1534 = vunpack.c.0.s8 %v1533
      %v1535 = vlaneseq
      %v1536 = vshrl.u32 %v1535, 7
      %v1537 = vsub.s32 %v1534, %v1536
      %v1538 = vrot.slane %v1531, %v1537
      %v1540 = vunpack.c.l.s4 1983009808
      %v1541 = vunpack.c.0.s8 %v1540
      %v1542 = vlaneseq
      %v1543 = vshrl.u32 %v1542, 7
      %v1544 = vsub.s32 %v1541, %v1543
      %v1545 = vrot.slane %v1009, %v1544
      %v1546 = vcombine.low %v1538, %v1545
      %v1547 = vcombine.low %v1011, %v1019
      %v1549 = vunpack.c.l.s4 1983009808
      %v1550 = vunpack.c.0.s8 %v1549
      %v1551 = vlaneseq
      %v1552 = vshrl.u32 %v1551, 7
      %v1553 = vsub.s32 %v1550, %v1552
      %v1554 = vrot.slane %v1547, %v1553
      %v1556 = vunpack.c.l.s4 1983009808
      %v1557 = vunpack.c.0.s8 %v1556
      %v1558 = vlaneseq
      %v1559 = vshrl.u32 %v1558, 7
      %v1560 = vsub.s32 %v1557, %v1559
      %v1561 = vrot.slane %v1027, %v1560
      %v1562 = vcombine.low %v1554, %v1561
      %v1563 = vcombine.low %v1026, %v1028
      %v1565 = vunpack.c.l.s4 1983009808
      %v1566 = vunpack.c.0.s8 %v1565
      %v1567 = vlaneseq
      %v1568 = vshrl.u32 %v1567, 7
      %v1569 = vsub.s32 %v1566, %v1568
      %v1570 = vrot.slane %v1563, %v1569
      %v1572 = vunpack.c.l.s4 1983009808
      %v1573 = vunpack.c.0.s8 %v1572
      %v1574 = vlaneseq
      %v1575 = vshrl.u32 %v1574, 7
      %v1576 = vsub.s32 %v1573, %v1575
      %v1577 = vrot.slane %v1036, %v1576
      %v1578 = vcombine.low %v1570, %v1577
      %v1579 = vcombine.low %v1044, %v1043
      %v1581 = vunpack.c.l.s4 1983009808
      %v1582 = vunpack.c.0.s8 %v1581
      %v1583 = vlaneseq
      %v1584 = vshrl.u32 %v1583, 7
      %v1585 = vsub.s32 %v1582, %v1584
      %v1586 = vrot.slane %v1579, %v1585
      %v1588 = vunpack.c.l.s4 1983009808
      %v1589 = vunpack.c.0.s8 %v1588
      %v1590 = vlaneseq
      %v1591 = vshrl.u32 %v1590, 7
      %v1592 = vsub.s32 %v1589, %v1591
      %v1593 = vrot.slane %v1045, %v1592
      %v1594 = vcombine.low %v1586, %v1593
      %v1595 = vcombine.low %v1053, %v1061
      %v1597 = vunpack.c.l.s4 1983009808
      %v1598 = vunpack.c.0.s8 %v1597
      %v1599 = vlaneseq
      %v1600 = vshrl.u32 %v1599, 7
      %v1601 = vsub.s32 %v1598, %v1600
      %v1602 = vrot.slane %v1595, %v1601
      %v1604 = vunpack.c.l.s4 1983009808
      %v1605 = vunpack.c.0.s8 %v1604
      %v1606 = vlaneseq
      %v1607 = vshrl.u32 %v1606, 7
      %v1608 = vsub.s32 %v1605, %v1607
      %v1609 = vrot.slane %v1060, %v1608
      %v1610 = vcombine.low %v1602, %v1609
      %v1611 = vcombine.low %v1062, %v1070
      %v1613 = vunpack.c.l.s4 1983009808
      %v1614 = vunpack.c.0.s8 %v1613
      %v1615 = vlaneseq
      %v1616 = vshrl.u32 %v1615, 7
      %v1617 = vsub.s32 %v1614, %v1616
      %v1618 = vrot.slane %v1611, %v1617
      %v1620 = vunpack.c.l.s4 1983009808
      %v1621 = vunpack.c.0.s8 %v1620
      %v1622 = vlaneseq
      %v1623 = vshrl.u32 %v1622, 7
      %v1624 = vsub.s32 %v1621, %v1623
      %v1625 = vrot.slane %v1078, %v1624
      %v1626 = vcombine.low %v1618, %v1625
      %v1627 = vcombine.low %v1077, %v1079
      %v1629 = vunpack.c.l.s4 1983009808
      %v1630 = vunpack.c.0.s8 %v1629
      %v1631 = vlaneseq
      %v1632 = vshrl.u32 %v1631, 7
      %v1633 = vsub.s32 %v1630, %v1632
      %v1634 = vrot.slane %v1627, %v1633
      %v1636 = vunpack.c.l.s4 1983009808
      %v1637 = vunpack.c.0.s8 %v1636
      %v1638 = vlaneseq
      %v1639 = vshrl.u32 %v1638, 7
      %v1640 = vsub.s32 %v1637, %v1639
      %v1641 = vrot.slane %v1087, %v1640
      %v1642 = vcombine.low %v1634, %v1641
      %v1643 = vcombine.low %v1095, %v1094
      %v1645 = vunpack.c.l.s4 1983009808
      %v1646 = vunpack.c.0.s8 %v1645
      %v1647 = vlaneseq
      %v1648 = vshrl.u32 %v1647, 7
      %v1649 = vsub.s32 %v1646, %v1648
      %v1650 = vrot.slane %v1643, %v1649
      %v1652 = vunpack.c.l.s4 1983009808
      %v1653 = vunpack.c.0.s8 %v1652
      %v1654 = vlaneseq
      %v1655 = vshrl.u32 %v1654, 7
      %v1656 = vsub.s32 %v1653, %v1655
      %v1657 = vrot.slane %v1096, %v1656
      %v1658 = vcombine.low %v1650, %v1657
      %v1659 = vcombine.low %v1104, %v1112
      %v1661 = vunpack.c.l.s4 1983009808
      %v1662 = vunpack.c.0.s8 %v1661
      %v1663 = vlaneseq
      %v1664 = vshrl.u32 %v1663, 7
      %v1665 = vsub.s32 %v1662, %v1664
      %v1666 = vrot.slane %v1659, %v1665
      %v1668 = vunpack.c.l.s4 1983009808
      %v1669 = vunpack.c.0.s8 %v1668
      %v1670 = vlaneseq
      %v1671 = vshrl.u32 %v1670, 7
      %v1672 = vsub.s32 %v1669, %v1671
      %v1673 = vrot.slane %v1111, %v1672
      %v1674 = vcombine.low %v1666, %v1673
      %v1675 = vcombine.low %v1113, %v1121
      %v1677 = vunpack.c.l.s4 1983009808
      %v1678 = vunpack.c.0.s8 %v1677
      %v1679 = vlaneseq
      %v1680 = vshrl.u32 %v1679, 7
      %v1681 = vsub.s32 %v1678, %v1680
      %v1682 = vrot.slane %v1675, %v1681
      %v1684 = vunpack.c.l.s4 1983009808
      %v1685 = vunpack.c.0.s8 %v1684
      %v1686 = vlaneseq
      %v1687 = vshrl.u32 %v1686, 7
      %v1688 = vsub.s32 %v1685, %v1687
      %v1689 = vrot.slane %v1129, %v1688
      %v1690 = vcombine.low %v1682, %v1689
      %v1691 = vcombine.low %v1128, %v1130
      %v1693 = vunpack.c.l.s4 1983009808
      %v1694 = vunpack.c.0.s8 %v1693
      %v1695 = vlaneseq
      %v1696 = vshrl.u32 %v1695, 7
      %v1697 = vsub.s32 %v1694, %v1696
      %v1698 = vrot.slane %v1691, %v1697
      %v1700 = vunpack.c.l.s4 1983009808
      %v1701 = vunpack.c.0.s8 %v1700
      %v1702 = vlaneseq
      %v1703 = vshrl.u32 %v1702, 7
      %v1704 = vsub.s32 %v1701, %v1703
      %v1705 = vrot.slane %v1138, %v1704
      %v1706 = vcombine.low %v1698, %v1705
      %v1707 = vcombine.low %v1146, %v1145
      %v1709 = vunpack.c.l.s4 1983009808
      %v1710 = vunpack.c.0.s8 %v1709
      %v1711 = vlaneseq
      %v1712 = vshrl.u32 %v1711, 7
      %v1713 = vsub.s32 %v1710, %v1712
      %v1714 = vrot.slane %v1707, %v1713
      %v1716 = vunpack.c.l.s4 1983009808
      %v1717 = vunpack.c.0.s8 %v1716
      %v1718 = vlaneseq
      %v1719 = vshrl.u32 %v1718, 7
      %v1720 = vsub.s32 %v1717, %v1719
      %v1721 = vrot.slane %v1147, %v1720
      %v1722 = vcombine.low %v1714, %v1721
      %v1723 = vcombine.low %v1155, %v1163
      %v1725 = vunpack.c.l.s4 1983009808
      %v1726 = vunpack.c.0.s8 %v1725
      %v1727 = vlaneseq
      %v1728 = vshrl.u32 %v1727, 7
      %v1729 = vsub.s32 %v1726, %v1728
      %v1730 = vrot.slane %v1723, %v1729
      %v1732 = vunpack.c.l.s4 1983009808
      %v1733 = vunpack.c.0.s8 %v1732
      %v1734 = vlaneseq
      %v1735 = vshrl.u32 %v1734, 7
      %v1736 = vsub.s32 %v1733, %v1735
      %v1737 = vrot.slane %v1162, %v1736
      %v1738 = vcombine.low %v1730, %v1737
      %v1739 = vcombine.low %v1164, %v1172
      %v1741 = vunpack.c.l.s4 1983009808
      %v1742 = vunpack.c.0.s8 %v1741
      %v1743 = vlaneseq
      %v1744 = vshrl.u32 %v1743, 7
      %v1745 = vsub.s32 %v1742, %v1744
      %v1746 = vrot.slane %v1739, %v1745
      %v1748 = vunpack.c.l.s4 1983009808
      %v1749 = vunpack.c.0.s8 %v1748
      %v1750 = vlaneseq
      %v1751 = vshrl.u32 %v1750, 7
      %v1752 = vsub.s32 %v1749, %v1751
      %v1753 = vrot.slane %v1180, %v1752
      %v1754 = vcombine.low %v1746, %v1753
      %v1755 = vcombine.low %v1179, %v1181
      %v1757 = vunpack.c.l.s4 1983009808
      %v1758 = vunpack.c.0.s8 %v1757
      %v1759 = vlaneseq
      %v1760 = vshrl.u32 %v1759, 7
      %v1761 = vsub.s32 %v1758, %v1760
      %v1762 = vrot.slane %v1755, %v1761
      %v1764 = vunpack.c.l.s4 1983009808
      %v1765 = vunpack.c.0.s8 %v1764
      %v1766 = vlaneseq
      %v1767 = vshrl.u32 %v1766, 7
      %v1768 = vsub.s32 %v1765, %v1767
      %v1769 = vrot.slane %v1189, %v1768
      %v1770 = vcombine.low %v1762, %v1769
      %v1771 = vcombine.low %v1197, %v1196
      %v1773 = vunpack.c.l.s4 1983009808
      %v1774 = vunpack.c.0.s8 %v1773
      %v1775 = vlaneseq
      %v1776 = vshrl.u32 %v1775, 7
      %v1777 = vsub.s32 %v1774, %v1776
      %v1778 = vrot.slane %v1771, %v1777
      %v1780 = vunpack.c.l.s4 1983009808
      %v1781 = vunpack.c.0.s8 %v1780
      %v1782 = vlaneseq
      %v1783 = vshrl.u32 %v1782, 7
      %v1784 = vsub.s32 %v1781, %v1783
      %v1785 = vrot.slane %v1198, %v1784
      %v1786 = vcombine.low %v1778, %v1785
      %v1787 = vcombine.low %v1206, %v1214
      %v1789 = vunpack.c.l.s4 1983009808
      %v1790 = vunpack.c.0.s8 %v1789
      %v1791 = vlaneseq
      %v1792 = vshrl.u32 %v1791, 7
      %v1793 = vsub.s32 %v1790, %v1792
      %v1794 = vrot.slane %v1787, %v1793
      %v1796 = vunpack.c.l.s4 1983009808
      %v1797 = vunpack.c.0.s8 %v1796
      %v1798 = vlaneseq
      %v1799 = vshrl.u32 %v1798, 7
      %v1800 = vsub.s32 %v1797, %v1799
      %v1801 = vrot.slane %v1213, %v1800
      %v1802 = vcombine.low %v1794, %v1801
      %v1803 = vcombine.low %v1215, %v1223
      %v1805 = vunpack.c.l.s4 1983009808
      %v1806 = vunpack.c.0.s8 %v1805
      %v1807 = vlaneseq
      %v1808 = vshrl.u32 %v1807, 7
      %v1809 = vsub.s32 %v1806, %v1808
      %v1810 = vrot.slane %v1803, %v1809
      %v1812 = vunpack.c.l.s4 1983009808
      %v1813 = vunpack.c.0.s8 %v1812
      %v1814 = vlaneseq
      %v1815 = vshrl.u32 %v1814, 7
      %v1816 = vsub.s32 %v1813, %v1815
      %v1817 = vrot.slane %v1231, %v1816
      %v1818 = vcombine.low %v1810, %v1817
      %v1819 = vcombine.low %v1230, %v1232
      %v1821 = vunpack.c.l.s4 1983009808
      %v1822 = vunpack.c.0.s8 %v1821
      %v1823 = vlaneseq
      %v1824 = vshrl.u32 %v1823, 7
      %v1825 = vsub.s32 %v1822, %v1824
      %v1826 = vrot.slane %v1819, %v1825
      %v1828 = vunpack.c.l.s4 1983009808
      %v1829 = vunpack.c.0.s8 %v1828
      %v1830 = vlaneseq
      %v1831 = vshrl.u32 %v1830, 7
      %v1832 = vsub.s32 %v1829, %v1831
      %v1833 = vrot.slane %v1240, %v1832
      %v1834 = vcombine.low %v1826, %v1833
      %v1835 = vcombine.low %v1248, %v1247
      %v1837 = vunpack.c.l.s4 1983009808
      %v1838 = vunpack.c.0.s8 %v1837
      %v1839 = vlaneseq
      %v1840 = vshrl.u32 %v1839, 7
      %v1841 = vsub.s32 %v1838, %v1840
      %v1842 = vrot.slane %v1835, %v1841
      %v1844 = vunpack.c.l.s4 1983009808
      %v1845 = vunpack.c.0.s8 %v1844
      %v1846 = vlaneseq
      %v1847 = vshrl.u32 %v1846, 7
      %v1848 = vsub.s32 %v1845, %v1847
      %v1849 = vrot.slane %v1249, %v1848
      %v1850 = vcombine.low %v1842, %v1849
      %v1851 = vcombine.low %v1257, %v1265
      %v1853 = vunpack.c.l.s4 1983009808
      %v1854 = vunpack.c.0.s8 %v1853
      %v1855 = vlaneseq
      %v1856 = vshrl.u32 %v1855, 7
      %v1857 = vsub.s32 %v1854, %v1856
      %v1858 = vrot.slane %v1851, %v1857
      %v1860 = vunpack.c.l.s4 1983009808
      %v1861 = vunpack.c.0.s8 %v1860
      %v1862 = vlaneseq
      %v1863 = vshrl.u32 %v1862, 7
      %v1864 = vsub.s32 %v1861, %v1863
      %v1865 = vrot.slane %v1264, %v1864
      %v1866 = vcombine.low %v1858, %v1865
      %v1867 = vcombine.low %v1266, %v1274
      %v1869 = vunpack.c.l.s4 1983009808
      %v1870 = vunpack.c.0.s8 %v1869
      %v1871 = vlaneseq
      %v1872 = vshrl.u32 %v1871, 7
      %v1873 = vsub.s32 %v1870, %v1872
      %v1874 = vrot.slane %v1867, %v1873
      %v1876 = vunpack.c.l.s4 1983009808
      %v1877 = vunpack.c.0.s8 %v1876
      %v1878 = vlaneseq
      %v1879 = vshrl.u32 %v1878, 7
      %v1880 = vsub.s32 %v1877, %v1879
      %v1881 = vrot.slane %v1282, %v1880
      %v1882 = vcombine.low %v1874, %v1881
      %v1883 = vcombine.low %v1281, %v1283
      %v1885 = vunpack.c.l.s4 1983009808
      %v1886 = vunpack.c.0.s8 %v1885
      %v1887 = vlaneseq
      %v1888 = vshrl.u32 %v1887, 7
      %v1889 = vsub.s32 %v1886, %v1888
      %v1890 = vrot.slane %v1883, %v1889
      %v1892 = vunpack.c.l.s4 1983009808
      %v1893 = vunpack.c.0.s8 %v1892
      %v1894 = vlaneseq
      %v1895 = vshrl.u32 %v1894, 7
      %v1896 = vsub.s32 %v1893, %v1895
      %v1897 = vrot.slane %v1291, %v1896
      %v1898 = vcombine.low %v1890, %v1897
      %v1899 = vcombine.low %v1299, %v1298
      %v1901 = vunpack.c.l.s4 1983009808
      %v1902 = vunpack.c.0.s8 %v1901
      %v1903 = vlaneseq
      %v1904 = vshrl.u32 %v1903, 7
      %v1905 = vsub.s32 %v1902, %v1904
      %v1906 = vrot.slane %v1899, %v1905
      %v1908 = vunpack.c.l.s4 1983009808
      %v1909 = vunpack.c.0.s8 %v1908
      %v1910 = vlaneseq
      %v1911 = vshrl.u32 %v1910, 7
      %v1912 = vsub.s32 %v1909, %v1911
      %v1913 = vrot.slane %v1300, %v1912
      %v1914 = vcombine.low %v1906, %v1913
      %v1915 = vcombine.low %v1308, %v1316
      %v1917 = vunpack.c.l.s4 1983009808
      %v1918 = vunpack.c.0.s8 %v1917
      %v1919 = vlaneseq
      %v1920 = vshrl.u32 %v1919, 7
      %v1921 = vsub.s32 %v1918, %v1920
      %v1922 = vrot.slane %v1915, %v1921
      %v1924 = vunpack.c.l.s4 1983009808
      %v1925 = vunpack.c.0.s8 %v1924
      %v1926 = vlaneseq
      %v1927 = vshrl.u32 %v1926, 7
      %v1928 = vsub.s32 %v1925, %v1927
      %v1929 = vrot.slane %v1315, %v1928
      %v1930 = vcombine.low %v1922, %v1929
      %v1931 = vcombine.low %v1317, %v1325
      %v1933 = vunpack.c.l.s4 1983009808
      %v1934 = vunpack.c.0.s8 %v1933
      %v1935 = vlaneseq
      %v1936 = vshrl.u32 %v1935, 7
      %v1937 = vsub.s32 %v1934, %v1936
      %v1938 = vrot.slane %v1931, %v1937
      %v1940 = vunpack.c.l.s4 1983009808
      %v1941 = vunpack.c.0.s8 %v1940
      %v1942 = vlaneseq
      %v1943 = vshrl.u32 %v1942, 7
      %v1944 = vsub.s32 %v1941, %v1943
      %v1945 = vrot.slane %v1333, %v1944
      %v1946 = vcombine.low %v1938, %v1945
      %v1947 = vcombine.low %v1332, %v1334
      %v1949 = vunpack.c.l.s4 1983009808
      %v1950 = vunpack.c.0.s8 %v1949
      %v1951 = vlaneseq
      %v1952 = vshrl.u32 %v1951, 7
      %v1953 = vsub.s32 %v1950, %v1952
      %v1954 = vrot.slane %v1947, %v1953
      %v1956 = vunpack.c.l.s4 1983009808
      %v1957 = vunpack.c.0.s8 %v1956
      %v1958 = vlaneseq
      %v1959 = vshrl.u32 %v1958, 7
      %v1960 = vsub.s32 %v1957, %v1959
      %v1961 = vrot.slane %v1342, %v1960
      %v1962 = vcombine.low %v1954, %v1961
      %v1963 = vcombine.low %v1350, %v1349
      %v1965 = vunpack.c.l.s4 1983009808
      %v1966 = vunpack.c.0.s8 %v1965
      %v1967 = vlaneseq
      %v1968 = vshrl.u32 %v1967, 7
      %v1969 = vsub.s32 %v1966, %v1968
      %v1970 = vrot.slane %v1963, %v1969
      %v1972 = vunpack.c.l.s4 1983009808
      %v1973 = vunpack.c.0.s8 %v1972
      %v1974 = vlaneseq
      %v1975 = vshrl.u32 %v1974, 7
      %v1976 = vsub.s32 %v1973, %v1975
      %v1977 = vrot.slane %v1351, %v1976
      %v1978 = vcombine.low %v1970, %v1977
      %v1979 = vcombine.low %v1359, %v1367
      %v1981 = vunpack.c.l.s4 1983009808
      %v1982 = vunpack.c.0.s8 %v1981
      %v1983 = vlaneseq
      %v1984 = vshrl.u32 %v1983, 7
      %v1985 = vsub.s32 %v1982, %v1984
      %v1986 = vrot.slane %v1979, %v1985
      %v1988 = vunpack.c.l.s4 1983009808
      %v1989 = vunpack.c.0.s8 %v1988
      %v1990 = vlaneseq
      %v1991 = vshrl.u32 %v1990, 7
      %v1992 = vsub.s32 %v1989, %v1991
      %v1993 = vrot.slane %v1366, %v1992
      %v1994 = vcombine.low %v1986, %v1993
      %v1995 = vcombine.low %v1368, %v1376
      %v1997 = vunpack.c.l.s4 1983009808
      %v1998 = vunpack.c.0.s8 %v1997
      %v1999 = vlaneseq
      %v2000 = vshrl.u32 %v1999, 7
      %v2001 = vsub.s32 %v1998, %v2000
      %v2002 = vrot.slane %v1995, %v2001
      %v2004 = vunpack.c.l.s4 1983009808
      %v2005 = vunpack.c.0.s8 %v2004
      %v2006 = vlaneseq
      %v2007 = vshrl.u32 %v2006, 7
      %v2008 = vsub.s32 %v2005, %v2007
      %v2009 = vrot.slane %v1384, %v2008
      %v2010 = vcombine.low %v2002, %v2009
      %v2011 = vcombine.low %v1383, %v1385
      %v2013 = vunpack.c.l.s4 1983009808
      %v2014 = vunpack.c.0.s8 %v2013
      %v2015 = vlaneseq
      %v2016 = vshrl.u32 %v2015, 7
      %v2017 = vsub.s32 %v2014, %v2016
      %v2018 = vrot.slane %v2011, %v2017
      %v2020 = vunpack.c.l.s4 1983009808
      %v2021 = vunpack.c.0.s8 %v2020
      %v2022 = vlaneseq
      %v2023 = vshrl.u32 %v2022, 7
      %v2024 = vsub.s32 %v2021, %v2023
      %v2025 = vrot.slane %v1393, %v2024
      %v2026 = vcombine.low %v2018, %v2025
      %v2027 = vcombine.low %v1401, %v1400
      %v2029 = vunpack.c.l.s4 1983009808
      %v2030 = vunpack.c.0.s8 %v2029
      %v2031 = vlaneseq
      %v2032 = vshrl.u32 %v2031, 7
      %v2033 = vsub.s32 %v2030, %v2032
      %v2034 = vrot.slane %v2027, %v2033
      %v2036 = vunpack.c.l.s4 1983009808
      %v2037 = vunpack.c.0.s8 %v2036
      %v2038 = vlaneseq
      %v2039 = vshrl.u32 %v2038, 7
      %v2040 = vsub.s32 %v2037, %v2039
      %v2041 = vrot.slane %v1402, %v2040
      %v2042 = vcombine.low %v2034, %v2041
      %vm2083 = vcmask 78848
      %v2084 = vsel %vm2083, %v1418, -inf
      %v2085 = vrot.slane %v2084, 4
      %v2086 = vmax.f32 %v2084, %v2085
      %v2087 = vrot.slane %v2086, 2
      %v2088 = vmax.f32 %v2086, %v2087
      %v2089 = vrot.slane %v2088, 1
      %v2090 = vmax.f32 %v2088, %v2089
      %v2091 = vsel %vm2083, %v1434, -inf
      %v2092 = vrot.slane %v2091, 4
      %v2093 = vmax.f32 %v2091, %v2092
      %v2094 = vrot.slane %v2093, 2
      %v2095 = vmax.f32 %v2093, %v2094
      %v2096 = vrot.slane %v2095, 1
      %v2097 = vmax.f32 %v2095, %v2096
      %v2098 = vsel %vm2083, %v1450, -inf
      %v2099 = vrot.slane %v2098, 4
      %v2100 = vmax.f32 %v2098, %v2099
      %v2101 = vrot.slane %v2100, 2
      %v2102 = vmax.f32 %v2100, %v2101
      %v2103 = vrot.slane %v2102, 1
      %v2104 = vmax.f32 %v2102, %v2103
      %v2105 = vsel %vm2083, %v1466, -inf
      %v2106 = vrot.slane %v2105, 4
      %v2107 = vmax.f32 %v2105, %v2106
      %v2108 = vrot.slane %v2107, 2
      %v2109 = vmax.f32 %v2107, %v2108
      %v2110 = vrot.slane %v2109, 1
      %v2111 = vmax.f32 %v2109, %v2110
      %v2112 = vsel %vm2083, %v1482, -inf
      %v2113 = vrot.slane %v2112, 4
      %v2114 = vmax.f32 %v2112, %v2113
      %v2115 = vrot.slane %v2114, 2
      %v2116 = vmax.f32 %v2114, %v2115
      %v2117 = vrot.slane %v2116, 1
      %v2118 = vmax.f32 %v2116, %v2117
      %v2119 = vsel %vm2083, %v1498, -inf
      %v2120 = vrot.slane %v2119, 4
      %v2121 = vmax.f32 %v2119, %v2120
      %v2122 = vrot.slane %v2121, 2
      %v2123 = vmax.f32 %v2121, %v2122
      %v2124 = vrot.slane %v2123, 1
      %v2125 = vmax.f32 %v2123, %v2124
      %v2126 = vsel %vm2083, %v1514, -inf
      %v2127 = vrot.slane %v2126, 4
      %v2128 = vmax.f32 %v2126, %v2127
      %v2129 = vrot.slane %v2128, 2
      %v2130 = vmax.f32 %v2128, %v2129
      %v2131 = vrot.slane %v2130, 1
      %v2132 = vmax.f32 %v2130, %v2131
      %v2133 = vsel %vm2083, %v1530, -inf
      %v2134 = vrot.slane %v2133, 4
      %v2135 = vmax.f32 %v2133, %v2134
      %v2136 = vrot.slane %v2135, 2
      %v2137 = vmax.f32 %v2135, %v2136
      %v2138 = vrot.slane %v2137, 1
      %v2139 = vmax.f32 %v2137, %v2138
      %v2140 = vsel %vm2083, %v1546, -inf
      %v2141 = vrot.slane %v2140, 4
      %v2142 = vmax.f32 %v2140, %v2141
      %v2143 = vrot.slane %v2142, 2
      %v2144 = vmax.f32 %v2142, %v2143
      %v2145 = vrot.slane %v2144, 1
      %v2146 = vmax.f32 %v2144, %v2145
      %v2147 = vsel %vm2083, %v1562, -inf
      %v2148 = vrot.slane %v2147, 4
      %v2149 = vmax.f32 %v2147, %v2148
      %v2150 = vrot.slane %v2149, 2
      %v2151 = vmax.f32 %v2149, %v2150
      %v2152 = vrot.slane %v2151, 1
      %v2153 = vmax.f32 %v2151, %v2152
      %v2154 = vsel %vm2083, %v1578, -inf
      %v2155 = vrot.slane %v2154, 4
      %v2156 = vmax.f32 %v2154, %v2155
      %v2157 = vrot.slane %v2156, 2
      %v2158 = vmax.f32 %v2156, %v2157
      %v2159 = vrot.slane %v2158, 1
      %v2160 = vmax.f32 %v2158, %v2159
      %v2161 = vsel %vm2083, %v1594, -inf
      %v2162 = vrot.slane %v2161, 4
      %v2163 = vmax.f32 %v2161, %v2162
      %v2164 = vrot.slane %v2163, 2
      %v2165 = vmax.f32 %v2163, %v2164
      %v2166 = vrot.slane %v2165, 1
      %v2167 = vmax.f32 %v2165, %v2166
      %v2168 = vsel %vm2083, %v1610, -inf
      %v2169 = vrot.slane %v2168, 4
      %v2170 = vmax.f32 %v2168, %v2169
      %v2171 = vrot.slane %v2170, 2
      %v2172 = vmax.f32 %v2170, %v2171
      %v2173 = vrot.slane %v2172, 1
      %v2174 = vmax.f32 %v2172, %v2173
      %v2175 = vsel %vm2083, %v1626, -inf
      %v2176 = vrot.slane %v2175, 4
      %v2177 = vmax.f32 %v2175, %v2176
      %v2178 = vrot.slane %v2177, 2
      %v2179 = vmax.f32 %v2177, %v2178
      %v2180 = vrot.slane %v2179, 1
      %v2181 = vmax.f32 %v2179, %v2180
      %v2182 = vsel %vm2083, %v1642, -inf
      %v2183 = vrot.slane %v2182, 4
      %v2184 = vmax.f32 %v2182, %v2183
      %v2185 = vrot.slane %v2184, 2
      %v2186 = vmax.f32 %v2184, %v2185
      %v2187 = vrot.slane %v2186, 1
      %v2188 = vmax.f32 %v2186, %v2187
      %v2189 = vsel %vm2083, %v1658, -inf
      %v2190 = vrot.slane %v2189, 4
      %v2191 = vmax.f32 %v2189, %v2190
      %v2192 = vrot.slane %v2191, 2
      %v2193 = vmax.f32 %v2191, %v2192
      %v2194 = vrot.slane %v2193, 1
      %v2195 = vmax.f32 %v2193, %v2194
      %v2196 = vsel %vm2083, %v1674, -inf
      %v2197 = vrot.slane %v2196, 4
      %v2198 = vmax.f32 %v2196, %v2197
      %v2199 = vrot.slane %v2198, 2
      %v2200 = vmax.f32 %v2198, %v2199
      %v2201 = vrot.slane %v2200, 1
      %v2202 = vmax.f32 %v2200, %v2201
      %v2203 = vsel %vm2083, %v1690, -inf
      %v2204 = vrot.slane %v2203, 4
      %v2205 = vmax.f32 %v2203, %v2204
      %v2206 = vrot.slane %v2205, 2
      %v2207 = vmax.f32 %v2205, %v2206
      %v2208 = vrot.slane %v2207, 1
      %v2209 = vmax.f32 %v2207, %v2208
      %v2210 = vsel %vm2083, %v1706, -inf
      %v2211 = vrot.slane %v2210, 4
      %v2212 = vmax.f32 %v2210, %v2211
      %v2213 = vrot.slane %v2212, 2
      %v2214 = vmax.f32 %v2212, %v2213
      %v2215 = vrot.slane %v2214, 1
      %v2216 = vmax.f32 %v2214, %v2215
      %v2217 = vsel %vm2083, %v1722, -inf
      %v2218 = vrot.slane %v2217, 4
      %v2219 = vmax.f32 %v2217, %v2218
      %v2220 = vrot.slane %v2219, 2
      %v2221 = vmax.f32 %v2219, %v2220
      %v2222 = vrot.slane %v2221, 1
      %v2223 = vmax.f32 %v2221, %v2222
      %v2224 = vsel %vm2083, %v1738, -inf
      %v2225 = vrot.slane %v2224, 4
      %v2226 = vmax.f32 %v2224, %v2225
      %v2227 = vrot.slane %v2226, 2
      %v2228 = vmax.f32 %v2226, %v2227
      %v2229 = vrot.slane %v2228, 1
      %v2230 = vmax.f32 %v2228, %v2229
      %v2231 = vsel %vm2083, %v1754, -inf
      %v2232 = vrot.slane %v2231, 4
      %v2233 = vmax.f32 %v2231, %v2232
      %v2234 = vrot.slane %v2233, 2
      %v2235 = vmax.f32 %v2233, %v2234
      %v2236 = vrot.slane %v2235, 1
      %v2237 = vmax.f32 %v2235, %v2236
      %v2238 = vsel %vm2083, %v1770, -inf
      %v2239 = vrot.slane %v2238, 4
      %v2240 = vmax.f32 %v2238, %v2239
      %v2241 = vrot.slane %v2240, 2
      %v2242 = vmax.f32 %v2240, %v2241
      %v2243 = vrot.slane %v2242, 1
      %v2244 = vmax.f32 %v2242, %v2243
      %v2245 = vsel %vm2083, %v1786, -inf
      %v2246 = vrot.slane %v2245, 4
      %v2247 = vmax.f32 %v2245, %v2246
      %v2248 = vrot.slane %v2247, 2
      %v2249 = vmax.f32 %v2247, %v2248
      %v2250 = vrot.slane %v2249, 1
      %v2251 = vmax.f32 %v2249, %v2250
      %v2252 = vsel %vm2083, %v1802, -inf
      %v2253 = vrot.slane %v2252, 4
      %v2254 = vmax.f32 %v2252, %v2253
      %v2255 = vrot.slane %v2254, 2
      %v2256 = vmax.f32 %v2254, %v2255
      %v2257 = vrot.slane %v2256, 1
      %v2258 = vmax.f32 %v2256, %v2257
      %v2259 = vsel %vm2083, %v1818, -inf
      %v2260 = vrot.slane %v2259, 4
      %v2261 = vmax.f32 %v2259, %v2260
      %v2262 = vrot.slane %v2261, 2
      %v2263 = vmax.f32 %v2261, %v2262
      %v2264 = vrot.slane %v2263, 1
      %v2265 = vmax.f32 %v2263, %v2264
      %v2266 = vsel %vm2083, %v1834, -inf
      %v2267 = vrot.slane %v2266, 4
      %v2268 = vmax.f32 %v2266, %v2267
      %v2269 = vrot.slane %v2268, 2
      %v2270 = vmax.f32 %v2268, %v2269
      %v2271 = vrot.slane %v2270, 1
      %v2272 = vmax.f32 %v2270, %v2271
      %v2273 = vsel %vm2083, %v1850, -inf
      %v2274 = vrot.slane %v2273, 4
      %v2275 = vmax.f32 %v2273, %v2274
      %v2276 = vrot.slane %v2275, 2
      %v2277 = vmax.f32 %v2275, %v2276
      %v2278 = vrot.slane %v2277, 1
      %v2279 = vmax.f32 %v2277, %v2278
      %v2280 = vsel %vm2083, %v1866, -inf
      %v2281 = vrot.slane %v2280, 4
      %v2282 = vmax.f32 %v2280, %v2281
      %v2283 = vrot.slane %v2282, 2
      %v2284 = vmax.f32 %v2282, %v2283
      %v2285 = vrot.slane %v2284, 1
      %v2286 = vmax.f32 %v2284, %v2285
      %v2287 = vsel %vm2083, %v1882, -inf
      %v2288 = vrot.slane %v2287, 4
      %v2289 = vmax.f32 %v2287, %v2288
      %v2290 = vrot.slane %v2289, 2
      %v2291 = vmax.f32 %v2289, %v2290
      %v2292 = vrot.slane %v2291, 1
      %v2293 = vmax.f32 %v2291, %v2292
      %v2294 = vsel %vm2083, %v1898, -inf
      %v2295 = vrot.slane %v2294, 4
      %v2296 = vmax.f32 %v2294, %v2295
      %v2297 = vrot.slane %v2296, 2
      %v2298 = vmax.f32 %v2296, %v2297
      %v2299 = vrot.slane %v2298, 1
      %v2300 = vmax.f32 %v2298, %v2299
      %v2301 = vsel %vm2083, %v1914, -inf
      %v2302 = vrot.slane %v2301, 4
      %v2303 = vmax.f32 %v2301, %v2302
      %v2304 = vrot.slane %v2303, 2
      %v2305 = vmax.f32 %v2303, %v2304
      %v2306 = vrot.slane %v2305, 1
      %v2307 = vmax.f32 %v2305, %v2306
      %v2308 = vsel %vm2083, %v1930, -inf
      %v2309 = vrot.slane %v2308, 4
      %v2310 = vmax.f32 %v2308, %v2309
      %v2311 = vrot.slane %v2310, 2
      %v2312 = vmax.f32 %v2310, %v2311
      %v2313 = vrot.slane %v2312, 1
      %v2314 = vmax.f32 %v2312, %v2313
      %v2315 = vsel %vm2083, %v1946, -inf
      %v2316 = vrot.slane %v2315, 4
      %v2317 = vmax.f32 %v2315, %v2316
      %v2318 = vrot.slane %v2317, 2
      %v2319 = vmax.f32 %v2317, %v2318
      %v2320 = vrot.slane %v2319, 1
      %v2321 = vmax.f32 %v2319, %v2320
      %v2322 = vsel %vm2083, %v1962, -inf
      %v2323 = vrot.slane %v2322, 4
      %v2324 = vmax.f32 %v2322, %v2323
      %v2325 = vrot.slane %v2324, 2
      %v2326 = vmax.f32 %v2324, %v2325
      %v2327 = vrot.slane %v2326, 1
      %v2328 = vmax.f32 %v2326, %v2327
      %v2329 = vsel %vm2083, %v1978, -inf
      %v2330 = vrot.slane %v2329, 4
      %v2331 = vmax.f32 %v2329, %v2330
      %v2332 = vrot.slane %v2331, 2
      %v2333 = vmax.f32 %v2331, %v2332
      %v2334 = vrot.slane %v2333, 1
      %v2335 = vmax.f32 %v2333, %v2334
      %v2336 = vsel %vm2083, %v1994, -inf
      %v2337 = vrot.slane %v2336, 4
      %v2338 = vmax.f32 %v2336, %v2337
      %v2339 = vrot.slane %v2338, 2
      %v2340 = vmax.f32 %v2338, %v2339
      %v2341 = vrot.slane %v2340, 1
      %v2342 = vmax.f32 %v2340, %v2341
      %v2343 = vsel %vm2083, %v2010, -inf
      %v2344 = vrot.slane %v2343, 4
      %v2345 = vmax.f32 %v2343, %v2344
      %v2346 = vrot.slane %v2345, 2
      %v2347 = vmax.f32 %v2345, %v2346
      %v2348 = vrot.slane %v2347, 1
      %v2349 = vmax.f32 %v2347, %v2348
      %v2350 = vsel %vm2083, %v2026, -inf
      %v2351 = vrot.slane %v2350, 4
      %v2352 = vmax.f32 %v2350, %v2351
      %v2353 = vrot.slane %v2352, 2
      %v2354 = vmax.f32 %v2352, %v2353
      %v2355 = vrot.slane %v2354, 1
      %v2356 = vmax.f32 %v2354, %v2355
      %v2357 = vsel %vm2083, %v2042, -inf
      %v2358 = vrot.slane %v2357, 4
      %v2359 = vmax.f32 %v2357, %v2358
      %v2360 = vrot.slane %v2359, 2
      %v2361 = vmax.f32 %v2359, %v2360
      %v2362 = vrot.slane %v2361, 1
      %v2363 = vmax.f32 %v2361, %v2362
      %vm2404 = vcmask 1041409
      %v2405 = vsel %vm2404, %v2097, %v2090
      %vm2406 = vcmask 1042434
      %v2407 = vsel %vm2406, %v2104, %v2405
      %vm2408 = vcmask 1043459
      %v2409 = vsel %vm2408, %v2111, %v2407
      %vm2410 = vcmask 1044484
      %v2411 = vsel %vm2410, %v2118, %v2409
      %vm2412 = vcmask 1045509
      %v2413 = vsel %vm2412, %v2125, %v2411
      %vm2414 = vcmask 1046534
      %v2415 = vsel %vm2414, %v2132, %v2413
      %vm2416 = vcmask 1047559
      %v2417 = vsel %vm2416, %v2139, %v2415
      %v2418 = vsel %vm2404, %v2153, %v2146
      %v2419 = vsel %vm2404, %v2167, %v2160
      %v2420 = vsel %vm2406, %v2174, %v2419
      %v2421 = vsel %vm2408, %v2181, %v2420
      %v2422 = vsel %vm2410, %v2188, %v2421
      %v2423 = vsel %vm2412, %v2195, %v2422
      %v2424 = vsel %vm2414, %v2202, %v2423
      %v2425 = vsel %vm2416, %v2209, %v2424
      %v2426 = vsel %vm2404, %v2223, %v2216
      %v2427 = vsel %vm2404, %v2237, %v2230
      %v2428 = vsel %vm2406, %v2244, %v2427
      %v2429 = vsel %vm2408, %v2251, %v2428
      %v2430 = vsel %vm2410, %v2258, %v2429
      %v2431 = vsel %vm2412, %v2265, %v2430
      %v2432 = vsel %vm2414, %v2272, %v2431
      %v2433 = vsel %vm2416, %v2279, %v2432
      %v2434 = vsel %vm2404, %v2293, %v2286
      %v2435 = vsel %vm2404, %v2307, %v2300
      %v2436 = vsel %vm2406, %v2314, %v2435
      %v2437 = vsel %vm2408, %v2321, %v2436
      %v2438 = vsel %vm2410, %v2328, %v2437
      %v2439 = vsel %vm2412, %v2335, %v2438
      %v2440 = vsel %vm2414, %v2342, %v2439
      %v2441 = vsel %vm2416, %v2349, %v2440
      %v2442 = vsel %vm2404, %v2363, %v2356
      %2451 = vxpose.xlu0.b32.start [1/16] %v2417, 128
      %2452 = vxpose.xlu0.b32.cont [2/16] %v2418, 128
      %2453 = vxpose.xlu0.b32.cont [3/16] 0.0, 128
      %2454 = vxpose.xlu0.b32.cont [4/16] 0.0, 128
      %2455 = vxpose.xlu0.b32.cont [5/16] 0.0, 128
      %2456 = vxpose.xlu0.b32.cont [6/16] 0.0, 128
      %2457 = vxpose.xlu0.b32.cont [7/16] 0.0, 128
      %2458 = vxpose.xlu0.b32.cont [8/16] 0.0, 128
      %2459 = vxpose.xlu0.b32.cont [9/16] 0.0, 128
      %2460 = vxpose.xlu0.b32.cont [10/16] 0.0, 128
      %2461 = vxpose.xlu0.b32.cont [11/16] 0.0, 128
      %2462 = vxpose.xlu0.b32.cont [12/16] 0.0, 128
      %2463 = vxpose.xlu0.b32.cont [13/16] 0.0, 128
      %2464 = vxpose.xlu0.b32.cont [14/16] 0.0, 128
      %2465 = vxpose.xlu0.b32.cont [15/16] 0.0, 128
      %2466 = vxpose.xlu0.b32.end [16/16] 0.0, 128
      %v2467 = vpop.trf.xlu0
      %v2468 = vpop.trf.xlu0
      %v2469 = vpop.trf.xlu0
      %v2470 = vpop.trf.xlu0
      %v2471 = vpop.trf.xlu0
      %v2472 = vpop.trf.xlu0
      %v2473 = vpop.trf.xlu0
      %v2474 = vpop.trf.xlu0
      %v2475 = vpop.trf.xlu0
      %v2476 = vpop.trf.xlu0
      %v2477 = vpop.trf.xlu0
      %v2478 = vpop.trf.xlu0
      %v2479 = vpop.trf.xlu0
      %v2480 = vpop.trf.xlu0
      %v2481 = vpop.trf.xlu0
      %v2482 = vpop.trf.xlu0
      %2483 = vxpose.xlu0.b32.start [1/16] %v2425, 128
      %2484 = vxpose.xlu0.b32.cont [2/16] %v2426, 128
      %2485 = vxpose.xlu0.b32.cont [3/16] 0.0, 128
      %2486 = vxpose.xlu0.b32.cont [4/16] 0.0, 128
      %2487 = vxpose.xlu0.b32.cont [5/16] 0.0, 128
      %2488 = vxpose.xlu0.b32.cont [6/16] 0.0, 128
      %2489 = vxpose.xlu0.b32.cont [7/16] 0.0, 128
      %2490 = vxpose.xlu0.b32.cont [8/16] 0.0, 128
      %2491 = vxpose.xlu0.b32.cont [9/16] 0.0, 128
      %2492 = vxpose.xlu0.b32.cont [10/16] 0.0, 128
      %2493 = vxpose.xlu0.b32.cont [11/16] 0.0, 128
      %2494 = vxpose.xlu0.b32.cont [12/16] 0.0, 128
      %2495 = vxpose.xlu0.b32.cont [13/16] 0.0, 128
      %2496 = vxpose.xlu0.b32.cont [14/16] 0.0, 128
      %2497 = vxpose.xlu0.b32.cont [15/16] 0.0, 128
      %2498 = vxpose.xlu0.b32.end [16/16] 0.0, 128
      %v2499 = vpop.trf.xlu0
      %v2500 = vpop.trf.xlu0
      %v2501 = vpop.trf.xlu0
      %v2502 = vpop.trf.xlu0
      %v2503 = vpop.trf.xlu0
      %v2504 = vpop.trf.xlu0
      %v2505 = vpop.trf.xlu0
      %v2506 = vpop.trf.xlu0
      %v2507 = vpop.trf.xlu0
      %v2508 = vpop.trf.xlu0
      %v2509 = vpop.trf.xlu0
      %v2510 = vpop.trf.xlu0
      %v2511 = vpop.trf.xlu0
      %v2512 = vpop.trf.xlu0
      %v2513 = vpop.trf.xlu0
      %v2514 = vpop.trf.xlu0
      %2515 = vxpose.xlu0.b32.start [1/16] %v2433, 128
      %2516 = vxpose.xlu0.b32.cont [2/16] %v2434, 128
      %2517 = vxpose.xlu0.b32.cont [3/16] 0.0, 128
      %2518 = vxpose.xlu0.b32.cont [4/16] 0.0, 128
      %2519 = vxpose.xlu0.b32.cont [5/16] 0.0, 128
      %2520 = vxpose.xlu0.b32.cont [6/16] 0.0, 128
      %2521 = vxpose.xlu0.b32.cont [7/16] 0.0, 128
      %2522 = vxpose.xlu0.b32.cont [8/16] 0.0, 128
      %2523 = vxpose.xlu0.b32.cont [9/16] 0.0, 128
      %2524 = vxpose.xlu0.b32.cont [10/16] 0.0, 128
      %2525 = vxpose.xlu0.b32.cont [11/16] 0.0, 128
      %2526 = vxpose.xlu0.b32.cont [12/16] 0.0, 128
      %2527 = vxpose.xlu0.b32.cont [13/16] 0.0, 128
      %2528 = vxpose.xlu0.b32.cont [14/16] 0.0, 128
      %2529 = vxpose.xlu0.b32.cont [15/16] 0.0, 128
      %2530 = vxpose.xlu0.b32.end [16/16] 0.0, 128
      %v2531 = vpop.trf.xlu0
      %v2532 = vpop.trf.xlu0
      %v2533 = vpop.trf.xlu0
      %v2534 = vpop.trf.xlu0
      %v2535 = vpop.trf.xlu0
      %v2536 = vpop.trf.xlu0
      %v2537 = vpop.trf.xlu0
      %v2538 = vpop.trf.xlu0
      %v2539 = vpop.trf.xlu0
      %v2540 = vpop.trf.xlu0
      %v2541 = vpop.trf.xlu0
      %v2542 = vpop.trf.xlu0
      %v2543 = vpop.trf.xlu0
      %v2544 = vpop.trf.xlu0
      %v2545 = vpop.trf.xlu0
      %v2546 = vpop.trf.xlu0
      %2547 = vxpose.xlu0.b32.start [1/16] %v2441, 128
      %2548 = vxpose.xlu0.b32.cont [2/16] %v2442, 128
      %2549 = vxpose.xlu0.b32.cont [3/16] 0.0, 128
      %2550 = vxpose.xlu0.b32.cont [4/16] 0.0, 128
      %2551 = vxpose.xlu0.b32.cont [5/16] 0.0, 128
      %2552 = vxpose.xlu0.b32.cont [6/16] 0.0, 128
      %2553 = vxpose.xlu0.b32.cont [7/16] 0.0, 128
      %2554 = vxpose.xlu0.b32.cont [8/16] 0.0, 128
      %2555 = vxpose.xlu0.b32.cont [9/16] 0.0, 128
      %2556 = vxpose.xlu0.b32.cont [10/16] 0.0, 128
      %2557 = vxpose.xlu0.b32.cont [11/16] 0.0, 128
      %2558 = vxpose.xlu0.b32.cont [12/16] 0.0, 128
      %2559 = vxpose.xlu0.b32.cont [13/16] 0.0, 128
      %2560 = vxpose.xlu0.b32.cont [14/16] 0.0, 128
      %2561 = vxpose.xlu0.b32.cont [15/16] 0.0, 128
      %2562 = vxpose.xlu0.b32.end [16/16] 0.0, 128
      %v2563 = vpop.trf.xlu0
      %v2564 = vpop.trf.xlu0
      %v2565 = vpop.trf.xlu0
      %v2566 = vpop.trf.xlu0
      %v2567 = vpop.trf.xlu0
      %v2568 = vpop.trf.xlu0
      %v2569 = vpop.trf.xlu0
      %v2570 = vpop.trf.xlu0
      %v2571 = vpop.trf.xlu0
      %v2572 = vpop.trf.xlu0
      %v2573 = vpop.trf.xlu0
      %v2574 = vpop.trf.xlu0
      %v2575 = vpop.trf.xlu0
      %v2576 = vpop.trf.xlu0
      %v2577 = vpop.trf.xlu0
      %v2578 = vpop.trf.xlu0
      %v2587 = vcombine.high %v2467, %v2467
      %v2589 = vunpack.c.l.s4 1983009808
      %v2590 = vunpack.c.0.s8 %v2589
      %v2591 = vlaneseq
      %v2592 = vshrl.u32 %v2591, 7
      %v2593 = vsub.s32 %v2590, %v2592
      %v2594 = vrot.slane %v2467, %v2593
      %v2596 = vunpack.c.l.s4 1983009808
      %v2597 = vunpack.c.0.s8 %v2596
      %v2598 = vlaneseq
      %v2599 = vshrl.u32 %v2598, 7
      %v2600 = vsub.s32 %v2597, %v2599
      %v2601 = vrot.slane %v2587, %v2600
      %v2602 = vcombine.high %v2594, %v2594
      %v2603 = vcombine.high %v2601, %v2601
      %v2605 = vunpack.c.l.s4 1983009808
      %v2606 = vunpack.c.0.s8 %v2605
      %v2607 = vlaneseq
      %v2608 = vshrl.u32 %v2607, 7
      %v2609 = vsub.s32 %v2606, %v2608
      %v2610 = vrot.slane %v2468, %v2609
      %v2611 = vcombine.high %v2499, %v2499
      %v2613 = vunpack.c.l.s4 1983009808
      %v2614 = vunpack.c.0.s8 %v2613
      %v2615 = vlaneseq
      %v2616 = vshrl.u32 %v2615, 7
      %v2617 = vsub.s32 %v2614, %v2616
      %v2618 = vrot.slane %v2499, %v2617
      %v2620 = vunpack.c.l.s4 1983009808
      %v2621 = vunpack.c.0.s8 %v2620
      %v2622 = vlaneseq
      %v2623 = vshrl.u32 %v2622, 7
      %v2624 = vsub.s32 %v2621, %v2623
      %v2625 = vrot.slane %v2611, %v2624
      %v2626 = vcombine.high %v2618, %v2618
      %v2627 = vcombine.high %v2625, %v2625
      %v2629 = vunpack.c.l.s4 1983009808
      %v2630 = vunpack.c.0.s8 %v2629
      %v2631 = vlaneseq
      %v2632 = vshrl.u32 %v2631, 7
      %v2633 = vsub.s32 %v2630, %v2632
      %v2634 = vrot.slane %v2500, %v2633
      %v2635 = vcombine.high %v2531, %v2531
      %v2637 = vunpack.c.l.s4 1983009808
      %v2638 = vunpack.c.0.s8 %v2637
      %v2639 = vlaneseq
      %v2640 = vshrl.u32 %v2639, 7
      %v2641 = vsub.s32 %v2638, %v2640
      %v2642 = vrot.slane %v2531, %v2641
      %v2644 = vunpack.c.l.s4 1983009808
      %v2645 = vunpack.c.0.s8 %v2644
      %v2646 = vlaneseq
      %v2647 = vshrl.u32 %v2646, 7
      %v2648 = vsub.s32 %v2645, %v2647
      %v2649 = vrot.slane %v2635, %v2648
      %v2650 = vcombine.high %v2642, %v2642
      %v2651 = vcombine.high %v2649, %v2649
      %v2653 = vunpack.c.l.s4 1983009808
      %v2654 = vunpack.c.0.s8 %v2653
      %v2655 = vlaneseq
      %v2656 = vshrl.u32 %v2655, 7
      %v2657 = vsub.s32 %v2654, %v2656
      %v2658 = vrot.slane %v2532, %v2657
      %v2659 = vcombine.high %v2563, %v2563
      %v2661 = vunpack.c.l.s4 1983009808
      %v2662 = vunpack.c.0.s8 %v2661
      %v2663 = vlaneseq
      %v2664 = vshrl.u32 %v2663, 7
      %v2665 = vsub.s32 %v2662, %v2664
      %v2666 = vrot.slane %v2563, %v2665
      %v2668 = vunpack.c.l.s4 1983009808
      %v2669 = vunpack.c.0.s8 %v2668
      %v2670 = vlaneseq
      %v2671 = vshrl.u32 %v2670, 7
      %v2672 = vsub.s32 %v2669, %v2671
      %v2673 = vrot.slane %v2659, %v2672
      %v2674 = vcombine.high %v2666, %v2666
      %v2675 = vcombine.high %v2673, %v2673
      %v2677 = vunpack.c.l.s4 1983009808
      %v2678 = vunpack.c.0.s8 %v2677
      %v2679 = vlaneseq
      %v2680 = vshrl.u32 %v2679, 7
      %v2681 = vsub.s32 %v2678, %v2680
      %v2682 = vrot.slane %v2564, %v2681
      %v2683 = vlaneseq
      %v2684 = vshrl.u32 %v2683, 7
      %v2685 = vsub.s32 0, %v2684
      %v2686 = vrot.slane %v202, %v2685
      %v2687 = vcombine.low %v2594, %v2602
      %v2688 = vcombine.low %v2601, %v2603
      %v2690 = vunpack.c.l.s4 1983009808
      %v2691 = vunpack.c.0.s8 %v2690
      %v2692 = vlaneseq
      %v2693 = vshrl.u32 %v2692, 7
      %v2694 = vsub.s32 %v2691, %v2693
      %v2695 = vrot.slane %v2687, %v2694
      %v2697 = vunpack.c.l.s4 1983009808
      %v2698 = vunpack.c.0.s8 %v2697
      %v2699 = vlaneseq
      %v2700 = vshrl.u32 %v2699, 7
      %v2701 = vsub.s32 %v2698, %v2700
      %v2702 = vrot.slane %v2688, %v2701
      %v2703 = vcombine.low %v2695, %v2702
      %v2704 = vcombine.low %v2610, %v2618
      %v2705 = vcombine.low %v2626, %v2625
      %v2707 = vunpack.c.l.s4 1983009808
      %v2708 = vunpack.c.0.s8 %v2707
      %v2709 = vlaneseq
      %v2710 = vshrl.u32 %v2709, 7
      %v2711 = vsub.s32 %v2708, %v2710
      %v2712 = vrot.slane %v2704, %v2711
      %v2714 = vunpack.c.l.s4 1983009808
      %v2715 = vunpack.c.0.s8 %v2714
      %v2716 = vlaneseq
      %v2717 = vshrl.u32 %v2716, 7
      %v2718 = vsub.s32 %v2715, %v2717
      %v2719 = vrot.slane %v2705, %v2718
      %v2720 = vcombine.low %v2712, %v2719
      %v2721 = vcombine.low %v2627, %v2634
      %v2722 = vcombine.low %v2642, %v2650
      %v2724 = vunpack.c.l.s4 1983009808
      %v2725 = vunpack.c.0.s8 %v2724
      %v2726 = vlaneseq
      %v2727 = vshrl.u32 %v2726, 7
      %v2728 = vsub.s32 %v2725, %v2727
      %v2729 = vrot.slane %v2721, %v2728
      %v2731 = vunpack.c.l.s4 1983009808
      %v2732 = vunpack.c.0.s8 %v2731
      %v2733 = vlaneseq
      %v2734 = vshrl.u32 %v2733, 7
      %v2735 = vsub.s32 %v2732, %v2734
      %v2736 = vrot.slane %v2722, %v2735
      %v2737 = vcombine.low %v2729, %v2736
      %v2738 = vcombine.low %v2649, %v2651
      %v2739 = vcombine.low %v2658, %v2666
      %v2741 = vunpack.c.l.s4 1983009808
      %v2742 = vunpack.c.0.s8 %v2741
      %v2743 = vlaneseq
      %v2744 = vshrl.u32 %v2743, 7
      %v2745 = vsub.s32 %v2742, %v2744
      %v2746 = vrot.slane %v2738, %v2745
      %v2748 = vunpack.c.l.s4 1983009808
      %v2749 = vunpack.c.0.s8 %v2748
      %v2750 = vlaneseq
      %v2751 = vshrl.u32 %v2750, 7
      %v2752 = vsub.s32 %v2749, %v2751
      %v2753 = vrot.slane %v2739, %v2752
      %v2754 = vcombine.low %v2746, %v2753
      %v2755 = vcombine.low %v2674, %v2673
      %v2756 = vcombine.low %v2675, %v2682
      %v2758 = vunpack.c.l.s4 1983009808
      %v2759 = vunpack.c.0.s8 %v2758
      %v2760 = vlaneseq
      %v2761 = vshrl.u32 %v2760, 7
      %v2762 = vsub.s32 %v2759, %v2761
      %v2763 = vrot.slane %v2755, %v2762
      %v2765 = vunpack.c.l.s4 1983009808
      %v2766 = vunpack.c.0.s8 %v2765
      %v2767 = vlaneseq
      %v2768 = vshrl.u32 %v2767, 7
      %v2769 = vsub.s32 %v2766, %v2768
      %v2770 = vrot.slane %v2756, %v2769
      %v2771 = vcombine.low %v2763, %v2770
      %vm2772 = vcmask 80896
      %v2773 = vsel %vm2772, %v2703, 0
      %v2775 = vsel %vm2772, %v2720, 0
      %v2777 = vsel %vm2772, %v2737, 0
      %v2779 = vsel %vm2772, %v2754, 0
      %v2781 = vsel %vm2772, %v2771, 0
      %v2784 = vsel %vm556, %v198, 0
      %2786 = vmatprep.subr.mxu0 0.0
      %2787 = vmatpush1.msra.mxu0 0.0
      %2788 = vmatprep.subr.mxu0 0.0
      %2789 = vmatpush1.msra.mxu0 0.0
      %2790 = vmatprep.subr.mxu0 0.0
      %2791 = vmatpush1.msra.mxu0 0.0
      %2792 = vmatprep.subr.mxu0 0.0
      %2793 = vmatpush1.msra.mxu0 0.0
      %2794 = vmatprep.subr.mxu0 0.0
      %2795 = vmatpush1.msra.mxu0 0.0
      %2796 = vmatprep.subr.mxu0 0.0
      %2797 = vmatpush1.msra.mxu0 0.0
      %2798 = vmatprep.subr.mxu0 0.0
      %2799 = vmatpush1.msra.mxu0 0.0
      %2800 = vmatprep.subr.mxu0 0.0
      %2801 = vmatpush1.msra.mxu0 0.0
      %2802 = vmatprep.subr.mxu0 0.0
      %2803 = vmatpush1.msra.mxu0 0.0
      %2804 = vmatprep.subr.mxu0 0.0
      %2805 = vmatpush1.msra.mxu0 0.0
      %2806 = vmatprep.subr.mxu0 0.0
      %2807 = vmatpush1.msra.mxu0 0.0
      %2808 = vmatprep.subr.mxu0 0.0
      %2809 = vmatpush1.msra.mxu0 0.0
      %2810 = vmatprep.subr.mxu0 0.0
      %2811 = vmatpush1.msra.mxu0 0.0
      %2812 = vmatprep.subr.mxu0 0.0
      %2813 = vmatpush1.msra.mxu0 0.0
      %2814 = vmatprep.subr.mxu0 0.0
      %2815 = vmatpush1.msra.mxu0 %v2784
      %2816 = vmatprep.subr.mxu0 0.0
      %2817 = vmatpush1.msra.mxu0 %v197
      %2818 = vmatprep.subr.mxu0 0.0
      %2819 = vmatpush2.msra.mxu0 0.0
      %2820 = vmatprep.subr.mxu0 0.0
      %2821 = vmatpush2.msra.mxu0 0.0
      %2822 = vmatprep.subr.mxu0 0.0
      %2823 = vmatpush2.msra.mxu0 0.0
      %2824 = vmatprep.subr.mxu0 0.0
      %2825 = vmatpush2.msra.mxu0 0.0
      %2826 = vmatprep.subr.mxu0 0.0
      %2827 = vmatpush2.msra.mxu0 0.0
      %2828 = vmatprep.subr.mxu0 0.0
      %2829 = vmatpush2.msra.mxu0 0.0
      %2830 = vmatprep.subr.mxu0 0.0
      %2831 = vmatpush2.msra.mxu0 0.0
      %2832 = vmatprep.subr.mxu0 0.0
      %2833 = vmatpush2.msra.mxu0 0.0
      %2834 = vmatprep.subr.mxu0 0.0
      %2835 = vmatpush2.msra.mxu0 0.0
      %2836 = vmatprep.subr.mxu0 0.0
      %2837 = vmatpush2.msra.mxu0 0.0
      %2838 = vmatprep.subr.mxu0 0.0
      %2839 = vmatpush2.msra.mxu0 0.0
      %2840 = vmatprep.subr.mxu0 0.0
      %2841 = vmatpush2.msra.mxu0 0.0
      %2842 = vmatprep.subr.mxu0 0.0
      %2843 = vmatpush2.msra.mxu0 0.0
      %2844 = vmatprep.subr.mxu0 0.0
      %2845 = vmatpush2.msra.mxu0 0.0
      %2846 = vmatprep.subr.mxu0 0.0
      %2847 = vmatpush2.msra.mxu0 0.0
      %2848 = vmatprep.subr.mxu0 0.0
      %2849 = vmatpush2.msra.mxu0 0.0
      %2850 = vmatprep.mubr.f32.mxu0 0.0
      %2851 = vmatmul.mubr.f32.gmra.mxu0 %v2773
      %v2852 = vpop.f32.mrf.mxu0
      %v2853 = vadd.f32 %v2686, %v2852
      %v2854 = vpop.f32.mrf.mxu0
      %2855 = vmatprep.mubr.f32.mxu0 0.0
      %2856 = vmatmul.mubr.f32.gmra.mxu0 %v2775
      %v2857 = vpop.f32.mrf.mxu0
      %v2858 = vadd.f32 %v2686, %v2857
      %v2859 = vpop.f32.mrf.mxu0
      %2860 = vmatprep.mubr.f32.mxu0 0.0
      %2861 = vmatmul.mubr.f32.gmra.mxu0 %v2777
      %v2862 = vpop.f32.mrf.mxu0
      %v2863 = vadd.f32 %v2686, %v2862
      %v2864 = vpop.f32.mrf.mxu0
      %2865 = vmatprep.mubr.f32.mxu0 0.0
      %2866 = vmatmul.mubr.f32.gmra.mxu0 %v2779
      %v2867 = vpop.f32.mrf.mxu0
      %v2868 = vadd.f32 %v2686, %v2867
      %v2869 = vpop.f32.mrf.mxu0
      %2870 = vmatprep.mubr.f32.mxu0 0.0
      %2871 = vmatmul.mubr.f32.gmra.mxu0 %v2781
      %v2872 = vpop.f32.mrf.mxu0
      %v2873 = vadd.f32 %v2686, %v2872
      %v2874 = vpop.f32.mrf.mxu0
      %2875 = vdwg.mxu0
      %v2876 = vmax.f32 %v2853, 0.0
      %v2877 = vmax.f32 %v2858, 0.0
      %v2878 = vmax.f32 %v2863, 0.0
      %v2879 = vmax.f32 %v2868, 0.0
      %v2880 = vmax.f32 %v2873, 0.0
      %v2881 = vlaneseq
      %v2882 = vshrl.u32 %v2881, 7
      %v2883 = vsub.s32 0, %v2882
      %v2884 = vrot.slane %v203, %v2883
      %vm2885 = vcmask 64512
      %v2887 = vsel %vm2885, %v2876, 0
      %v2890 = vsel %vm2885, %v2877, 0
      %v2893 = vsel %vm2885, %v2878, 0
      %v2896 = vsel %vm2885, %v2879, 0
      %v2899 = vsel %vm2885, %v2880, 0
      %2901 = vmatprep.subr.mxu0 0.0
      %2902 = vmatpush1.msra.mxu0 0.0
      %2903 = vmatprep.subr.mxu0 0.0
      %2904 = vmatpush1.msra.mxu0 0.0
      %2905 = vmatprep.subr.mxu0 0.0
      %2906 = vmatpush1.msra.mxu0 0.0
      %2907 = vmatprep.subr.mxu0 0.0
      %2908 = vmatpush1.msra.mxu0 0.0
      %2909 = vmatprep.subr.mxu0 0.0
      %2910 = vmatpush1.msra.mxu0 0.0
      %2911 = vmatprep.subr.mxu0 0.0
      %2912 = vmatpush1.msra.mxu0 0.0
      %2913 = vmatprep.subr.mxu0 0.0
      %2914 = vmatpush1.msra.mxu0 0.0
      %2915 = vmatprep.subr.mxu0 0.0
      %2916 = vmatpush1.msra.mxu0 0.0
      %2917 = vmatprep.subr.mxu0 0.0
      %2918 = vmatpush1.msra.mxu0 0.0
      %2919 = vmatprep.subr.mxu0 0.0
      %2920 = vmatpush1.msra.mxu0 0.0
      %2921 = vmatprep.subr.mxu0 0.0
      %2922 = vmatpush1.msra.mxu0 0.0
      %2923 = vmatprep.subr.mxu0 0.0
      %2924 = vmatpush1.msra.mxu0 0.0
      %2925 = vmatprep.subr.mxu0 0.0
      %2926 = vmatpush1.msra.mxu0 0.0
      %2927 = vmatprep.subr.mxu0 0.0
      %2928 = vmatpush1.msra.mxu0 0.0
      %2929 = vmatprep.subr.mxu0 0.0
      %2930 = vmatpush1.msra.mxu0 0.0
      %2931 = vmatprep.subr.mxu0 0.0
      %2932 = vmatpush1.msra.mxu0 %v199
      %2933 = vmatprep.subr.mxu0 0.0
      %2934 = vmatpush2.msra.mxu0 0.0
      %2935 = vmatprep.subr.mxu0 0.0
      %2936 = vmatpush2.msra.mxu0 0.0
      %2937 = vmatprep.subr.mxu0 0.0
      %2938 = vmatpush2.msra.mxu0 0.0
      %2939 = vmatprep.subr.mxu0 0.0
      %2940 = vmatpush2.msra.mxu0 0.0
      %2941 = vmatprep.subr.mxu0 0.0
      %2942 = vmatpush2.msra.mxu0 0.0
      %2943 = vmatprep.subr.mxu0 0.0
      %2944 = vmatpush2.msra.mxu0 0.0
      %2945 = vmatprep.subr.mxu0 0.0
      %2946 = vmatpush2.msra.mxu0 0.0
      %2947 = vmatprep.subr.mxu0 0.0
      %2948 = vmatpush2.msra.mxu0 0.0
      %2949 = vmatprep.subr.mxu0 0.0
      %2950 = vmatpush2.msra.mxu0 0.0
      %2951 = vmatprep.subr.mxu0 0.0
      %2952 = vmatpush2.msra.mxu0 0.0
      %2953 = vmatprep.subr.mxu0 0.0
      %2954 = vmatpush2.msra.mxu0 0.0
      %2955 = vmatprep.subr.mxu0 0.0
      %2956 = vmatpush2.msra.mxu0 0.0
      %2957 = vmatprep.subr.mxu0 0.0
      %2958 = vmatpush2.msra.mxu0 0.0
      %2959 = vmatprep.subr.mxu0 0.0
      %2960 = vmatpush2.msra.mxu0 0.0
      %2961 = vmatprep.subr.mxu0 0.0
      %2962 = vmatpush2.msra.mxu0 0.0
      %2963 = vmatprep.subr.mxu0 0.0
      %2964 = vmatpush2.msra.mxu0 0.0
      %2965 = vmatprep.mubr.f32.mxu0 0.0
      %2966 = vmatmul.mubr.f32.gmra.mxu0 %v2887
      %v2967 = vpop.f32.mrf.mxu0
      %v2968 = vadd.f32 %v2884, %v2967
      %v2969 = vpop.f32.mrf.mxu0
      %2970 = vmatprep.mubr.f32.mxu0 0.0
      %2971 = vmatmul.mubr.f32.gmra.mxu0 %v2890
      %v2972 = vpop.f32.mrf.mxu0
      %v2973 = vadd.f32 %v2884, %v2972
      %v2974 = vpop.f32.mrf.mxu0
      %2975 = vmatprep.mubr.f32.mxu0 0.0
      %2976 = vmatmul.mubr.f32.gmra.mxu0 %v2893
      %v2977 = vpop.f32.mrf.mxu0
      %v2978 = vadd.f32 %v2884, %v2977
      %v2979 = vpop.f32.mrf.mxu0
      %2980 = vmatprep.mubr.f32.mxu0 0.0
      %2981 = vmatmul.mubr.f32.gmra.mxu0 %v2896
      %v2982 = vpop.f32.mrf.mxu0
      %v2983 = vadd.f32 %v2884, %v2982
      %v2984 = vpop.f32.mrf.mxu0
      %2985 = vmatprep.mubr.f32.mxu0 0.0
      %2986 = vmatmul.mubr.f32.gmra.mxu0 %v2899
      %v2987 = vpop.f32.mrf.mxu0
      %v2988 = vadd.f32 %v2884, %v2987
      %v2989 = vpop.f32.mrf.mxu0
      %2990 = vdwg.mxu0
      %v2996 = vcombine.high %v2968, %v2968
      %v2998 = vunpack.c.l.s4 1966171168
      %v2999 = vunpack.c.0.s8 %v2998
      %v3000 = vlaneseq
      %v3001 = vshrl.u32 %v3000, 7
      %v3002 = vsub.s32 %v2999, %v3001
      %v3003 = vrot.slane %v2968, %v3002
      %v3005 = vunpack.c.l.s4 1966171168
      %v3006 = vunpack.c.0.s8 %v3005
      %v3007 = vlaneseq
      %v3008 = vshrl.u32 %v3007, 7
      %v3009 = vsub.s32 %v3006, %v3008
      %v3010 = vrot.slane %v2996, %v3009
      %v3011 = vcombine.high %v3003, %v3003
      %v3012 = vcombine.high %v3010, %v3010
      %v3014 = vunpack.c.l.s4 1966171168
      %v3015 = vunpack.c.0.s8 %v3014
      %v3016 = vlaneseq
      %v3017 = vshrl.u32 %v3016, 7
      %v3018 = vsub.s32 %v3015, %v3017
      %v3019 = vrot.slane %v3003, %v3018
      %v3021 = vunpack.c.l.s4 1966171168
      %v3022 = vunpack.c.0.s8 %v3021
      %v3023 = vlaneseq
      %v3024 = vshrl.u32 %v3023, 7
      %v3025 = vsub.s32 %v3022, %v3024
      %v3026 = vrot.slane %v3010, %v3025
      %v3028 = vunpack.c.l.s4 1966171168
      %v3029 = vunpack.c.0.s8 %v3028
      %v3030 = vlaneseq
      %v3031 = vshrl.u32 %v3030, 7
      %v3032 = vsub.s32 %v3029, %v3031
      %v3033 = vrot.slane %v3011, %v3032
      %v3035 = vunpack.c.l.s4 1966171168
      %v3036 = vunpack.c.0.s8 %v3035
      %v3037 = vlaneseq
      %v3038 = vshrl.u32 %v3037, 7
      %v3039 = vsub.s32 %v3036, %v3038
      %v3040 = vrot.slane %v3012, %v3039
      %v3041 = vcombine.high %v3019, %v3019
      %v3042 = vcombine.high %v3026, %v3026
      %v3043 = vcombine.high %v3033, %v3033
      %v3044 = vcombine.high %v3040, %v3040
      %v3045 = vcombine.high %v2973, %v2973
      %v3047 = vunpack.c.l.s4 1966171168
      %v3048 = vunpack.c.0.s8 %v3047
      %v3049 = vlaneseq
      %v3050 = vshrl.u32 %v3049, 7
      %v3051 = vsub.s32 %v3048, %v3050
      %v3052 = vrot.slane %v2973, %v3051
      %v3054 = vunpack.c.l.s4 1966171168
      %v3055 = vunpack.c.0.s8 %v3054
      %v3056 = vlaneseq
      %v3057 = vshrl.u32 %v3056, 7
      %v3058 = vsub.s32 %v3055, %v3057
      %v3059 = vrot.slane %v3045, %v3058
      %v3060 = vcombine.high %v3052, %v3052
      %v3061 = vcombine.high %v3059, %v3059
      %v3063 = vunpack.c.l.s4 1966171168
      %v3064 = vunpack.c.0.s8 %v3063
      %v3065 = vlaneseq
      %v3066 = vshrl.u32 %v3065, 7
      %v3067 = vsub.s32 %v3064, %v3066
      %v3068 = vrot.slane %v3052, %v3067
      %v3070 = vunpack.c.l.s4 1966171168
      %v3071 = vunpack.c.0.s8 %v3070
      %v3072 = vlaneseq
      %v3073 = vshrl.u32 %v3072, 7
      %v3074 = vsub.s32 %v3071, %v3073
      %v3075 = vrot.slane %v3059, %v3074
      %v3077 = vunpack.c.l.s4 1966171168
      %v3078 = vunpack.c.0.s8 %v3077
      %v3079 = vlaneseq
      %v3080 = vshrl.u32 %v3079, 7
      %v3081 = vsub.s32 %v3078, %v3080
      %v3082 = vrot.slane %v3060, %v3081
      %v3084 = vunpack.c.l.s4 1966171168
      %v3085 = vunpack.c.0.s8 %v3084
      %v3086 = vlaneseq
      %v3087 = vshrl.u32 %v3086, 7
      %v3088 = vsub.s32 %v3085, %v3087
      %v3089 = vrot.slane %v3061, %v3088
      %v3090 = vcombine.high %v3068, %v3068
      %v3091 = vcombine.high %v3075, %v3075
      %v3092 = vcombine.high %v3082, %v3082
      %v3093 = vcombine.high %v3089, %v3089
      %v3094 = vcombine.high %v2978, %v2978
      %v3096 = vunpack.c.l.s4 1966171168
      %v3097 = vunpack.c.0.s8 %v3096
      %v3098 = vlaneseq
      %v3099 = vshrl.u32 %v3098, 7
      %v3100 = vsub.s32 %v3097, %v3099
      %v3101 = vrot.slane %v2978, %v3100
      %v3103 = vunpack.c.l.s4 1966171168
      %v3104 = vunpack.c.0.s8 %v3103
      %v3105 = vlaneseq
      %v3106 = vshrl.u32 %v3105, 7
      %v3107 = vsub.s32 %v3104, %v3106
      %v3108 = vrot.slane %v3094, %v3107
      %v3109 = vcombine.high %v3101, %v3101
      %v3110 = vcombine.high %v3108, %v3108
      %v3112 = vunpack.c.l.s4 1966171168
      %v3113 = vunpack.c.0.s8 %v3112
      %v3114 = vlaneseq
      %v3115 = vshrl.u32 %v3114, 7
      %v3116 = vsub.s32 %v3113, %v3115
      %v3117 = vrot.slane %v3101, %v3116
      %v3119 = vunpack.c.l.s4 1966171168
      %v3120 = vunpack.c.0.s8 %v3119
      %v3121 = vlaneseq
      %v3122 = vshrl.u32 %v3121, 7
      %v3123 = vsub.s32 %v3120, %v3122
      %v3124 = vrot.slane %v3108, %v3123
      %v3126 = vunpack.c.l.s4 1966171168
      %v3127 = vunpack.c.0.s8 %v3126
      %v3128 = vlaneseq
      %v3129 = vshrl.u32 %v3128, 7
      %v3130 = vsub.s32 %v3127, %v3129
      %v3131 = vrot.slane %v3109, %v3130
      %v3133 = vunpack.c.l.s4 1966171168
      %v3134 = vunpack.c.0.s8 %v3133
      %v3135 = vlaneseq
      %v3136 = vshrl.u32 %v3135, 7
      %v3137 = vsub.s32 %v3134, %v3136
      %v3138 = vrot.slane %v3110, %v3137
      %v3139 = vcombine.high %v3117, %v3117
      %v3140 = vcombine.high %v3124, %v3124
      %v3141 = vcombine.high %v3131, %v3131
      %v3142 = vcombine.high %v3138, %v3138
      %v3143 = vcombine.high %v2983, %v2983
      %v3145 = vunpack.c.l.s4 1966171168
      %v3146 = vunpack.c.0.s8 %v3145
      %v3147 = vlaneseq
      %v3148 = vshrl.u32 %v3147, 7
      %v3149 = vsub.s32 %v3146, %v3148
      %v3150 = vrot.slane %v2983, %v3149
      %v3152 = vunpack.c.l.s4 1966171168
      %v3153 = vunpack.c.0.s8 %v3152
      %v3154 = vlaneseq
      %v3155 = vshrl.u32 %v3154, 7
      %v3156 = vsub.s32 %v3153, %v3155
      %v3157 = vrot.slane %v3143, %v3156
      %v3158 = vcombine.high %v3150, %v3150
      %v3159 = vcombine.high %v3157, %v3157
      %v3161 = vunpack.c.l.s4 1966171168
      %v3162 = vunpack.c.0.s8 %v3161
      %v3163 = vlaneseq
      %v3164 = vshrl.u32 %v3163, 7
      %v3165 = vsub.s32 %v3162, %v3164
      %v3166 = vrot.slane %v3150, %v3165
      %v3168 = vunpack.c.l.s4 1966171168
      %v3169 = vunpack.c.0.s8 %v3168
      %v3170 = vlaneseq
      %v3171 = vshrl.u32 %v3170, 7
      %v3172 = vsub.s32 %v3169, %v3171
      %v3173 = vrot.slane %v3157, %v3172
      %v3175 = vunpack.c.l.s4 1966171168
      %v3176 = vunpack.c.0.s8 %v3175
      %v3177 = vlaneseq
      %v3178 = vshrl.u32 %v3177, 7
      %v3179 = vsub.s32 %v3176, %v3178
      %v3180 = vrot.slane %v3158, %v3179
      %v3182 = vunpack.c.l.s4 1966171168
      %v3183 = vunpack.c.0.s8 %v3182
      %v3184 = vlaneseq
      %v3185 = vshrl.u32 %v3184, 7
      %v3186 = vsub.s32 %v3183, %v3185
      %v3187 = vrot.slane %v3159, %v3186
      %v3188 = vcombine.high %v3166, %v3166
      %v3189 = vcombine.high %v3173, %v3173
      %v3190 = vcombine.high %v3180, %v3180
      %v3191 = vcombine.high %v3187, %v3187
      %v3192 = vcombine.high %v2988, %v2988
      %v3194 = vunpack.c.l.s4 1966171168
      %v3195 = vunpack.c.0.s8 %v3194
      %v3196 = vlaneseq
      %v3197 = vshrl.u32 %v3196, 7
      %v3198 = vsub.s32 %v3195, %v3197
      %v3199 = vrot.slane %v2988, %v3198
      %v3201 = vunpack.c.l.s4 1966171168
      %v3202 = vunpack.c.0.s8 %v3201
      %v3203 = vlaneseq
      %v3204 = vshrl.u32 %v3203, 7
      %v3205 = vsub.s32 %v3202, %v3204
      %v3206 = vrot.slane %v3192, %v3205
      %v3207 = vcombine.high %v3199, %v3199
      %v3208 = vcombine.high %v3206, %v3206
      %v3210 = vunpack.c.l.s4 1966171168
      %v3211 = vunpack.c.0.s8 %v3210
      %v3212 = vlaneseq
      %v3213 = vshrl.u32 %v3212, 7
      %v3214 = vsub.s32 %v3211, %v3213
      %v3215 = vrot.slane %v3199, %v3214
      %v3217 = vunpack.c.l.s4 1966171168
      %v3218 = vunpack.c.0.s8 %v3217
      %v3219 = vlaneseq
      %v3220 = vshrl.u32 %v3219, 7
      %v3221 = vsub.s32 %v3218, %v3220
      %v3222 = vrot.slane %v3206, %v3221
      %v3224 = vunpack.c.l.s4 1966171168
      %v3225 = vunpack.c.0.s8 %v3224
      %v3226 = vlaneseq
      %v3227 = vshrl.u32 %v3226, 7
      %v3228 = vsub.s32 %v3225, %v3227
      %v3229 = vrot.slane %v3207, %v3228
      %v3231 = vunpack.c.l.s4 1966171168
      %v3232 = vunpack.c.0.s8 %v3231
      %v3233 = vlaneseq
      %v3234 = vshrl.u32 %v3233, 7
      %v3235 = vsub.s32 %v3232, %v3234
      %v3236 = vrot.slane %v3208, %v3235
      %v3237 = vcombine.high %v3215, %v3215
      %v3238 = vcombine.high %v3222, %v3222
      %v3239 = vcombine.high %v3229, %v3229
      %v3240 = vcombine.high %v3236, %v3236
      %v3241 = vlaneseq
      %v3242 = vshrl.u32 %v3241, 7
      %v3243 = vsub.s32 0, %v3242
      %v3244 = vrot.slane %v3019, %v3243
      %v3245 = vlaneseq
      %v3246 = vshrl.u32 %v3245, 7
      %v3247 = vsub.s32 0, %v3246
      %v3248 = vrot.slane %v3033, %v3247
      %v3249 = vlaneseq
      %v3250 = vshrl.u32 %v3249, 7
      %v3251 = vsub.s32 0, %v3250
      %v3252 = vrot.slane %v3041, %v3251
      %v3253 = vlaneseq
      %v3254 = vshrl.u32 %v3253, 7
      %v3255 = vsub.s32 0, %v3254
      %v3256 = vrot.slane %v3043, %v3255
      %v3257 = vlaneseq
      %v3258 = vshrl.u32 %v3257, 7
      %v3259 = vsub.s32 0, %v3258
      %v3260 = vrot.slane %v3026, %v3259
      %v3261 = vlaneseq
      %v3262 = vshrl.u32 %v3261, 7
      %v3263 = vsub.s32 0, %v3262
      %v3264 = vrot.slane %v3040, %v3263
      %v3265 = vlaneseq
      %v3266 = vshrl.u32 %v3265, 7
      %v3267 = vsub.s32 0, %v3266
      %v3268 = vrot.slane %v3042, %v3267
      %v3269 = vlaneseq
      %v3270 = vshrl.u32 %v3269, 7
      %v3271 = vsub.s32 0, %v3270
      %v3272 = vrot.slane %v3044, %v3271
      %v3273 = vlaneseq
      %v3274 = vshrl.u32 %v3273, 7
      %v3275 = vsub.s32 0, %v3274
      %v3276 = vrot.slane %v3068, %v3275
      %v3277 = vlaneseq
      %v3278 = vshrl.u32 %v3277, 7
      %v3279 = vsub.s32 0, %v3278
      %v3280 = vrot.slane %v3082, %v3279
      %v3281 = vlaneseq
      %v3282 = vshrl.u32 %v3281, 7
      %v3283 = vsub.s32 0, %v3282
      %v3284 = vrot.slane %v3090, %v3283
      %v3285 = vlaneseq
      %v3286 = vshrl.u32 %v3285, 7
      %v3287 = vsub.s32 0, %v3286
      %v3288 = vrot.slane %v3092, %v3287
      %v3289 = vlaneseq
      %v3290 = vshrl.u32 %v3289, 7
      %v3291 = vsub.s32 0, %v3290
      %v3292 = vrot.slane %v3075, %v3291
      %v3293 = vlaneseq
      %v3294 = vshrl.u32 %v3293, 7
      %v3295 = vsub.s32 0, %v3294
      %v3296 = vrot.slane %v3089, %v3295
      %v3297 = vlaneseq
      %v3298 = vshrl.u32 %v3297, 7
      %v3299 = vsub.s32 0, %v3298
      %v3300 = vrot.slane %v3091, %v3299
      %v3301 = vlaneseq
      %v3302 = vshrl.u32 %v3301, 7
      %v3303 = vsub.s32 0, %v3302
      %v3304 = vrot.slane %v3093, %v3303
      %v3305 = vlaneseq
      %v3306 = vshrl.u32 %v3305, 7
      %v3307 = vsub.s32 0, %v3306
      %v3308 = vrot.slane %v3117, %v3307
      %v3309 = vlaneseq
      %v3310 = vshrl.u32 %v3309, 7
      %v3311 = vsub.s32 0, %v3310
      %v3312 = vrot.slane %v3131, %v3311
      %v3313 = vlaneseq
      %v3314 = vshrl.u32 %v3313, 7
      %v3315 = vsub.s32 0, %v3314
      %v3316 = vrot.slane %v3139, %v3315
      %v3317 = vlaneseq
      %v3318 = vshrl.u32 %v3317, 7
      %v3319 = vsub.s32 0, %v3318
      %v3320 = vrot.slane %v3141, %v3319
      %v3321 = vlaneseq
      %v3322 = vshrl.u32 %v3321, 7
      %v3323 = vsub.s32 0, %v3322
      %v3324 = vrot.slane %v3124, %v3323
      %v3325 = vlaneseq
      %v3326 = vshrl.u32 %v3325, 7
      %v3327 = vsub.s32 0, %v3326
      %v3328 = vrot.slane %v3138, %v3327
      %v3329 = vlaneseq
      %v3330 = vshrl.u32 %v3329, 7
      %v3331 = vsub.s32 0, %v3330
      %v3332 = vrot.slane %v3140, %v3331
      %v3333 = vlaneseq
      %v3334 = vshrl.u32 %v3333, 7
      %v3335 = vsub.s32 0, %v3334
      %v3336 = vrot.slane %v3142, %v3335
      %v3337 = vlaneseq
      %v3338 = vshrl.u32 %v3337, 7
      %v3339 = vsub.s32 0, %v3338
      %v3340 = vrot.slane %v3166, %v3339
      %v3341 = vlaneseq
      %v3342 = vshrl.u32 %v3341, 7
      %v3343 = vsub.s32 0, %v3342
      %v3344 = vrot.slane %v3180, %v3343
      %v3345 = vlaneseq
      %v3346 = vshrl.u32 %v3345, 7
      %v3347 = vsub.s32 0, %v3346
      %v3348 = vrot.slane %v3188, %v3347
      %v3349 = vlaneseq
      %v3350 = vshrl.u32 %v3349, 7
      %v3351 = vsub.s32 0, %v3350
      %v3352 = vrot.slane %v3190, %v3351
      %v3353 = vlaneseq
      %v3354 = vshrl.u32 %v3353, 7
      %v3355 = vsub.s32 0, %v3354
      %v3356 = vrot.slane %v3173, %v3355
      %v3357 = vlaneseq
      %v3358 = vshrl.u32 %v3357, 7
      %v3359 = vsub.s32 0, %v3358
      %v3360 = vrot.slane %v3187, %v3359
      %v3361 = vlaneseq
      %v3362 = vshrl.u32 %v3361, 7
      %v3363 = vsub.s32 0, %v3362
      %v3364 = vrot.slane %v3189, %v3363
      %v3365 = vlaneseq
      %v3366 = vshrl.u32 %v3365, 7
      %v3367 = vsub.s32 0, %v3366
      %v3368 = vrot.slane %v3191, %v3367
      %v3369 = vlaneseq
      %v3370 = vshrl.u32 %v3369, 7
      %v3371 = vsub.s32 0, %v3370
      %v3372 = vrot.slane %v3215, %v3371
      %v3373 = vlaneseq
      %v3374 = vshrl.u32 %v3373, 7
      %v3375 = vsub.s32 0, %v3374
      %v3376 = vrot.slane %v3229, %v3375
      %v3377 = vlaneseq
      %v3378 = vshrl.u32 %v3377, 7
      %v3379 = vsub.s32 0, %v3378
      %v3380 = vrot.slane %v3237, %v3379
      %v3381 = vlaneseq
      %v3382 = vshrl.u32 %v3381, 7
      %v3383 = vsub.s32 0, %v3382
      %v3384 = vrot.slane %v3239, %v3383
      %v3385 = vlaneseq
      %v3386 = vshrl.u32 %v3385, 7
      %v3387 = vsub.s32 0, %v3386
      %v3388 = vrot.slane %v3222, %v3387
      %v3389 = vlaneseq
      %v3390 = vshrl.u32 %v3389, 7
      %v3391 = vsub.s32 0, %v3390
      %v3392 = vrot.slane %v3236, %v3391
      %v3393 = vlaneseq
      %v3394 = vshrl.u32 %v3393, 7
      %v3395 = vsub.s32 0, %v3394
      %v3396 = vrot.slane %v3238, %v3395
      %v3397 = vlaneseq
      %v3398 = vshrl.u32 %v3397, 7
      %v3399 = vsub.s32 0, %v3398
      %v3400 = vrot.slane %v3240, %v3399
      %v3401 = vcombine.high %v3244, %v3244
      %v3403 = vunpack.c.l.s4 1983009808
      %v3404 = vunpack.c.0.s8 %v3403
      %v3405 = vlaneseq
      %v3406 = vshrl.u32 %v3405, 7
      %v3407 = vsub.s32 %v3404, %v3406
      %v3408 = vrot.slane %v3244, %v3407
      %v3410 = vunpack.c.l.s4 1983009808
      %v3411 = vunpack.c.0.s8 %v3410
      %v3412 = vlaneseq
      %v3413 = vshrl.u32 %v3412, 7
      %v3414 = vsub.s32 %v3411, %v3413
      %v3415 = vrot.slane %v3401, %v3414
      %v3416 = vcombine.high %v3408, %v3408
      %v3417 = vcombine.high %v3248, %v3248
      %v3419 = vunpack.c.l.s4 1983009808
      %v3420 = vunpack.c.0.s8 %v3419
      %v3421 = vlaneseq
      %v3422 = vshrl.u32 %v3421, 7
      %v3423 = vsub.s32 %v3420, %v3422
      %v3424 = vrot.slane %v3248, %v3423
      %v3426 = vunpack.c.l.s4 1983009808
      %v3427 = vunpack.c.0.s8 %v3426
      %v3428 = vlaneseq
      %v3429 = vshrl.u32 %v3428, 7
      %v3430 = vsub.s32 %v3427, %v3429
      %v3431 = vrot.slane %v3417, %v3430
      %v3432 = vcombine.high %v3424, %v3424
      %v3433 = vcombine.high %v3252, %v3252
      %v3435 = vunpack.c.l.s4 1983009808
      %v3436 = vunpack.c.0.s8 %v3435
      %v3437 = vlaneseq
      %v3438 = vshrl.u32 %v3437, 7
      %v3439 = vsub.s32 %v3436, %v3438
      %v3440 = vrot.slane %v3252, %v3439
      %v3442 = vunpack.c.l.s4 1983009808
      %v3443 = vunpack.c.0.s8 %v3442
      %v3444 = vlaneseq
      %v3445 = vshrl.u32 %v3444, 7
      %v3446 = vsub.s32 %v3443, %v3445
      %v3447 = vrot.slane %v3433, %v3446
      %v3448 = vcombine.high %v3440, %v3440
      %v3449 = vcombine.high %v3256, %v3256
      %v3451 = vunpack.c.l.s4 1983009808
      %v3452 = vunpack.c.0.s8 %v3451
      %v3453 = vlaneseq
      %v3454 = vshrl.u32 %v3453, 7
      %v3455 = vsub.s32 %v3452, %v3454
      %v3456 = vrot.slane %v3256, %v3455
      %v3458 = vunpack.c.l.s4 1983009808
      %v3459 = vunpack.c.0.s8 %v3458
      %v3460 = vlaneseq
      %v3461 = vshrl.u32 %v3460, 7
      %v3462 = vsub.s32 %v3459, %v3461
      %v3463 = vrot.slane %v3449, %v3462
      %v3464 = vcombine.high %v3456, %v3456
      %v3465 = vcombine.high %v3260, %v3260
      %v3467 = vunpack.c.l.s4 1983009808
      %v3468 = vunpack.c.0.s8 %v3467
      %v3469 = vlaneseq
      %v3470 = vshrl.u32 %v3469, 7
      %v3471 = vsub.s32 %v3468, %v3470
      %v3472 = vrot.slane %v3260, %v3471
      %v3474 = vunpack.c.l.s4 1983009808
      %v3475 = vunpack.c.0.s8 %v3474
      %v3476 = vlaneseq
      %v3477 = vshrl.u32 %v3476, 7
      %v3478 = vsub.s32 %v3475, %v3477
      %v3479 = vrot.slane %v3465, %v3478
      %v3480 = vcombine.high %v3472, %v3472
      %v3481 = vcombine.high %v3264, %v3264
      %v3483 = vunpack.c.l.s4 1983009808
      %v3484 = vunpack.c.0.s8 %v3483
      %v3485 = vlaneseq
      %v3486 = vshrl.u32 %v3485, 7
      %v3487 = vsub.s32 %v3484, %v3486
      %v3488 = vrot.slane %v3264, %v3487
      %v3490 = vunpack.c.l.s4 1983009808
      %v3491 = vunpack.c.0.s8 %v3490
      %v3492 = vlaneseq
      %v3493 = vshrl.u32 %v3492, 7
      %v3494 = vsub.s32 %v3491, %v3493
      %v3495 = vrot.slane %v3481, %v3494
      %v3496 = vcombine.high %v3488, %v3488
      %v3497 = vcombine.high %v3268, %v3268
      %v3499 = vunpack.c.l.s4 1983009808
      %v3500 = vunpack.c.0.s8 %v3499
      %v3501 = vlaneseq
      %v3502 = vshrl.u32 %v3501, 7
      %v3503 = vsub.s32 %v3500, %v3502
      %v3504 = vrot.slane %v3268, %v3503
      %v3506 = vunpack.c.l.s4 1983009808
      %v3507 = vunpack.c.0.s8 %v3506
      %v3508 = vlaneseq
      %v3509 = vshrl.u32 %v3508, 7
      %v3510 = vsub.s32 %v3507, %v3509
      %v3511 = vrot.slane %v3497, %v3510
      %v3512 = vcombine.high %v3504, %v3504
      %v3513 = vcombine.high %v3272, %v3272
      %v3515 = vunpack.c.l.s4 1983009808
      %v3516 = vunpack.c.0.s8 %v3515
      %v3517 = vlaneseq
      %v3518 = vshrl.u32 %v3517, 7
      %v3519 = vsub.s32 %v3516, %v3518
      %v3520 = vrot.slane %v3272, %v3519
      %v3522 = vunpack.c.l.s4 1983009808
      %v3523 = vunpack.c.0.s8 %v3522
      %v3524 = vlaneseq
      %v3525 = vshrl.u32 %v3524, 7
      %v3526 = vsub.s32 %v3523, %v3525
      %v3527 = vrot.slane %v3513, %v3526
      %v3528 = vcombine.high %v3520, %v3520
      %v3529 = vcombine.high %v3276, %v3276
      %v3531 = vunpack.c.l.s4 1983009808
      %v3532 = vunpack.c.0.s8 %v3531
      %v3533 = vlaneseq
      %v3534 = vshrl.u32 %v3533, 7
      %v3535 = vsub.s32 %v3532, %v3534
      %v3536 = vrot.slane %v3276, %v3535
      %v3538 = vunpack.c.l.s4 1983009808
      %v3539 = vunpack.c.0.s8 %v3538
      %v3540 = vlaneseq
      %v3541 = vshrl.u32 %v3540, 7
      %v3542 = vsub.s32 %v3539, %v3541
      %v3543 = vrot.slane %v3529, %v3542
      %v3544 = vcombine.high %v3536, %v3536
      %v3545 = vcombine.high %v3280, %v3280
      %v3547 = vunpack.c.l.s4 1983009808
      %v3548 = vunpack.c.0.s8 %v3547
      %v3549 = vlaneseq
      %v3550 = vshrl.u32 %v3549, 7
      %v3551 = vsub.s32 %v3548, %v3550
      %v3552 = vrot.slane %v3280, %v3551
      %v3554 = vunpack.c.l.s4 1983009808
      %v3555 = vunpack.c.0.s8 %v3554
      %v3556 = vlaneseq
      %v3557 = vshrl.u32 %v3556, 7
      %v3558 = vsub.s32 %v3555, %v3557
      %v3559 = vrot.slane %v3545, %v3558
      %v3560 = vcombine.high %v3552, %v3552
      %v3561 = vcombine.high %v3284, %v3284
      %v3563 = vunpack.c.l.s4 1983009808
      %v3564 = vunpack.c.0.s8 %v3563
      %v3565 = vlaneseq
      %v3566 = vshrl.u32 %v3565, 7
      %v3567 = vsub.s32 %v3564, %v3566
      %v3568 = vrot.slane %v3284, %v3567
      %v3570 = vunpack.c.l.s4 1983009808
      %v3571 = vunpack.c.0.s8 %v3570
      %v3572 = vlaneseq
      %v3573 = vshrl.u32 %v3572, 7
      %v3574 = vsub.s32 %v3571, %v3573
      %v3575 = vrot.slane %v3561, %v3574
      %v3576 = vcombine.high %v3568, %v3568
      %v3577 = vcombine.high %v3288, %v3288
      %v3579 = vunpack.c.l.s4 1983009808
      %v3580 = vunpack.c.0.s8 %v3579
      %v3581 = vlaneseq
      %v3582 = vshrl.u32 %v3581, 7
      %v3583 = vsub.s32 %v3580, %v3582
      %v3584 = vrot.slane %v3288, %v3583
      %v3586 = vunpack.c.l.s4 1983009808
      %v3587 = vunpack.c.0.s8 %v3586
      %v3588 = vlaneseq
      %v3589 = vshrl.u32 %v3588, 7
      %v3590 = vsub.s32 %v3587, %v3589
      %v3591 = vrot.slane %v3577, %v3590
      %v3592 = vcombine.high %v3584, %v3584
      %v3593 = vcombine.high %v3292, %v3292
      %v3595 = vunpack.c.l.s4 1983009808
      %v3596 = vunpack.c.0.s8 %v3595
      %v3597 = vlaneseq
      %v3598 = vshrl.u32 %v3597, 7
      %v3599 = vsub.s32 %v3596, %v3598
      %v3600 = vrot.slane %v3292, %v3599
      %v3602 = vunpack.c.l.s4 1983009808
      %v3603 = vunpack.c.0.s8 %v3602
      %v3604 = vlaneseq
      %v3605 = vshrl.u32 %v3604, 7
      %v3606 = vsub.s32 %v3603, %v3605
      %v3607 = vrot.slane %v3593, %v3606
      %v3608 = vcombine.high %v3600, %v3600
      %v3609 = vcombine.high %v3296, %v3296
      %v3611 = vunpack.c.l.s4 1983009808
      %v3612 = vunpack.c.0.s8 %v3611
      %v3613 = vlaneseq
      %v3614 = vshrl.u32 %v3613, 7
      %v3615 = vsub.s32 %v3612, %v3614
      %v3616 = vrot.slane %v3296, %v3615
      %v3618 = vunpack.c.l.s4 1983009808
      %v3619 = vunpack.c.0.s8 %v3618
      %v3620 = vlaneseq
      %v3621 = vshrl.u32 %v3620, 7
      %v3622 = vsub.s32 %v3619, %v3621
      %v3623 = vrot.slane %v3609, %v3622
      %v3624 = vcombine.high %v3616, %v3616
      %v3625 = vcombine.high %v3300, %v3300
      %v3627 = vunpack.c.l.s4 1983009808
      %v3628 = vunpack.c.0.s8 %v3627
      %v3629 = vlaneseq
      %v3630 = vshrl.u32 %v3629, 7
      %v3631 = vsub.s32 %v3628, %v3630
      %v3632 = vrot.slane %v3300, %v3631
      %v3634 = vunpack.c.l.s4 1983009808
      %v3635 = vunpack.c.0.s8 %v3634
      %v3636 = vlaneseq
      %v3637 = vshrl.u32 %v3636, 7
      %v3638 = vsub.s32 %v3635, %v3637
      %v3639 = vrot.slane %v3625, %v3638
      %v3640 = vcombine.high %v3632, %v3632
      %v3641 = vcombine.high %v3304, %v3304
      %v3643 = vunpack.c.l.s4 1983009808
      %v3644 = vunpack.c.0.s8 %v3643
      %v3645 = vlaneseq
      %v3646 = vshrl.u32 %v3645, 7
      %v3647 = vsub.s32 %v3644, %v3646
      %v3648 = vrot.slane %v3304, %v3647
      %v3650 = vunpack.c.l.s4 1983009808
      %v3651 = vunpack.c.0.s8 %v3650
      %v3652 = vlaneseq
      %v3653 = vshrl.u32 %v3652, 7
      %v3654 = vsub.s32 %v3651, %v3653
      %v3655 = vrot.slane %v3641, %v3654
      %v3656 = vcombine.high %v3648, %v3648
      %v3657 = vcombine.high %v3308, %v3308
      %v3659 = vunpack.c.l.s4 1983009808
      %v3660 = vunpack.c.0.s8 %v3659
      %v3661 = vlaneseq
      %v3662 = vshrl.u32 %v3661, 7
      %v3663 = vsub.s32 %v3660, %v3662
      %v3664 = vrot.slane %v3308, %v3663
      %v3666 = vunpack.c.l.s4 1983009808
      %v3667 = vunpack.c.0.s8 %v3666
      %v3668 = vlaneseq
      %v3669 = vshrl.u32 %v3668, 7
      %v3670 = vsub.s32 %v3667, %v3669
      %v3671 = vrot.slane %v3657, %v3670
      %v3672 = vcombine.high %v3664, %v3664
      %v3673 = vcombine.high %v3312, %v3312
      %v3675 = vunpack.c.l.s4 1983009808
      %v3676 = vunpack.c.0.s8 %v3675
      %v3677 = vlaneseq
      %v3678 = vshrl.u32 %v3677, 7
      %v3679 = vsub.s32 %v3676, %v3678
      %v3680 = vrot.slane %v3312, %v3679
      %v3682 = vunpack.c.l.s4 1983009808
      %v3683 = vunpack.c.0.s8 %v3682
      %v3684 = vlaneseq
      %v3685 = vshrl.u32 %v3684, 7
      %v3686 = vsub.s32 %v3683, %v3685
      %v3687 = vrot.slane %v3673, %v3686
      %v3688 = vcombine.high %v3680, %v3680
      %v3689 = vcombine.high %v3316, %v3316
      %v3691 = vunpack.c.l.s4 1983009808
      %v3692 = vunpack.c.0.s8 %v3691
      %v3693 = vlaneseq
      %v3694 = vshrl.u32 %v3693, 7
      %v3695 = vsub.s32 %v3692, %v3694
      %v3696 = vrot.slane %v3316, %v3695
      %v3698 = vunpack.c.l.s4 1983009808
      %v3699 = vunpack.c.0.s8 %v3698
      %v3700 = vlaneseq
      %v3701 = vshrl.u32 %v3700, 7
      %v3702 = vsub.s32 %v3699, %v3701
      %v3703 = vrot.slane %v3689, %v3702
      %v3704 = vcombine.high %v3696, %v3696
      %v3705 = vcombine.high %v3320, %v3320
      %v3707 = vunpack.c.l.s4 1983009808
      %v3708 = vunpack.c.0.s8 %v3707
      %v3709 = vlaneseq
      %v3710 = vshrl.u32 %v3709, 7
      %v3711 = vsub.s32 %v3708, %v3710
      %v3712 = vrot.slane %v3320, %v3711
      %v3714 = vunpack.c.l.s4 1983009808
      %v3715 = vunpack.c.0.s8 %v3714
      %v3716 = vlaneseq
      %v3717 = vshrl.u32 %v3716, 7
      %v3718 = vsub.s32 %v3715, %v3717
      %v3719 = vrot.slane %v3705, %v3718
      %v3720 = vcombine.high %v3712, %v3712
      %v3721 = vcombine.high %v3324, %v3324
      %v3723 = vunpack.c.l.s4 1983009808
      %v3724 = vunpack.c.0.s8 %v3723
      %v3725 = vlaneseq
      %v3726 = vshrl.u32 %v3725, 7
      %v3727 = vsub.s32 %v3724, %v3726
      %v3728 = vrot.slane %v3324, %v3727
      %v3730 = vunpack.c.l.s4 1983009808
      %v3731 = vunpack.c.0.s8 %v3730
      %v3732 = vlaneseq
      %v3733 = vshrl.u32 %v3732, 7
      %v3734 = vsub.s32 %v3731, %v3733
      %v3735 = vrot.slane %v3721, %v3734
      %v3736 = vcombine.high %v3728, %v3728
      %v3737 = vcombine.high %v3328, %v3328
      %v3739 = vunpack.c.l.s4 1983009808
      %v3740 = vunpack.c.0.s8 %v3739
      %v3741 = vlaneseq
      %v3742 = vshrl.u32 %v3741, 7
      %v3743 = vsub.s32 %v3740, %v3742
      %v3744 = vrot.slane %v3328, %v3743
      %v3746 = vunpack.c.l.s4 1983009808
      %v3747 = vunpack.c.0.s8 %v3746
      %v3748 = vlaneseq
      %v3749 = vshrl.u32 %v3748, 7
      %v3750 = vsub.s32 %v3747, %v3749
      %v3751 = vrot.slane %v3737, %v3750
      %v3752 = vcombine.high %v3744, %v3744
      %v3753 = vcombine.high %v3332, %v3332
      %v3755 = vunpack.c.l.s4 1983009808
      %v3756 = vunpack.c.0.s8 %v3755
      %v3757 = vlaneseq
      %v3758 = vshrl.u32 %v3757, 7
      %v3759 = vsub.s32 %v3756, %v3758
      %v3760 = vrot.slane %v3332, %v3759
      %v3762 = vunpack.c.l.s4 1983009808
      %v3763 = vunpack.c.0.s8 %v3762
      %v3764 = vlaneseq
      %v3765 = vshrl.u32 %v3764, 7
      %v3766 = vsub.s32 %v3763, %v3765
      %v3767 = vrot.slane %v3753, %v3766
      %v3768 = vcombine.high %v3760, %v3760
      %v3769 = vcombine.high %v3336, %v3336
      %v3771 = vunpack.c.l.s4 1983009808
      %v3772 = vunpack.c.0.s8 %v3771
      %v3773 = vlaneseq
      %v3774 = vshrl.u32 %v3773, 7
      %v3775 = vsub.s32 %v3772, %v3774
      %v3776 = vrot.slane %v3336, %v3775
      %v3778 = vunpack.c.l.s4 1983009808
      %v3779 = vunpack.c.0.s8 %v3778
      %v3780 = vlaneseq
      %v3781 = vshrl.u32 %v3780, 7
      %v3782 = vsub.s32 %v3779, %v3781
      %v3783 = vrot.slane %v3769, %v3782
      %v3784 = vcombine.high %v3776, %v3776
      %v3785 = vcombine.high %v3340, %v3340
      %v3787 = vunpack.c.l.s4 1983009808
      %v3788 = vunpack.c.0.s8 %v3787
      %v3789 = vlaneseq
      %v3790 = vshrl.u32 %v3789, 7
      %v3791 = vsub.s32 %v3788, %v3790
      %v3792 = vrot.slane %v3340, %v3791
      %v3794 = vunpack.c.l.s4 1983009808
      %v3795 = vunpack.c.0.s8 %v3794
      %v3796 = vlaneseq
      %v3797 = vshrl.u32 %v3796, 7
      %v3798 = vsub.s32 %v3795, %v3797
      %v3799 = vrot.slane %v3785, %v3798
      %v3800 = vcombine.high %v3792, %v3792
      %v3801 = vcombine.high %v3344, %v3344
      %v3803 = vunpack.c.l.s4 1983009808
      %v3804 = vunpack.c.0.s8 %v3803
      %v3805 = vlaneseq
      %v3806 = vshrl.u32 %v3805, 7
      %v3807 = vsub.s32 %v3804, %v3806
      %v3808 = vrot.slane %v3344, %v3807
      %v3810 = vunpack.c.l.s4 1983009808
      %v3811 = vunpack.c.0.s8 %v3810
      %v3812 = vlaneseq
      %v3813 = vshrl.u32 %v3812, 7
      %v3814 = vsub.s32 %v3811, %v3813
      %v3815 = vrot.slane %v3801, %v3814
      %v3816 = vcombine.high %v3808, %v3808
      %v3817 = vcombine.high %v3348, %v3348
      %v3819 = vunpack.c.l.s4 1983009808
      %v3820 = vunpack.c.0.s8 %v3819
      %v3821 = vlaneseq
      %v3822 = vshrl.u32 %v3821, 7
      %v3823 = vsub.s32 %v3820, %v3822
      %v3824 = vrot.slane %v3348, %v3823
      %v3826 = vunpack.c.l.s4 1983009808
      %v3827 = vunpack.c.0.s8 %v3826
      %v3828 = vlaneseq
      %v3829 = vshrl.u32 %v3828, 7
      %v3830 = vsub.s32 %v3827, %v3829
      %v3831 = vrot.slane %v3817, %v3830
      %v3832 = vcombine.high %v3824, %v3824
      %v3833 = vcombine.high %v3352, %v3352
      %v3835 = vunpack.c.l.s4 1983009808
      %v3836 = vunpack.c.0.s8 %v3835
      %v3837 = vlaneseq
      %v3838 = vshrl.u32 %v3837, 7
      %v3839 = vsub.s32 %v3836, %v3838
      %v3840 = vrot.slane %v3352, %v3839
      %v3842 = vunpack.c.l.s4 1983009808
      %v3843 = vunpack.c.0.s8 %v3842
      %v3844 = vlaneseq
      %v3845 = vshrl.u32 %v3844, 7
      %v3846 = vsub.s32 %v3843, %v3845
      %v3847 = vrot.slane %v3833, %v3846
      %v3848 = vcombine.high %v3840, %v3840
      %v3849 = vcombine.high %v3356, %v3356
      %v3851 = vunpack.c.l.s4 1983009808
      %v3852 = vunpack.c.0.s8 %v3851
      %v3853 = vlaneseq
      %v3854 = vshrl.u32 %v3853, 7
      %v3855 = vsub.s32 %v3852, %v3854
      %v3856 = vrot.slane %v3356, %v3855
      %v3858 = vunpack.c.l.s4 1983009808
      %v3859 = vunpack.c.0.s8 %v3858
      %v3860 = vlaneseq
      %v3861 = vshrl.u32 %v3860, 7
      %v3862 = vsub.s32 %v3859, %v3861
      %v3863 = vrot.slane %v3849, %v3862
      %v3864 = vcombine.high %v3856, %v3856
      %v3865 = vcombine.high %v3360, %v3360
      %v3867 = vunpack.c.l.s4 1983009808
      %v3868 = vunpack.c.0.s8 %v3867
      %v3869 = vlaneseq
      %v3870 = vshrl.u32 %v3869, 7
      %v3871 = vsub.s32 %v3868, %v3870
      %v3872 = vrot.slane %v3360, %v3871
      %v3874 = vunpack.c.l.s4 1983009808
      %v3875 = vunpack.c.0.s8 %v3874
      %v3876 = vlaneseq
      %v3877 = vshrl.u32 %v3876, 7
      %v3878 = vsub.s32 %v3875, %v3877
      %v3879 = vrot.slane %v3865, %v3878
      %v3880 = vcombine.high %v3872, %v3872
      %v3881 = vcombine.high %v3364, %v3364
      %v3883 = vunpack.c.l.s4 1983009808
      %v3884 = vunpack.c.0.s8 %v3883
      %v3885 = vlaneseq
      %v3886 = vshrl.u32 %v3885, 7
      %v3887 = vsub.s32 %v3884, %v3886
      %v3888 = vrot.slane %v3364, %v3887
      %v3890 = vunpack.c.l.s4 1983009808
      %v3891 = vunpack.c.0.s8 %v3890
      %v3892 = vlaneseq
      %v3893 = vshrl.u32 %v3892, 7
      %v3894 = vsub.s32 %v3891, %v3893
      %v3895 = vrot.slane %v3881, %v3894
      %v3896 = vcombine.high %v3888, %v3888
      %v3897 = vcombine.high %v3368, %v3368
      %v3899 = vunpack.c.l.s4 1983009808
      %v3900 = vunpack.c.0.s8 %v3899
      %v3901 = vlaneseq
      %v3902 = vshrl.u32 %v3901, 7
      %v3903 = vsub.s32 %v3900, %v3902
      %v3904 = vrot.slane %v3368, %v3903
      %v3906 = vunpack.c.l.s4 1983009808
      %v3907 = vunpack.c.0.s8 %v3906
      %v3908 = vlaneseq
      %v3909 = vshrl.u32 %v3908, 7
      %v3910 = vsub.s32 %v3907, %v3909
      %v3911 = vrot.slane %v3897, %v3910
      %v3912 = vcombine.high %v3904, %v3904
      %v3913 = vcombine.high %v3372, %v3372
      %v3915 = vunpack.c.l.s4 1983009808
      %v3916 = vunpack.c.0.s8 %v3915
      %v3917 = vlaneseq
      %v3918 = vshrl.u32 %v3917, 7
      %v3919 = vsub.s32 %v3916, %v3918
      %v3920 = vrot.slane %v3372, %v3919
      %v3922 = vunpack.c.l.s4 1983009808
      %v3923 = vunpack.c.0.s8 %v3922
      %v3924 = vlaneseq
      %v3925 = vshrl.u32 %v3924, 7
      %v3926 = vsub.s32 %v3923, %v3925
      %v3927 = vrot.slane %v3913, %v3926
      %v3928 = vcombine.high %v3920, %v3920
      %v3929 = vcombine.high %v3376, %v3376
      %v3931 = vunpack.c.l.s4 1983009808
      %v3932 = vunpack.c.0.s8 %v3931
      %v3933 = vlaneseq
      %v3934 = vshrl.u32 %v3933, 7
      %v3935 = vsub.s32 %v3932, %v3934
      %v3936 = vrot.slane %v3376, %v3935
      %v3938 = vunpack.c.l.s4 1983009808
      %v3939 = vunpack.c.0.s8 %v3938
      %v3940 = vlaneseq
      %v3941 = vshrl.u32 %v3940, 7
      %v3942 = vsub.s32 %v3939, %v3941
      %v3943 = vrot.slane %v3929, %v3942
      %v3944 = vcombine.high %v3936, %v3936
      %v3945 = vcombine.high %v3380, %v3380
      %v3947 = vunpack.c.l.s4 1983009808
      %v3948 = vunpack.c.0.s8 %v3947
      %v3949 = vlaneseq
      %v3950 = vshrl.u32 %v3949, 7
      %v3951 = vsub.s32 %v3948, %v3950
      %v3952 = vrot.slane %v3380, %v3951
      %v3954 = vunpack.c.l.s4 1983009808
      %v3955 = vunpack.c.0.s8 %v3954
      %v3956 = vlaneseq
      %v3957 = vshrl.u32 %v3956, 7
      %v3958 = vsub.s32 %v3955, %v3957
      %v3959 = vrot.slane %v3945, %v3958
      %v3960 = vcombine.high %v3952, %v3952
      %v3961 = vcombine.high %v3384, %v3384
      %v3963 = vunpack.c.l.s4 1983009808
      %v3964 = vunpack.c.0.s8 %v3963
      %v3965 = vlaneseq
      %v3966 = vshrl.u32 %v3965, 7
      %v3967 = vsub.s32 %v3964, %v3966
      %v3968 = vrot.slane %v3384, %v3967
      %v3970 = vunpack.c.l.s4 1983009808
      %v3971 = vunpack.c.0.s8 %v3970
      %v3972 = vlaneseq
      %v3973 = vshrl.u32 %v3972, 7
      %v3974 = vsub.s32 %v3971, %v3973
      %v3975 = vrot.slane %v3961, %v3974
      %v3976 = vcombine.high %v3968, %v3968
      %v3977 = vcombine.high %v3388, %v3388
      %v3979 = vunpack.c.l.s4 1983009808
      %v3980 = vunpack.c.0.s8 %v3979
      %v3981 = vlaneseq
      %v3982 = vshrl.u32 %v3981, 7
      %v3983 = vsub.s32 %v3980, %v3982
      %v3984 = vrot.slane %v3388, %v3983
      %v3986 = vunpack.c.l.s4 1983009808
      %v3987 = vunpack.c.0.s8 %v3986
      %v3988 = vlaneseq
      %v3989 = vshrl.u32 %v3988, 7
      %v3990 = vsub.s32 %v3987, %v3989
      %v3991 = vrot.slane %v3977, %v3990
      %v3992 = vcombine.high %v3984, %v3984
      %v3993 = vcombine.high %v3392, %v3392
      %v3995 = vunpack.c.l.s4 1983009808
      %v3996 = vunpack.c.0.s8 %v3995
      %v3997 = vlaneseq
      %v3998 = vshrl.u32 %v3997, 7
      %v3999 = vsub.s32 %v3996, %v3998
      %v4000 = vrot.slane %v3392, %v3999
      %v4002 = vunpack.c.l.s4 1983009808
      %v4003 = vunpack.c.0.s8 %v4002
      %v4004 = vlaneseq
      %v4005 = vshrl.u32 %v4004, 7
      %v4006 = vsub.s32 %v4003, %v4005
      %v4007 = vrot.slane %v3993, %v4006
      %v4008 = vcombine.high %v4000, %v4000
      %v4009 = vcombine.high %v3396, %v3396
      %v4011 = vunpack.c.l.s4 1983009808
      %v4012 = vunpack.c.0.s8 %v4011
      %v4013 = vlaneseq
      %v4014 = vshrl.u32 %v4013, 7
      %v4015 = vsub.s32 %v4012, %v4014
      %v4016 = vrot.slane %v3396, %v4015
      %v4018 = vunpack.c.l.s4 1983009808
      %v4019 = vunpack.c.0.s8 %v4018
      %v4020 = vlaneseq
      %v4021 = vshrl.u32 %v4020, 7
      %v4022 = vsub.s32 %v4019, %v4021
      %v4023 = vrot.slane %v4009, %v4022
      %v4024 = vcombine.high %v4016, %v4016
      %v4025 = vcombine.high %v3400, %v3400
      %v4027 = vunpack.c.l.s4 1983009808
      %v4028 = vunpack.c.0.s8 %v4027
      %v4029 = vlaneseq
      %v4030 = vshrl.u32 %v4029, 7
      %v4031 = vsub.s32 %v4028, %v4030
      %v4032 = vrot.slane %v3400, %v4031
      %v4034 = vunpack.c.l.s4 1983009808
      %v4035 = vunpack.c.0.s8 %v4034
      %v4036 = vlaneseq
      %v4037 = vshrl.u32 %v4036, 7
      %v4038 = vsub.s32 %v4035, %v4037
      %v4039 = vrot.slane %v4025, %v4038
      %v4040 = vcombine.high %v4032, %v4032
      %v4041 = vunpack.c.l.bf16 %v148
      %v4042 = vunpack.c.l.bf16 %v149
      %v4043 = vunpack.c.l.bf16 %v150
      %v4044 = vunpack.c.l.bf16 %v151
      %v4045 = vunpack.c.l.bf16 %v152
      %v4046 = vunpack.c.l.bf16 %v153
      %v4047 = vunpack.c.l.bf16 %v154
      %v4048 = vunpack.c.l.bf16 %v155
      %v4049 = vunpack.c.l.bf16 %v156
      %v4050 = vunpack.c.l.bf16 %v157
      %v4051 = vunpack.c.l.bf16 %v158
      %v4052 = vunpack.c.l.bf16 %v159
      %v4053 = vunpack.c.l.bf16 %v160
      %v4054 = vunpack.c.l.bf16 %v161
      %v4055 = vunpack.c.l.bf16 %v162
      %v4056 = vunpack.c.l.bf16 %v163
      %v4057 = vunpack.c.l.bf16 %v164
      %v4058 = vunpack.c.l.bf16 %v165
      %v4059 = vunpack.c.l.bf16 %v166
      %v4060 = vunpack.c.l.bf16 %v167
      %v4061 = vunpack.c.l.bf16 %v168
      %v4062 = vunpack.c.l.bf16 %v169
      %v4063 = vunpack.c.l.bf16 %v170
      %v4064 = vunpack.c.l.bf16 %v171
      %v4065 = vunpack.c.l.bf16 %v172
      %v4066 = vunpack.c.l.bf16 %v173
      %v4067 = vunpack.c.l.bf16 %v174
      %v4068 = vunpack.c.l.bf16 %v175
      %v4069 = vunpack.c.l.bf16 %v176
      %v4070 = vunpack.c.l.bf16 %v177
      %v4071 = vcombine.low %v3408, %v3416
      %v4072 = vcombine.low %v3415, %v3424
      %v4074 = vunpack.c.l.s4 1983009808
      %v4075 = vunpack.c.0.s8 %v4074
      %v4076 = vlaneseq
      %v4077 = vshrl.u32 %v4076, 7
      %v4078 = vsub.s32 %v4075, %v4077
      %v4079 = vrot.slane %v4071, %v4078
      %v4081 = vunpack.c.l.s4 1983009808
      %v4082 = vunpack.c.0.s8 %v4081
      %v4083 = vlaneseq
      %v4084 = vshrl.u32 %v4083, 7
      %v4085 = vsub.s32 %v4082, %v4084
      %v4086 = vrot.slane %v4072, %v4085
      %v4087 = vcombine.low %v4079, %v4086
      %v4088 = vcombine.low %v3432, %v3431
      %v4089 = vcombine.low %v3440, %v3448
      %v4091 = vunpack.c.l.s4 1983009808
      %v4092 = vunpack.c.0.s8 %v4091
      %v4093 = vlaneseq
      %v4094 = vshrl.u32 %v4093, 7
      %v4095 = vsub.s32 %v4092, %v4094
      %v4096 = vrot.slane %v4088, %v4095
      %v4098 = vunpack.c.l.s4 1983009808
      %v4099 = vunpack.c.0.s8 %v4098
      %v4100 = vlaneseq
      %v4101 = vshrl.u32 %v4100, 7
      %v4102 = vsub.s32 %v4099, %v4101
      %v4103 = vrot.slane %v4089, %v4102
      %v4104 = vcombine.low %v4096, %v4103
      %v4105 = vcombine.low %v3447, %v3456
      %v4106 = vcombine.low %v3464, %v3463
      %v4108 = vunpack.c.l.s4 1983009808
      %v4109 = vunpack.c.0.s8 %v4108
      %v4110 = vlaneseq
      %v4111 = vshrl.u32 %v4110, 7
      %v4112 = vsub.s32 %v4109, %v4111
      %v4113 = vrot.slane %v4105, %v4112
      %v4115 = vunpack.c.l.s4 1983009808
      %v4116 = vunpack.c.0.s8 %v4115
      %v4117 = vlaneseq
      %v4118 = vshrl.u32 %v4117, 7
      %v4119 = vsub.s32 %v4116, %v4118
      %v4120 = vrot.slane %v4106, %v4119
      %v4121 = vcombine.low %v4113, %v4120
      %v4122 = vcombine.low %v3472, %v3480
      %v4123 = vcombine.low %v3479, %v3488
      %v4125 = vunpack.c.l.s4 1983009808
      %v4126 = vunpack.c.0.s8 %v4125
      %v4127 = vlaneseq
      %v4128 = vshrl.u32 %v4127, 7
      %v4129 = vsub.s32 %v4126, %v4128
      %v4130 = vrot.slane %v4122, %v4129
      %v4132 = vunpack.c.l.s4 1983009808
      %v4133 = vunpack.c.0.s8 %v4132
      %v4134 = vlaneseq
      %v4135 = vshrl.u32 %v4134, 7
      %v4136 = vsub.s32 %v4133, %v4135
      %v4137 = vrot.slane %v4123, %v4136
      %v4138 = vcombine.low %v4130, %v4137
      %v4139 = vcombine.low %v3496, %v3495
      %v4140 = vcombine.low %v3504, %v3512
      %v4142 = vunpack.c.l.s4 1983009808
      %v4143 = vunpack.c.0.s8 %v4142
      %v4144 = vlaneseq
      %v4145 = vshrl.u32 %v4144, 7
      %v4146 = vsub.s32 %v4143, %v4145
      %v4147 = vrot.slane %v4139, %v4146
      %v4149 = vunpack.c.l.s4 1983009808
      %v4150 = vunpack.c.0.s8 %v4149
      %v4151 = vlaneseq
      %v4152 = vshrl.u32 %v4151, 7
      %v4153 = vsub.s32 %v4150, %v4152
      %v4154 = vrot.slane %v4140, %v4153
      %v4155 = vcombine.low %v4147, %v4154
      %v4156 = vcombine.low %v3511, %v3520
      %v4157 = vcombine.low %v3528, %v3527
      %v4159 = vunpack.c.l.s4 1983009808
      %v4160 = vunpack.c.0.s8 %v4159
      %v4161 = vlaneseq
      %v4162 = vshrl.u32 %v4161, 7
      %v4163 = vsub.s32 %v4160, %v4162
      %v4164 = vrot.slane %v4156, %v4163
      %v4166 = vunpack.c.l.s4 1983009808
      %v4167 = vunpack.c.0.s8 %v4166
      %v4168 = vlaneseq
      %v4169 = vshrl.u32 %v4168, 7
      %v4170 = vsub.s32 %v4167, %v4169
      %v4171 = vrot.slane %v4157, %v4170
      %v4172 = vcombine.low %v4164, %v4171
      %v4173 = vcombine.low %v3536, %v3544
      %v4174 = vcombine.low %v3543, %v3552
      %v4176 = vunpack.c.l.s4 1983009808
      %v4177 = vunpack.c.0.s8 %v4176
      %v4178 = vlaneseq
      %v4179 = vshrl.u32 %v4178, 7
      %v4180 = vsub.s32 %v4177, %v4179
      %v4181 = vrot.slane %v4173, %v4180
      %v4183 = vunpack.c.l.s4 1983009808
      %v4184 = vunpack.c.0.s8 %v4183
      %v4185 = vlaneseq
      %v4186 = vshrl.u32 %v4185, 7
      %v4187 = vsub.s32 %v4184, %v4186
      %v4188 = vrot.slane %v4174, %v4187
      %v4189 = vcombine.low %v4181, %v4188
      %v4190 = vcombine.low %v3560, %v3559
      %v4191 = vcombine.low %v3568, %v3576
      %v4193 = vunpack.c.l.s4 1983009808
      %v4194 = vunpack.c.0.s8 %v4193
      %v4195 = vlaneseq
      %v4196 = vshrl.u32 %v4195, 7
      %v4197 = vsub.s32 %v4194, %v4196
      %v4198 = vrot.slane %v4190, %v4197
      %v4200 = vunpack.c.l.s4 1983009808
      %v4201 = vunpack.c.0.s8 %v4200
      %v4202 = vlaneseq
      %v4203 = vshrl.u32 %v4202, 7
      %v4204 = vsub.s32 %v4201, %v4203
      %v4205 = vrot.slane %v4191, %v4204
      %v4206 = vcombine.low %v4198, %v4205
      %v4207 = vcombine.low %v3575, %v3584
      %v4208 = vcombine.low %v3592, %v3591
      %v4210 = vunpack.c.l.s4 1983009808
      %v4211 = vunpack.c.0.s8 %v4210
      %v4212 = vlaneseq
      %v4213 = vshrl.u32 %v4212, 7
      %v4214 = vsub.s32 %v4211, %v4213
      %v4215 = vrot.slane %v4207, %v4214
      %v4217 = vunpack.c.l.s4 1983009808
      %v4218 = vunpack.c.0.s8 %v4217
      %v4219 = vlaneseq
      %v4220 = vshrl.u32 %v4219, 7
      %v4221 = vsub.s32 %v4218, %v4220
      %v4222 = vrot.slane %v4208, %v4221
      %v4223 = vcombine.low %v4215, %v4222
      %v4224 = vcombine.low %v3600, %v3608
      %v4225 = vcombine.low %v3607, %v3616
      %v4227 = vunpack.c.l.s4 1983009808
      %v4228 = vunpack.c.0.s8 %v4227
      %v4229 = vlaneseq
      %v4230 = vshrl.u32 %v4229, 7
      %v4231 = vsub.s32 %v4228, %v4230
      %v4232 = vrot.slane %v4224, %v4231
      %v4234 = vunpack.c.l.s4 1983009808
      %v4235 = vunpack.c.0.s8 %v4234
      %v4236 = vlaneseq
      %v4237 = vshrl.u32 %v4236, 7
      %v4238 = vsub.s32 %v4235, %v4237
      %v4239 = vrot.slane %v4225, %v4238
      %v4240 = vcombine.low %v4232, %v4239
      %v4241 = vcombine.low %v3624, %v3623
      %v4242 = vcombine.low %v3632, %v3640
      %v4244 = vunpack.c.l.s4 1983009808
      %v4245 = vunpack.c.0.s8 %v4244
      %v4246 = vlaneseq
      %v4247 = vshrl.u32 %v4246, 7
      %v4248 = vsub.s32 %v4245, %v4247
      %v4249 = vrot.slane %v4241, %v4248
      %v4251 = vunpack.c.l.s4 1983009808
      %v4252 = vunpack.c.0.s8 %v4251
      %v4253 = vlaneseq
      %v4254 = vshrl.u32 %v4253, 7
      %v4255 = vsub.s32 %v4252, %v4254
      %v4256 = vrot.slane %v4242, %v4255
      %v4257 = vcombine.low %v4249, %v4256
      %v4258 = vcombine.low %v3639, %v3648
      %v4259 = vcombine.low %v3656, %v3655
      %v4261 = vunpack.c.l.s4 1983009808
      %v4262 = vunpack.c.0.s8 %v4261
      %v4263 = vlaneseq
      %v4264 = vshrl.u32 %v4263, 7
      %v4265 = vsub.s32 %v4262, %v4264
      %v4266 = vrot.slane %v4258, %v4265
      %v4268 = vunpack.c.l.s4 1983009808
      %v4269 = vunpack.c.0.s8 %v4268
      %v4270 = vlaneseq
      %v4271 = vshrl.u32 %v4270, 7
      %v4272 = vsub.s32 %v4269, %v4271
      %v4273 = vrot.slane %v4259, %v4272
      %v4274 = vcombine.low %v4266, %v4273
      %v4275 = vcombine.low %v3664, %v3672
      %v4276 = vcombine.low %v3671, %v3680
      %v4278 = vunpack.c.l.s4 1983009808
      %v4279 = vunpack.c.0.s8 %v4278
      %v4280 = vlaneseq
      %v4281 = vshrl.u32 %v4280, 7
      %v4282 = vsub.s32 %v4279, %v4281
      %v4283 = vrot.slane %v4275, %v4282
      %v4285 = vunpack.c.l.s4 1983009808
      %v4286 = vunpack.c.0.s8 %v4285
      %v4287 = vlaneseq
      %v4288 = vshrl.u32 %v4287, 7
      %v4289 = vsub.s32 %v4286, %v4288
      %v4290 = vrot.slane %v4276, %v4289
      %v4291 = vcombine.low %v4283, %v4290
      %v4292 = vcombine.low %v3688, %v3687
      %v4293 = vcombine.low %v3696, %v3704
      %v4295 = vunpack.c.l.s4 1983009808
      %v4296 = vunpack.c.0.s8 %v4295
      %v4297 = vlaneseq
      %v4298 = vshrl.u32 %v4297, 7
      %v4299 = vsub.s32 %v4296, %v4298
      %v4300 = vrot.slane %v4292, %v4299
      %v4302 = vunpack.c.l.s4 1983009808
      %v4303 = vunpack.c.0.s8 %v4302
      %v4304 = vlaneseq
      %v4305 = vshrl.u32 %v4304, 7
      %v4306 = vsub.s32 %v4303, %v4305
      %v4307 = vrot.slane %v4293, %v4306
      %v4308 = vcombine.low %v4300, %v4307
      %v4309 = vcombine.low %v3703, %v3712
      %v4310 = vcombine.low %v3720, %v3719
      %v4312 = vunpack.c.l.s4 1983009808
      %v4313 = vunpack.c.0.s8 %v4312
      %v4314 = vlaneseq
      %v4315 = vshrl.u32 %v4314, 7
      %v4316 = vsub.s32 %v4313, %v4315
      %v4317 = vrot.slane %v4309, %v4316
      %v4319 = vunpack.c.l.s4 1983009808
      %v4320 = vunpack.c.0.s8 %v4319
      %v4321 = vlaneseq
      %v4322 = vshrl.u32 %v4321, 7
      %v4323 = vsub.s32 %v4320, %v4322
      %v4324 = vrot.slane %v4310, %v4323
      %v4325 = vcombine.low %v4317, %v4324
      %v4326 = vcombine.low %v3728, %v3736
      %v4327 = vcombine.low %v3735, %v3744
      %v4329 = vunpack.c.l.s4 1983009808
      %v4330 = vunpack.c.0.s8 %v4329
      %v4331 = vlaneseq
      %v4332 = vshrl.u32 %v4331, 7
      %v4333 = vsub.s32 %v4330, %v4332
      %v4334 = vrot.slane %v4326, %v4333
      %v4336 = vunpack.c.l.s4 1983009808
      %v4337 = vunpack.c.0.s8 %v4336
      %v4338 = vlaneseq
      %v4339 = vshrl.u32 %v4338, 7
      %v4340 = vsub.s32 %v4337, %v4339
      %v4341 = vrot.slane %v4327, %v4340
      %v4342 = vcombine.low %v4334, %v4341
      %v4343 = vcombine.low %v3752, %v3751
      %v4344 = vcombine.low %v3760, %v3768
      %v4346 = vunpack.c.l.s4 1983009808
      %v4347 = vunpack.c.0.s8 %v4346
      %v4348 = vlaneseq
      %v4349 = vshrl.u32 %v4348, 7
      %v4350 = vsub.s32 %v4347, %v4349
      %v4351 = vrot.slane %v4343, %v4350
      %v4353 = vunpack.c.l.s4 1983009808
      %v4354 = vunpack.c.0.s8 %v4353
      %v4355 = vlaneseq
      %v4356 = vshrl.u32 %v4355, 7
      %v4357 = vsub.s32 %v4354, %v4356
      %v4358 = vrot.slane %v4344, %v4357
      %v4359 = vcombine.low %v4351, %v4358
      %v4360 = vcombine.low %v3767, %v3776
      %v4361 = vcombine.low %v3784, %v3783
      %v4363 = vunpack.c.l.s4 1983009808
      %v4364 = vunpack.c.0.s8 %v4363
      %v4365 = vlaneseq
      %v4366 = vshrl.u32 %v4365, 7
      %v4367 = vsub.s32 %v4364, %v4366
      %v4368 = vrot.slane %v4360, %v4367
      %v4370 = vunpack.c.l.s4 1983009808
      %v4371 = vunpack.c.0.s8 %v4370
      %v4372 = vlaneseq
      %v4373 = vshrl.u32 %v4372, 7
      %v4374 = vsub.s32 %v4371, %v4373
      %v4375 = vrot.slane %v4361, %v4374
      %v4376 = vcombine.low %v4368, %v4375
      %v4377 = vcombine.low %v3792, %v3800
      %v4378 = vcombine.low %v3799, %v3808
      %v4380 = vunpack.c.l.s4 1983009808
      %v4381 = vunpack.c.0.s8 %v4380
      %v4382 = vlaneseq
      %v4383 = vshrl.u32 %v4382, 7
      %v4384 = vsub.s32 %v4381, %v4383
      %v4385 = vrot.slane %v4377, %v4384
      %v4387 = vunpack.c.l.s4 1983009808
      %v4388 = vunpack.c.0.s8 %v4387
      %v4389 = vlaneseq
      %v4390 = vshrl.u32 %v4389, 7
      %v4391 = vsub.s32 %v4388, %v4390
      %v4392 = vrot.slane %v4378, %v4391
      %v4393 = vcombine.low %v4385, %v4392
      %v4394 = vcombine.low %v3816, %v3815
      %v4395 = vcombine.low %v3824, %v3832
      %v4397 = vunpack.c.l.s4 1983009808
      %v4398 = vunpack.c.0.s8 %v4397
      %v4399 = vlaneseq
      %v4400 = vshrl.u32 %v4399, 7
      %v4401 = vsub.s32 %v4398, %v4400
      %v4402 = vrot.slane %v4394, %v4401
      %v4404 = vunpack.c.l.s4 1983009808
      %v4405 = vunpack.c.0.s8 %v4404
      %v4406 = vlaneseq
      %v4407 = vshrl.u32 %v4406, 7
      %v4408 = vsub.s32 %v4405, %v4407
      %v4409 = vrot.slane %v4395, %v4408
      %v4410 = vcombine.low %v4402, %v4409
      %v4411 = vcombine.low %v3831, %v3840
      %v4412 = vcombine.low %v3848, %v3847
      %v4414 = vunpack.c.l.s4 1983009808
      %v4415 = vunpack.c.0.s8 %v4414
      %v4416 = vlaneseq
      %v4417 = vshrl.u32 %v4416, 7
      %v4418 = vsub.s32 %v4415, %v4417
      %v4419 = vrot.slane %v4411, %v4418
      %v4421 = vunpack.c.l.s4 1983009808
      %v4422 = vunpack.c.0.s8 %v4421
      %v4423 = vlaneseq
      %v4424 = vshrl.u32 %v4423, 7
      %v4425 = vsub.s32 %v4422, %v4424
      %v4426 = vrot.slane %v4412, %v4425
      %v4427 = vcombine.low %v4419, %v4426
      %v4428 = vcombine.low %v3856, %v3864
      %v4429 = vcombine.low %v3863, %v3872
      %v4431 = vunpack.c.l.s4 1983009808
      %v4432 = vunpack.c.0.s8 %v4431
      %v4433 = vlaneseq
      %v4434 = vshrl.u32 %v4433, 7
      %v4435 = vsub.s32 %v4432, %v4434
      %v4436 = vrot.slane %v4428, %v4435
      %v4438 = vunpack.c.l.s4 1983009808
      %v4439 = vunpack.c.0.s8 %v4438
      %v4440 = vlaneseq
      %v4441 = vshrl.u32 %v4440, 7
      %v4442 = vsub.s32 %v4439, %v4441
      %v4443 = vrot.slane %v4429, %v4442
      %v4444 = vcombine.low %v4436, %v4443
      %v4445 = vcombine.low %v3880, %v3879
      %v4446 = vcombine.low %v3888, %v3896
      %v4448 = vunpack.c.l.s4 1983009808
      %v4449 = vunpack.c.0.s8 %v4448
      %v4450 = vlaneseq
      %v4451 = vshrl.u32 %v4450, 7
      %v4452 = vsub.s32 %v4449, %v4451
      %v4453 = vrot.slane %v4445, %v4452
      %v4455 = vunpack.c.l.s4 1983009808
      %v4456 = vunpack.c.0.s8 %v4455
      %v4457 = vlaneseq
      %v4458 = vshrl.u32 %v4457, 7
      %v4459 = vsub.s32 %v4456, %v4458
      %v4460 = vrot.slane %v4446, %v4459
      %v4461 = vcombine.low %v4453, %v4460
      %v4462 = vcombine.low %v3895, %v3904
      %v4463 = vcombine.low %v3912, %v3911
      %v4465 = vunpack.c.l.s4 1983009808
      %v4466 = vunpack.c.0.s8 %v4465
      %v4467 = vlaneseq
      %v4468 = vshrl.u32 %v4467, 7
      %v4469 = vsub.s32 %v4466, %v4468
      %v4470 = vrot.slane %v4462, %v4469
      %v4472 = vunpack.c.l.s4 1983009808
      %v4473 = vunpack.c.0.s8 %v4472
      %v4474 = vlaneseq
      %v4475 = vshrl.u32 %v4474, 7
      %v4476 = vsub.s32 %v4473, %v4475
      %v4477 = vrot.slane %v4463, %v4476
      %v4478 = vcombine.low %v4470, %v4477
      %v4479 = vcombine.low %v3920, %v3928
      %v4480 = vcombine.low %v3927, %v3936
      %v4482 = vunpack.c.l.s4 1983009808
      %v4483 = vunpack.c.0.s8 %v4482
      %v4484 = vlaneseq
      %v4485 = vshrl.u32 %v4484, 7
      %v4486 = vsub.s32 %v4483, %v4485
      %v4487 = vrot.slane %v4479, %v4486
      %v4489 = vunpack.c.l.s4 1983009808
      %v4490 = vunpack.c.0.s8 %v4489
      %v4491 = vlaneseq
      %v4492 = vshrl.u32 %v4491, 7
      %v4493 = vsub.s32 %v4490, %v4492
      %v4494 = vrot.slane %v4480, %v4493
      %v4495 = vcombine.low %v4487, %v4494
      %v4496 = vcombine.low %v3944, %v3943
      %v4497 = vcombine.low %v3952, %v3960
      %v4499 = vunpack.c.l.s4 1983009808
      %v4500 = vunpack.c.0.s8 %v4499
      %v4501 = vlaneseq
      %v4502 = vshrl.u32 %v4501, 7
      %v4503 = vsub.s32 %v4500, %v4502
      %v4504 = vrot.slane %v4496, %v4503
      %v4506 = vunpack.c.l.s4 1983009808
      %v4507 = vunpack.c.0.s8 %v4506
      %v4508 = vlaneseq
      %v4509 = vshrl.u32 %v4508, 7
      %v4510 = vsub.s32 %v4507, %v4509
      %v4511 = vrot.slane %v4497, %v4510
      %v4512 = vcombine.low %v4504, %v4511
      %v4513 = vcombine.low %v3959, %v3968
      %v4514 = vcombine.low %v3976, %v3975
      %v4516 = vunpack.c.l.s4 1983009808
      %v4517 = vunpack.c.0.s8 %v4516
      %v4518 = vlaneseq
      %v4519 = vshrl.u32 %v4518, 7
      %v4520 = vsub.s32 %v4517, %v4519
      %v4521 = vrot.slane %v4513, %v4520
      %v4523 = vunpack.c.l.s4 1983009808
      %v4524 = vunpack.c.0.s8 %v4523
      %v4525 = vlaneseq
      %v4526 = vshrl.u32 %v4525, 7
      %v4527 = vsub.s32 %v4524, %v4526
      %v4528 = vrot.slane %v4514, %v4527
      %v4529 = vcombine.low %v4521, %v4528
      %v4530 = vcombine.low %v3984, %v3992
      %v4531 = vcombine.low %v3991, %v4000
      %v4533 = vunpack.c.l.s4 1983009808
      %v4534 = vunpack.c.0.s8 %v4533
      %v4535 = vlaneseq
      %v4536 = vshrl.u32 %v4535, 7
      %v4537 = vsub.s32 %v4534, %v4536
      %v4538 = vrot.slane %v4530, %v4537
      %v4540 = vunpack.c.l.s4 1983009808
      %v4541 = vunpack.c.0.s8 %v4540
      %v4542 = vlaneseq
      %v4543 = vshrl.u32 %v4542, 7
      %v4544 = vsub.s32 %v4541, %v4543
      %v4545 = vrot.slane %v4531, %v4544
      %v4546 = vcombine.low %v4538, %v4545
      %v4547 = vcombine.low %v4008, %v4007
      %v4548 = vcombine.low %v4016, %v4024
      %v4550 = vunpack.c.l.s4 1983009808
      %v4551 = vunpack.c.0.s8 %v4550
      %v4552 = vlaneseq
      %v4553 = vshrl.u32 %v4552, 7
      %v4554 = vsub.s32 %v4551, %v4553
      %v4555 = vrot.slane %v4547, %v4554
      %v4557 = vunpack.c.l.s4 1983009808
      %v4558 = vunpack.c.0.s8 %v4557
      %v4559 = vlaneseq
      %v4560 = vshrl.u32 %v4559, 7
      %v4561 = vsub.s32 %v4558, %v4560
      %v4562 = vrot.slane %v4548, %v4561
      %v4563 = vcombine.low %v4555, %v4562
      %v4564 = vcombine.low %v4023, %v4032
      %v4565 = vcombine.low %v4040, %v4039
      %v4567 = vunpack.c.l.s4 1983009808
      %v4568 = vunpack.c.0.s8 %v4567
      %v4569 = vlaneseq
      %v4570 = vshrl.u32 %v4569, 7
      %v4571 = vsub.s32 %v4568, %v4570
      %v4572 = vrot.slane %v4564, %v4571
      %v4574 = vunpack.c.l.s4 1983009808
      %v4575 = vunpack.c.0.s8 %v4574
      %v4576 = vlaneseq
      %v4577 = vshrl.u32 %v4576, 7
      %v4578 = vsub.s32 %v4575, %v4577
      %v4579 = vrot.slane %v4565, %v4578
      %v4580 = vcombine.low %v4572, %v4579
      %v4611 = vmul.f32 %v4041, %v4087
      %v4612 = vmul.f32 %v4042, %v4104
      %v4613 = vmul.f32 %v4043, %v4121
      %v4614 = vmul.f32 %v4044, %v4138
      %v4615 = vmul.f32 %v4045, %v4155
      %v4616 = vmul.f32 %v4046, %v4172
      %v4617 = vmul.f32 %v4047, %v4189
      %v4618 = vmul.f32 %v4048, %v4206
      %v4619 = vmul.f32 %v4049, %v4223
      %v4620 = vmul.f32 %v4050, %v4240
      %v4621 = vmul.f32 %v4051, %v4257
      %v4622 = vmul.f32 %v4052, %v4274
      %v4623 = vmul.f32 %v4053, %v4291
      %v4624 = vmul.f32 %v4054, %v4308
      %v4625 = vmul.f32 %v4055, %v4325
      %v4626 = vmul.f32 %v4056, %v4342
      %v4627 = vmul.f32 %v4057, %v4359
      %v4628 = vmul.f32 %v4058, %v4376
      %v4629 = vmul.f32 %v4059, %v4393
      %v4630 = vmul.f32 %v4060, %v4410
      %v4631 = vmul.f32 %v4061, %v4427
      %v4632 = vmul.f32 %v4062, %v4444
      %v4633 = vmul.f32 %v4063, %v4461
      %v4634 = vmul.f32 %v4064, %v4478
      %v4635 = vmul.f32 %v4065, %v4495
      %v4636 = vmul.f32 %v4066, %v4512
      %v4637 = vmul.f32 %v4067, %v4529
      %v4638 = vmul.f32 %v4068, %v4546
      %v4639 = vmul.f32 %v4069, %v4563
      %v4640 = vmul.f32 %v4070, %v4580
      %v4641 = vpack.c.bf16 %v4612, %v4611
      %v4642 = vpack.c.bf16 %v4614, %v4613
      %v4643 = vpack.c.bf16 %v4616, %v4615
      %v4644 = vpack.c.bf16 %v4618, %v4617
      %v4645 = vpack.c.bf16 %v4620, %v4619
      %v4646 = vpack.c.bf16 %v4622, %v4621
      %v4647 = vpack.c.bf16 %v4624, %v4623
      %v4648 = vpack.c.bf16 %v4626, %v4625
      %v4649 = vpack.c.bf16 %v4628, %v4627
      %v4650 = vpack.c.bf16 %v4630, %v4629
      %v4651 = vpack.c.bf16 %v4632, %v4631
      %v4652 = vpack.c.bf16 %v4634, %v4633
      %v4653 = vpack.c.bf16 %v4636, %v4635
      %v4654 = vpack.c.bf16 %v4638, %v4637
      %v4655 = vpack.c.bf16 %v4640, %v4639
      %v4671 = vunpack.c.l.b16 %v4641
      %v4672 = vunpack.c.h.b16 %v4641
      %v4673 = vunpack.c.l.b16 %v4642
      %v4674 = vunpack.c.h.b16 %v4642
      %v4675 = vunpack.c.l.b16 %v4643
      %v4676 = vunpack.c.h.b16 %v4643
      %v4677 = vunpack.c.l.b16 %v4644
      %v4678 = vunpack.c.h.b16 %v4644
      %v4679 = vunpack.c.l.b16 %v4645
      %v4680 = vunpack.c.h.b16 %v4645
      %v4681 = vunpack.c.l.b16 %v4646
      %v4682 = vunpack.c.h.b16 %v4646
      %v4683 = vunpack.c.l.b16 %v4647
      %v4684 = vunpack.c.h.b16 %v4647
      %v4685 = vunpack.c.l.b16 %v4648
      %v4686 = vunpack.c.h.b16 %v4648
      %v4687 = vunpack.c.l.b16 %v4649
      %v4688 = vunpack.c.h.b16 %v4649
      %v4689 = vunpack.c.l.b16 %v4650
      %v4690 = vunpack.c.h.b16 %v4650
      %v4691 = vunpack.c.l.b16 %v4651
      %v4692 = vunpack.c.h.b16 %v4651
      %v4693 = vunpack.c.l.b16 %v4652
      %v4694 = vunpack.c.h.b16 %v4652
      %v4695 = vunpack.c.l.b16 %v4653
      %v4696 = vunpack.c.h.b16 %v4653
      %v4697 = vunpack.c.l.b16 %v4654
      %v4698 = vunpack.c.h.b16 %v4654
      %v4699 = vunpack.c.l.b16 %v4655
      %v4700 = vunpack.c.h.b16 %v4655
      %v4701 = vpack.c.b16 %v4671, %v4671
      %v4702 = vpack.c.b16 %v4672, %v4672
      %v4703 = vpack.c.b16 %v4673, %v4673
      %v4704 = vpack.c.b16 %v4674, %v4674
      %v4705 = vpack.c.b16 %v4675, %v4675
      %v4706 = vpack.c.b16 %v4676, %v4676
      %v4707 = vpack.c.b16 %v4677, %v4677
      %v4708 = vpack.c.b16 %v4678, %v4678
      %v4709 = vpack.c.b16 %v4679, %v4679
      %v4710 = vpack.c.b16 %v4680, %v4680
      %v4711 = vpack.c.b16 %v4681, %v4681
      %v4712 = vpack.c.b16 %v4682, %v4682
      %v4713 = vpack.c.b16 %v4683, %v4683
      %v4714 = vpack.c.b16 %v4684, %v4684
      %v4715 = vpack.c.b16 %v4685, %v4685
      %v4716 = vpack.c.b16 %v4686, %v4686
      %v4717 = vpack.c.b16 %v4687, %v4687
      %v4718 = vpack.c.b16 %v4688, %v4688
      %v4719 = vpack.c.b16 %v4689, %v4689
      %v4720 = vpack.c.b16 %v4690, %v4690
      %v4721 = vpack.c.b16 %v4691, %v4691
      %v4722 = vpack.c.b16 %v4692, %v4692
      %v4723 = vpack.c.b16 %v4693, %v4693
      %v4724 = vpack.c.b16 %v4694, %v4694
      %v4725 = vpack.c.b16 %v4695, %v4695
      %v4726 = vpack.c.b16 %v4696, %v4696
      %v4727 = vpack.c.b16 %v4697, %v4697
      %v4728 = vpack.c.b16 %v4698, %v4698
      %v4729 = vpack.c.b16 %v4699, %v4699
      %v4730 = vpack.c.b16 %v4700, %v4700
      %4761 = vst [vmem:[%s145] sm:$0xf] %v4701
      %4762 = vst [vmem:[%s145 + $0x4] sm:$0xf] %v4702
      %4763 = vst [vmem:[%s145 + $0x8] sm:$0xf] %v4703
      %4764 = vst [vmem:[%s145 + $0xc] sm:$0xf] %v4704
      %4765 = vst [vmem:[%s145 + $0x10] sm:$0xf] %v4705
      %4766 = vst [vmem:[%s145 + $0x14] sm:$0xf] %v4706
      %4767 = vst [vmem:[%s145 + $0x18] sm:$0xf] %v4707
      %4768 = vst [vmem:[%s145 + $0x1c] sm:$0xf] %v4708
      %4769 = vst [vmem:[%s145 + $0x20] sm:$0xf] %v4709
      %4770 = vst [vmem:[%s145 + $0x24] sm:$0xf] %v4710
      %4771 = vst [vmem:[%s145 + $0x28] sm:$0xf] %v4711
      %4772 = vst [vmem:[%s145 + $0x2c] sm:$0xf] %v4712
      %4773 = vst [vmem:[%s145 + $0x30] sm:$0xf] %v4713
      %4774 = vst [vmem:[%s145 + $0x34] sm:$0xf] %v4714
      %4775 = vst [vmem:[%s145 + $0x38] sm:$0xf] %v4715
      %4776 = vst [vmem:[%s145 + $0x3c] sm:$0xf] %v4716
      %4777 = vst [vmem:[%s145 + $0x40] sm:$0xf] %v4717
      %4778 = vst [vmem:[%s145 + $0x44] sm:$0xf] %v4718
      %4779 = vst [vmem:[%s145 + $0x48] sm:$0xf] %v4719
      %4780 = vst [vmem:[%s145 + $0x4c] sm:$0xf] %v4720
      %4781 = vst [vmem:[%s145 + $0x50] sm:$0xf] %v4721
      %4782 = vst [vmem:[%s145 + $0x54] sm:$0xf] %v4722
      %4783 = vst [vmem:[%s145 + $0x58] sm:$0xf] %v4723
      %4784 = vst [vmem:[%s145 + $0x5c] sm:$0xf] %v4724
      %4785 = vst [vmem:[%s145 + $0x60] sm:$0xf] %v4725
      %4786 = vst [vmem:[%s145 + $0x64] sm:$0xf] %v4726
      %4787 = vst [vmem:[%s145 + $0x68] sm:$0xf] %v4727
      %4788 = vst [vmem:[%s145 + $0x6c] sm:$0xf] %v4728
      %4789 = vst [vmem:[%s145 + $0x70] sm:$0xf] %v4729
      %4790 = vst [vmem:[%s145 + $0x74] sm:$0xf] %v4730
      %s4791 = smul.u32 30, %s13
      %p4792 = scmp.lt.s32.totalorder %s4791, 59
      %s4793 = scalar_select %p4792, %s4791, 59
      %s4794 = smul.addr %s4793, 4
      %s4795 = scalar_lea.vmem %s2, %s4794
      // Predicated region
      $region29: #{my_space_attention.1} parent=27 // pred_check
        %p4796 = pneg %p78
      $region30: #{my_space_attention.1} parent=27 // pred_check_branch
        %4798 = sbr.rel (%p4796) target = $region32
      $region31: #{my_space_attention.1} parent=27 // pred_region
        %s4799 = smul.u32 30, %s13
      $region32: #{my_space_attention.1} parent=27 // pred_fallthru
        _
    $region28: #{my_space_attention.1} parent=5 // pred_fallthru
      _
    %p4800 = scmp.le.s32.totalorder 2, %s8
    // Predicated region
    $region33: #{my_space_attention.1} parent=5 // pred_check
      %p4801 = pneg %p4800
    $region34: #{my_space_attention.1} parent=5 // pred_check_branch
      %4803 = sbr.rel (%p4801) target = $region36
    $region35: #{my_space_attention.1} parent=5 // pred_region
      %s4804 = ssub.s32 %s8, 2
      // Predicated region
      $region37: #{my_space_attention.1} parent=35 // pred_check
        %p4805 = pneg %p84
      $region38: #{my_space_attention.1} parent=35 // pred_check_branch
        %4807 = sbr.rel (%p4805) target = $region40
      $region39: #{my_space_attention.1} parent=35 // pred_region
        %s4808 = smul.u32 30, %s14
        %p4809 = scmp.lt.s32.totalorder %s4808, 59
        %s4810 = scalar_select %p4809, %s4808, 59
        %s4811 = smul.addr %s4810, 4
        %s4812 = scalar_lea.vmem %s2, %s4811
      $region40: #{my_space_attention.1} parent=35 // pred_fallthru
        _
    $region36: #{my_space_attention.1} parent=5 // pred_fallthru
      _
  $region6: #{my_space_attention.1} parent=0 // loop_footer
    %s12 = sadd.s32 1, %s8
  $region7: #{my_space_attention.1} parent=0 // loop_footer_branch
    %7 = sbr.rel target = $region3
  $region8: #{my_space_attention.1} parent=0 // loop_exit
    _

</llo_original>
